<compile_context>
chip_gen: v7x
topology: tpu7x:2x2x1
jax: 0.10.0
libtpu: 0.0.40
codegen_flags: <defaults>
</compile_context>

<pallas_src>
import jax
import jax.numpy as jnp
from jax.experimental import pallas as pl
from jax.experimental.pallas import tpu as pltpu


# ---------------------------------------------------------------------------
# Pallas kernel: whole bottleneck for one batch element per grid step.
#   conv1x1 -> (+b1, ReLU) -> conv3x3(pad=1, im2col) -> (+b2, ReLU)
#   -> conv1x1 -> (+b3) -> add identity -> ReLU
# ---------------------------------------------------------------------------
def _bottleneck_kernel(x_ref, w1_ref, b1_ref, w2_ref, b2_ref, w3_ref, b3_ref,
                       out_ref, pad_ref, patch_ref):
    H = pad_ref.shape[0] - 2
    W = pad_ref.shape[1] - 2
    Wp = pad_ref.shape[2]
    HW = H * W

    # Zero only the 1-pixel halo border of the padded scratch; the interior is
    # fully rewritten below, so no full-buffer memset is needed.
    zrow = jnp.zeros((1, W + 2, Wp), jnp.bfloat16)
    zcol = jnp.zeros((H + 2, 1, Wp), jnp.bfloat16)
    pad_ref[0:1, :, :] = zrow
    pad_ref[H + 1:H + 2, :, :] = zrow
    pad_ref[:, 0:1, :] = zcol
    pad_ref[:, W + 1:W + 2, :] = zcol

    x = x_ref[0]                                        # (HW, Cp) f32 — identity path
    xb = x.astype(jnp.bfloat16)

    # --- conv1 (1x1, BN scale folded) + bias + ReLU ---
    h1 = jnp.dot(xb, w1_ref[...], preferred_element_type=jnp.float32)
    h1 = jnp.maximum(h1 + b1_ref[...], 0.0)             # (HW, Wp) f32

    # --- conv2 (3x3, padding=1, stride=1) via im2col: single MXU matmul ---
    pad_ref[1:H + 1, 1:W + 1, :] = h1.astype(jnp.bfloat16).reshape(H, W, Wp)
    for k in range(9):
        dy, dx = divmod(k, 3)
        patch_ref[:, k * Wp:(k + 1) * Wp] = (
            pad_ref[dy:dy + H, dx:dx + W, :].reshape(HW, Wp))
    h2 = jnp.dot(patch_ref[...], w2_ref[...],
                 preferred_element_type=jnp.float32)
    h2 = jnp.maximum(h2 + b2_ref[...], 0.0)              # (HW, Wp) f32

    # --- conv3 (1x1, BN scale folded) + bias + residual add + ReLU ---
    h3 = jnp.dot(h2.astype(jnp.bfloat16), w3_ref[...],
                 preferred_element_type=jnp.float32)
    out_ref[0] = jnp.maximum(h3 + b3_ref[...] + x, 0.0)  # (HW, Cp) f32


def _round_up(n, m):
    return ((n + m - 1) // m) * m


def attn_bottleneck_pallas(x_nchw, params):
    """Run the bottleneck block. x_nchw: (N, C, H, W) float32. Returns (N, C, H, W)."""
    w1, (s1, b1), w2, (s2, b2), w3, (s3, b3) = params
    N, Cin, H, W = x_nchw.shape
    width = w1.shape[1]
    Cout = w3.shape[1]
    assert Cin == Cout, "residual add requires inplanes == planes*expansion (downsample=None)"

    f32, bf16 = jnp.float32, jnp.bfloat16
    Cp = _round_up(Cin, 128)     # lane-dense padded channel counts
    Wp = _round_up(width, 128)

    # --- fold BN scale into conv weights (inference mode), keep shift as bias ---
    w1f = (w1 * s1).astype(f32)                              # (Cin, width)
    w2f = (w2 * s2.reshape(1, 1, 1, width)).astype(f32)      # (3, 3, width, width)
    w3f = (w3 * s3).astype(f32)                              # (width, Cout)

    def pad2(a, r, c):
        return jnp.pad(a, ((0, r - a.shape[0]), (0, c - a.shape[1])))

    w1p = pad2(w1f, Cp, Wp).astype(bf16)                               # (Cp, Wp)
    w2p = jnp.pad(w2f, ((0, 0), (0, 0), (0, Wp - width), (0, Wp - width)))
    w2p = w2p.reshape(9 * Wp, Wp).astype(bf16)                         # im2col k=3*dy+dx blocks
    w3p = pad2(w3f, Wp, Cp).astype(bf16)                               # (Wp, Cp)
    b1p = pad2(b1.astype(f32), 1, Wp)
    b2p = pad2(b2.astype(f32), 1, Wp)
    b3p = pad2(b3.astype(f32), 1, Cp)

    # NCHW -> (N, H*W, Cp): channels-last on the lane axis, spatial pre-flattened.
    x = jnp.transpose(x_nchw, (0, 2, 3, 1)).astype(f32).reshape(N, H * W, Cin)
    x = jnp.pad(x, ((0, 0), (0, 0), (0, Cp - Cin)))

    def full_spec(a):
        nd = a.ndim
        return pl.BlockSpec(a.shape, lambda b, nd=nd: (0,) * nd)

    out = pl.pallas_call(
        _bottleneck_kernel,
        out_shape=jax.ShapeDtypeStruct((N, H * W, Cp), f32),
        grid_spec=pltpu.PrefetchScalarGridSpec(
            num_scalar_prefetch=0,
            grid=(N,),
            in_specs=[
                pl.BlockSpec((1, H * W, Cp), lambda b: (b, 0, 0)),     # x
                full_spec(w1p), full_spec(b1p),
                full_spec(w2p), full_spec(b2p),
                full_spec(w3p), full_spec(b3p),
            ],
            out_specs=pl.BlockSpec((1, H * W, Cp), lambda b: (b, 0, 0)),
            scratch_shapes=[
                pltpu.VMEM((H + 2, W + 2, Wp), bf16),   # zero-padded conv2 input
                pltpu.VMEM((H * W, 9 * Wp), bf16),      # im2col patch matrix
            ],
        ),
        compiler_params=pltpu.CompilerParams(
            dimension_semantics=("parallel",)),
    )(x, w1p, b1p, w2p, b2p, w3p, b3p)

    out = out[:, :, :Cout].reshape(N, H, W, Cout)
    return jnp.transpose(out, (0, 3, 1, 2))               # NHWC -> NCHW


# ---------------------------------------------------------------------------
# Deterministic parameter construction (shapes follow AttnBottleneck.__init__).
# ---------------------------------------------------------------------------
def make_params(inplanes, planes, base_width=64, groups=1, expansion=4, eps=1e-5):
    width = int(planes * (base_width / 64.0)) * groups
    out_ch = planes * expansion
    key = jax.random.PRNGKey(0)
    ks = jax.random.split(key, 12)

    def bn_fold(kg, kb, km, kv, c):
        gamma = 1.0 + 0.1 * jax.random.normal(kg, (c,), jnp.float32)
        beta = 0.1 * jax.random.normal(kb, (c,), jnp.float32)
        mean = 0.1 * jax.random.normal(km, (c,), jnp.float32)
        var = 1.0 + 0.1 * jnp.abs(jax.random.normal(kv, (c,), jnp.float32))
        scale = gamma / jnp.sqrt(var + eps)
        shift = beta - mean * scale
        return scale.reshape(1, c), shift.reshape(1, c)

    # conv weights stored as (Cin, Cout) / (3, 3, Cin, Cout) for x @ W contraction.
    w1 = 0.1 * jax.random.normal(ks[0], (inplanes, width), jnp.float32)
    w2 = 0.1 * jax.random.normal(ks[1], (3, 3, width, width), jnp.float32)
    w3 = 0.1 * jax.random.normal(ks[2], (width, out_ch), jnp.float32)

    bn1 = bn_fold(ks[3], ks[4], ks[5], ks[6], width)
    bn2 = bn_fold(ks[7], ks[8], ks[9], ks[10], width)
    bn3 = bn_fold(ks[11], ks[0], ks[1], ks[2], out_ch)
    return w1, bn1, w2, bn2, w3, bn3


# ---------------------------------------------------------------------------
# Pure-JAX f32 reference (module semantics) for a correctness check.
# ---------------------------------------------------------------------------
def reference(x_nchw, params):
    w1, (s1, b1), w2, (s2, b2), w3, (s3, b3) = params
    x = jnp.transpose(x_nchw, (0, 2, 3, 1)).astype(jnp.float32)
    h1 = jnp.maximum(jnp.einsum('nhwc,cd->nhwd', x, w1) * s1[0] + b1[0], 0.0)
    hp = jnp.pad(h1, ((0, 0), (1, 1), (1, 1), (0, 0)))
    H, W = x.shape[1], x.shape[2]
    acc = jnp.zeros_like(h1)
    for dy in range(3):
        for dx in range(3):
            acc = acc + jnp.einsum('nhwc,cd->nhwd',
                                   hp[:, dy:dy + H, dx:dx + W, :], w2[dy, dx])
    h2 = jnp.maximum(acc * s2[0] + b2[0], 0.0)
    h3 = jnp.einsum('nhwc,cd->nhwd', h2, w3) * s3[0] + b3[0]
    out = jnp.maximum(h3 + x, 0.0)
    return jnp.transpose(out, (0, 3, 1, 2))


if __name__ == "__main__":
    # small shapes: inplanes must equal planes*4 for the identity add (downsample=None)
    N, inplanes, planes, H, W = 2, 16, 4, 16, 16
    key = jax.random.PRNGKey(0)
    x = jax.random.normal(key, (N, inplanes, H, W), jnp.float32)

    params = make_params(inplanes, planes)

    out = attn_bottleneck_pallas(x, params)
    out = jax.block_until_ready(out)

    ref = reference(x, params)
    assert out.shape == (N, planes * 4, H, W)
    # tolerance accounts for bf16 matmul operands (f32 accumulation, f32 residual)
    assert jnp.allclose(out, ref, atol=3e-2, rtol=3e-2), \
        f"max abs err {jnp.max(jnp.abs(out - ref))}"

    print("KERNEL_OK")
</pallas_src>

<mosaic_0001>
module attributes {stable_mosaic.version = 11 : i64} {
  func.func @_bottleneck_kernel(%arg0: i32, %arg1: memref<1x256x128xf32, #tpu.memory_space<vmem>>, %arg2: memref<128x128xbf16, #tpu.memory_space<vmem>>, %arg3: memref<1x128xf32, #tpu.memory_space<vmem>>, %arg4: memref<1152x128xbf16, #tpu.memory_space<vmem>>, %arg5: memref<1x128xf32, #tpu.memory_space<vmem>>, %arg6: memref<128x128xbf16, #tpu.memory_space<vmem>>, %arg7: memref<1x128xf32, #tpu.memory_space<vmem>>, %arg8: memref<1x256x128xf32, #tpu.memory_space<vmem>>, %arg9: memref<18x18x128xbf16, #tpu.memory_space<vmem>>, %arg10: memref<256x1152xbf16, #tpu.memory_space<vmem>>) attributes {dimension_semantics = [#tpu.dimension_semantics<parallel>], iteration_bounds = array<i64: 2>, scalar_prefetch = 0 : i64, scratch_operands = 2 : i64, tpu.core_type = #tpu.core_type<tc>, window_params = [{transform_indices = @transform_0, window_bounds = array<i64: 1, 256, 128>}, {pipeline_mode = #tpu.pipeline_mode<synchronous>, transform_indices = @transform_1, window_bounds = array<i64: 128, 128>}, {pipeline_mode = #tpu.pipeline_mode<synchronous>, transform_indices = @transform_2, window_bounds = array<i64: 1, 128>}, {pipeline_mode = #tpu.pipeline_mode<synchronous>, transform_indices = @transform_3, window_bounds = array<i64: 1152, 128>}, {pipeline_mode = #tpu.pipeline_mode<synchronous>, transform_indices = @transform_4, window_bounds = array<i64: 1, 128>}, {pipeline_mode = #tpu.pipeline_mode<synchronous>, transform_indices = @transform_5, window_bounds = array<i64: 128, 128>}, {pipeline_mode = #tpu.pipeline_mode<synchronous>, transform_indices = @transform_6, window_bounds = array<i64: 1, 128>}, {transform_indices = @transform_7, window_bounds = array<i64: 1, 256, 128>}]} {
    %cst = arith.constant 0.000000e+00 : bf16
    %0 = vector.broadcast %cst : bf16 to vector<1x18x128xbf16>
    %cst_0 = arith.constant 0.000000e+00 : bf16
    %1 = vector.broadcast %cst_0 : bf16 to vector<18x1x128xbf16>
    %c0 = arith.constant 0 : index
    %c0_1 = arith.constant 0 : index
    %c0_2 = arith.constant 0 : index
    %2 = vector.load %arg9[%c0, %c0_1, %c0_2] : memref<18x18x128xbf16, #tpu.memory_space<vmem>>, vector<1x18x128xbf16>
    tpu.vector_store %arg9[%c0, %c0_1, %c0_2], %0 {strides = array<i32>} : memref<18x18x128xbf16, #tpu.memory_space<vmem>>, vector<1x18x128xbf16>,
    %c17 = arith.constant 17 : index
    %c0_3 = arith.constant 0 : index
    %c0_4 = arith.constant 0 : index
    %3 = vector.load %arg9[%c17, %c0_3, %c0_4] : memref<18x18x128xbf16, #tpu.memory_space<vmem>>, vector<1x18x128xbf16>
    tpu.vector_store %arg9[%c17, %c0_3, %c0_4], %0 {strides = array<i32>} : memref<18x18x128xbf16, #tpu.memory_space<vmem>>, vector<1x18x128xbf16>,
    %c0_5 = arith.constant 0 : index
    %c0_6 = arith.constant 0 : index
    %c0_7 = arith.constant 0 : index
    %4 = vector.load %arg9[%c0_5, %c0_6, %c0_7] : memref<18x18x128xbf16, #tpu.memory_space<vmem>>, vector<18x1x128xbf16>
    tpu.vector_store %arg9[%c0_5, %c0_6, %c0_7], %1 {strides = array<i32>} : memref<18x18x128xbf16, #tpu.memory_space<vmem>>, vector<18x1x128xbf16>,
    %c0_8 = arith.constant 0 : index
    %c17_9 = arith.constant 17 : index
    %c0_10 = arith.constant 0 : index
    %5 = vector.load %arg9[%c0_8, %c17_9, %c0_10] : memref<18x18x128xbf16, #tpu.memory_space<vmem>>, vector<18x1x128xbf16>
    tpu.vector_store %arg9[%c0_8, %c17_9, %c0_10], %1 {strides = array<i32>} : memref<18x18x128xbf16, #tpu.memory_space<vmem>>, vector<18x1x128xbf16>,
    %c0_11 = arith.constant 0 : index
    %c0_12 = arith.constant 0 : index
    %c0_13 = arith.constant 0 : index
    %6 = vector.load %arg1[%c0_11, %c0_12, %c0_13] : memref<1x256x128xf32, #tpu.memory_space<vmem>>, vector<1x256x128xf32>
    %7 = vector.shape_cast %6 : vector<1x256x128xf32> to vector<256x128xf32>
    %8 = arith.truncf %7 : vector<256x128xf32> to vector<256x128xbf16>
    %c0_14 = arith.constant 0 : index
    %c0_15 = arith.constant 0 : index
    %9 = vector.load %arg2[%c0_14, %c0_15] : memref<128x128xbf16, #tpu.memory_space<vmem>>, vector<128x128xbf16>
    %cst_16 = arith.constant dense<0.000000e+00> : vector<256x128xf32>
    %10 = tpu.matmul %8, %9, %cst_16 {dimension_numbers = #tpu.dot_dimension_numbers<[1], [0], [0], [1], [0, 0, 1, 1], [], []>} : vector<256x128xbf16>, vector<128x128xbf16>, vector<256x128xf32> -> vector<256x128xf32>
    %c0_17 = arith.constant 0 : index
    %c0_18 = arith.constant 0 : index
    %11 = vector.load %arg3[%c0_17, %c0_18] : memref<1x128xf32, #tpu.memory_space<vmem>>, vector<1x128xf32>
    %12 = vector.broadcast %11 : vector<1x128xf32> to vector<256x128xf32>
    %13 = arith.addf %10, %12 : vector<256x128xf32>
    %cst_19 = arith.constant 0.000000e+00 : f32
    %14 = vector.broadcast %cst_19 : f32 to vector<256x128xf32>
    %15 = arith.maximumf %13, %14 : vector<256x128xf32>
    %16 = arith.truncf %15 : vector<256x128xf32> to vector<256x128xbf16>
    %17 = vector.shape_cast %16 : vector<256x128xbf16> to vector<16x16x128xbf16>
    %c1 = arith.constant 1 : index
    %c1_20 = arith.constant 1 : index
    %c0_21 = arith.constant 0 : index
    %18 = vector.load %arg9[%c1, %c1_20, %c0_21] : memref<18x18x128xbf16, #tpu.memory_space<vmem>>, vector<16x16x128xbf16>
    tpu.vector_store %arg9[%c1, %c1_20, %c0_21], %17 {strides = array<i32>} : memref<18x18x128xbf16, #tpu.memory_space<vmem>>, vector<16x16x128xbf16>,
    %c0_22 = arith.constant 0 : index
    %c0_23 = arith.constant 0 : index
    %c0_24 = arith.constant 0 : index
    %19 = vector.load %arg9[%c0_22, %c0_23, %c0_24] : memref<18x18x128xbf16, #tpu.memory_space<vmem>>, vector<16x16x128xbf16>
    %20 = vector.shape_cast %19 : vector<16x16x128xbf16> to vector<256x128xbf16>
    %c0_25 = arith.constant 0 : index
    %c0_26 = arith.constant 0 : index
    %21 = vector.load %arg10[%c0_25, %c0_26] : memref<256x1152xbf16, #tpu.memory_space<vmem>>, vector<256x128xbf16>
    tpu.vector_store %arg10[%c0_25, %c0_26], %20 {strides = array<i32>} : memref<256x1152xbf16, #tpu.memory_space<vmem>>, vector<256x128xbf16>,
    %c0_27 = arith.constant 0 : index
    %c1_28 = arith.constant 1 : index
    %c0_29 = arith.constant 0 : index
    %22 = vector.load %arg9[%c0_27, %c1_28, %c0_29] : memref<18x18x128xbf16, #tpu.memory_space<vmem>>, vector<16x16x128xbf16>
    %23 = vector.shape_cast %22 : vector<16x16x128xbf16> to vector<256x128xbf16>
    %c0_30 = arith.constant 0 : index
    %c128 = arith.constant 128 : index
    %24 = vector.load %arg10[%c0_30, %c128] : memref<256x1152xbf16, #tpu.memory_space<vmem>>, vector<256x128xbf16>
    tpu.vector_store %arg10[%c0_30, %c128], %23 {strides = array<i32>} : memref<256x1152xbf16, #tpu.memory_space<vmem>>, vector<256x128xbf16>,
    %c0_31 = arith.constant 0 : index
    %c2 = arith.constant 2 : index
    %c0_32 = arith.constant 0 : index
    %25 = vector.load %arg9[%c0_31, %c2, %c0_32] : memref<18x18x128xbf16, #tpu.memory_space<vmem>>, vector<16x16x128xbf16>
    %26 = vector.shape_cast %25 : vector<16x16x128xbf16> to vector<256x128xbf16>
    %c0_33 = arith.constant 0 : index
    %c256 = arith.constant 256 : index
    %27 = vector.load %arg10[%c0_33, %c256] : memref<256x1152xbf16, #tpu.memory_space<vmem>>, vector<256x128xbf16>
    tpu.vector_store %arg10[%c0_33, %c256], %26 {strides = array<i32>} : memref<256x1152xbf16, #tpu.memory_space<vmem>>, vector<256x128xbf16>,
    %c1_34 = arith.constant 1 : index
    %c0_35 = arith.constant 0 : index
    %c0_36 = arith.constant 0 : index
    %28 = vector.load %arg9[%c1_34, %c0_35, %c0_36] : memref<18x18x128xbf16, #tpu.memory_space<vmem>>, vector<16x16x128xbf16>
    %29 = vector.shape_cast %28 : vector<16x16x128xbf16> to vector<256x128xbf16>
    %c0_37 = arith.constant 0 : index
    %c384 = arith.constant 384 : index
    %30 = vector.load %arg10[%c0_37, %c384] : memref<256x1152xbf16, #tpu.memory_space<vmem>>, vector<256x128xbf16>
    tpu.vector_store %arg10[%c0_37, %c384], %29 {strides = array<i32>} : memref<256x1152xbf16, #tpu.memory_space<vmem>>, vector<256x128xbf16>,
    %c1_38 = arith.constant 1 : index
    %c1_39 = arith.constant 1 : index
    %c0_40 = arith.constant 0 : index
    %31 = vector.load %arg9[%c1_38, %c1_39, %c0_40] : memref<18x18x128xbf16, #tpu.memory_space<vmem>>, vector<16x16x128xbf16>
    %32 = vector.shape_cast %31 : vector<16x16x128xbf16> to vector<256x128xbf16>
    %c0_41 = arith.constant 0 : index
    %c512 = arith.constant 512 : index
    %33 = vector.load %arg10[%c0_41, %c512] : memref<256x1152xbf16, #tpu.memory_space<vmem>>, vector<256x128xbf16>
    tpu.vector_store %arg10[%c0_41, %c512], %32 {strides = array<i32>} : memref<256x1152xbf16, #tpu.memory_space<vmem>>, vector<256x128xbf16>,
    %c1_42 = arith.constant 1 : index
    %c2_43 = arith.constant 2 : index
    %c0_44 = arith.constant 0 : index
    %34 = vector.load %arg9[%c1_42, %c2_43, %c0_44] : memref<18x18x128xbf16, #tpu.memory_space<vmem>>, vector<16x16x128xbf16>
    %35 = vector.shape_cast %34 : vector<16x16x128xbf16> to vector<256x128xbf16>
    %c0_45 = arith.constant 0 : index
    %c640 = arith.constant 640 : index
    %36 = vector.load %arg10[%c0_45, %c640] : memref<256x1152xbf16, #tpu.memory_space<vmem>>, vector<256x128xbf16>
    tpu.vector_store %arg10[%c0_45, %c640], %35 {strides = array<i32>} : memref<256x1152xbf16, #tpu.memory_space<vmem>>, vector<256x128xbf16>,
    %c2_46 = arith.constant 2 : index
    %c0_47 = arith.constant 0 : index
    %c0_48 = arith.constant 0 : index
    %37 = vector.load %arg9[%c2_46, %c0_47, %c0_48] : memref<18x18x128xbf16, #tpu.memory_space<vmem>>, vector<16x16x128xbf16>
    %38 = vector.shape_cast %37 : vector<16x16x128xbf16> to vector<256x128xbf16>
    %c0_49 = arith.constant 0 : index
    %c768 = arith.constant 768 : index
    %39 = vector.load %arg10[%c0_49, %c768] : memref<256x1152xbf16, #tpu.memory_space<vmem>>, vector<256x128xbf16>
    tpu.vector_store %arg10[%c0_49, %c768], %38 {strides = array<i32>} : memref<256x1152xbf16, #tpu.memory_space<vmem>>, vector<256x128xbf16>,
    %c2_50 = arith.constant 2 : index
    %c1_51 = arith.constant 1 : index
    %c0_52 = arith.constant 0 : index
    %40 = vector.load %arg9[%c2_50, %c1_51, %c0_52] : memref<18x18x128xbf16, #tpu.memory_space<vmem>>, vector<16x16x128xbf16>
    %41 = vector.shape_cast %40 : vector<16x16x128xbf16> to vector<256x128xbf16>
    %c0_53 = arith.constant 0 : index
    %c896 = arith.constant 896 : index
    %42 = vector.load %arg10[%c0_53, %c896] : memref<256x1152xbf16, #tpu.memory_space<vmem>>, vector<256x128xbf16>
    tpu.vector_store %arg10[%c0_53, %c896], %41 {strides = array<i32>} : memref<256x1152xbf16, #tpu.memory_space<vmem>>, vector<256x128xbf16>,
    %c2_54 = arith.constant 2 : index
    %c2_55 = arith.constant 2 : index
    %c0_56 = arith.constant 0 : index
    %43 = vector.load %arg9[%c2_54, %c2_55, %c0_56] : memref<18x18x128xbf16, #tpu.memory_space<vmem>>, vector<16x16x128xbf16>
    %44 = vector.shape_cast %43 : vector<16x16x128xbf16> to vector<256x128xbf16>
    %c0_57 = arith.constant 0 : index
    %c1024 = arith.constant 1024 : index
    %45 = vector.load %arg10[%c0_57, %c1024] : memref<256x1152xbf16, #tpu.memory_space<vmem>>, vector<256x128xbf16>
    tpu.vector_store %arg10[%c0_57, %c1024], %44 {strides = array<i32>} : memref<256x1152xbf16, #tpu.memory_space<vmem>>, vector<256x128xbf16>,
    %c0_58 = arith.constant 0 : index
    %c0_59 = arith.constant 0 : index
    %46 = vector.load %arg10[%c0_58, %c0_59] : memref<256x1152xbf16, #tpu.memory_space<vmem>>, vector<256x1152xbf16>
    %c0_60 = arith.constant 0 : index
    %c0_61 = arith.constant 0 : index
    %47 = vector.load %arg4[%c0_60, %c0_61] : memref<1152x128xbf16, #tpu.memory_space<vmem>>, vector<1152x128xbf16>
    %cst_62 = arith.constant dense<0.000000e+00> : vector<256x128xf32>
    %48 = tpu.matmul %46, %47, %cst_62 {dimension_numbers = #tpu.dot_dimension_numbers<[1], [0], [0], [1], [0, 0, 1, 1], [], []>} : vector<256x1152xbf16>, vector<1152x128xbf16>, vector<256x128xf32> -> vector<256x128xf32>
    %c0_63 = arith.constant 0 : index
    %c0_64 = arith.constant 0 : index
    %49 = vector.load %arg5[%c0_63, %c0_64] : memref<1x128xf32, #tpu.memory_space<vmem>>, vector<1x128xf32>
    %50 = vector.broadcast %49 : vector<1x128xf32> to vector<256x128xf32>
    %51 = arith.addf %48, %50 : vector<256x128xf32>
    %cst_65 = arith.constant 0.000000e+00 : f32
    %52 = vector.broadcast %cst_65 : f32 to vector<256x128xf32>
    %53 = arith.maximumf %51, %52 : vector<256x128xf32>
    %54 = arith.truncf %53 : vector<256x128xf32> to vector<256x128xbf16>
    %c0_66 = arith.constant 0 : index
    %c0_67 = arith.constant 0 : index
    %55 = vector.load %arg6[%c0_66, %c0_67] : memref<128x128xbf16, #tpu.memory_space<vmem>>, vector<128x128xbf16>
    %cst_68 = arith.constant dense<0.000000e+00> : vector<256x128xf32>
    %56 = tpu.matmul %54, %55, %cst_68 {dimension_numbers = #tpu.dot_dimension_numbers<[1], [0], [0], [1], [0, 0, 1, 1], [], []>} : vector<256x128xbf16>, vector<128x128xbf16>, vector<256x128xf32> -> vector<256x128xf32>
    %c0_69 = arith.constant 0 : index
    %c0_70 = arith.constant 0 : index
    %57 = vector.load %arg7[%c0_69, %c0_70] : memref<1x128xf32, #tpu.memory_space<vmem>>, vector<1x128xf32>
    %58 = vector.broadcast %57 : vector<1x128xf32> to vector<256x128xf32>
    %59 = arith.addf %56, %58 : vector<256x128xf32>
    %60 = arith.addf %59, %7 : vector<256x128xf32>
    %cst_71 = arith.constant 0.000000e+00 : f32
    %61 = vector.broadcast %cst_71 : f32 to vector<256x128xf32>
    %62 = arith.maximumf %60, %61 : vector<256x128xf32>
    %c0_72 = arith.constant 0 : index
    %c0_73 = arith.constant 0 : index
    %c0_74 = arith.constant 0 : index
    %63 = vector.load %arg8[%c0_72, %c0_73, %c0_74] : memref<1x256x128xf32, #tpu.memory_space<vmem>>, vector<1x256x128xf32>
    %64 = vector.shape_cast %63 : vector<1x256x128xf32> to vector<256x128xf32>
    %65 = vector.shape_cast %62 : vector<256x128xf32> to vector<1x256x128xf32>
    tpu.vector_store %arg8[%c0_72, %c0_73, %c0_74], %65 {strides = array<i32>} : memref<1x256x128xf32, #tpu.memory_space<vmem>>, vector<1x256x128xf32>,
    return
  }
  func.func @transform_0(%arg0: i32) -> (i32, i32, i32) {
    %c0_i32 = arith.constant 0 : i32
    %c0_i32_0 = arith.constant 0 : i32
    %c0_i32_1 = arith.constant 0 : i32
    return %arg0, %c0_i32, %c0_i32_0 : i32, i32, i32
  }
  func.func @transform_1(%arg0: i32) -> (i32, i32) {
    %c0_i32 = arith.constant 0 : i32
    %c0_i32_0 = arith.constant 0 : i32
    %c0_i32_1 = arith.constant 0 : i32
    return %c0_i32, %c0_i32_0 : i32, i32
  }
  func.func @transform_2(%arg0: i32) -> (i32, i32) {
    %c0_i32 = arith.constant 0 : i32
    %c0_i32_0 = arith.constant 0 : i32
    %c0_i32_1 = arith.constant 0 : i32
    return %c0_i32, %c0_i32_0 : i32, i32
  }
  func.func @transform_3(%arg0: i32) -> (i32, i32) {
    %c0_i32 = arith.constant 0 : i32
    %c0_i32_0 = arith.constant 0 : i32
    %c0_i32_1 = arith.constant 0 : i32
    return %c0_i32, %c0_i32_0 : i32, i32
  }
  func.func @transform_4(%arg0: i32) -> (i32, i32) {
    %c0_i32 = arith.constant 0 : i32
    %c0_i32_0 = arith.constant 0 : i32
    %c0_i32_1 = arith.constant 0 : i32
    return %c0_i32, %c0_i32_0 : i32, i32
  }
  func.func @transform_5(%arg0: i32) -> (i32, i32) {
    %c0_i32 = arith.constant 0 : i32
    %c0_i32_0 = arith.constant 0 : i32
    %c0_i32_1 = arith.constant 0 : i32
    return %c0_i32, %c0_i32_0 : i32, i32
  }
  func.func @transform_6(%arg0: i32) -> (i32, i32) {
    %c0_i32 = arith.constant 0 : i32
    %c0_i32_0 = arith.constant 0 : i32
    %c0_i32_1 = arith.constant 0 : i32
    return %c0_i32, %c0_i32_0 : i32, i32
  }
  func.func @transform_7(%arg0: i32) -> (i32, i32, i32) {
    %c0_i32 = arith.constant 0 : i32
    %c0_i32_0 = arith.constant 0 : i32
    %c0_i32_1 = arith.constant 0 : i32
    return %arg0, %c0_i32, %c0_i32_0 : i32, i32, i32
  }
}

</mosaic_0001>

<llo_original>
// kernel: tpu_custom_call.1
$region0: #{tpu_custom_call.1}
  #allocation0 [shape = 'u32[]', space=smem, size = 0x4, offset = 0x4, fixed_abs, tag = 'smem constant byte address 0x4 - core index']
  #allocation1 [shape = 'u32[144,128]{1,0:T(1,128)}', space=vmem, size = 0x12000, scoped, tag = 'internal scratch']
  #allocation2 [shape = 'bf16[18,18,128]{2,1,0:T(8,128)(2,1)}', space=vmem, size = 0x1b000, scoped, tag = 'scratch operand']
  #allocation3 [shape = 'bf16[256,1152]{1,0:T(16,128)(2,1)}', space=vmem, size = 0x90000, scoped, tag = 'scratch operand']
  %s0 = inlined_call_operand.hbm [shape: f32[2,256,128], index: 0, kind: input, shape index: {}]
  %s1 = inlined_call_operand.hbm [shape: bf16[128,128], index: 1, kind: input, shape index: {}]
  %s2 = inlined_call_operand.vmem [shape: f32[1,128], index: 2, kind: input, shape index: {}]
  %s3 = inlined_call_operand.hbm [shape: bf16[1152,128], index: 3, kind: input, shape index: {}]
  %s4 = inlined_call_operand.vmem [shape: f32[1,128], index: 4, kind: input, shape index: {}]
  %s5 = inlined_call_operand.hbm [shape: bf16[128,128], index: 5, kind: input, shape index: {}]
  %s6 = inlined_call_operand.vmem [shape: f32[1,128], index: 6, kind: input, shape index: {}]
  %s7 = inlined_call_operand.hbm [shape: f32[2,256,128], index: 7, kind: output, shape index: {}]
  %s8 = sld [smem:[#allocation0]]
  $region77: #{tpu_custom_call.1} parent=0
    _
  %s10 = ssub.s32 1, %s8
  %s11 = scalar_select 0, %s10, %s8
  $region1: #{tpu_custom_call.1} parent=0
    #allocation4 [shape = 'u8[262144]{0}', space=vmem, size = 0x40000, scoped, tag = 'input window, operand 0']
    #allocation5 [shape = 's32[2]{0}', space=sflag, size = 0x8, scoped, tag = 'scoped memory for tpu_custom_call.1']
    #allocation6 [shape = 's32[2]{0}', space=sflag, size = 0x8, scoped, tag = 'scoped memory for tpu_custom_call.1']
    #allocation7 [shape = 'u8[32768]{0}', space=vmem, size = 0x8000, scoped, tag = 'input window, operand 1, single buffered']
    #allocation8 [shape = 's32[1]{0}', space=sflag, size = 0x4, scoped, tag = 'scoped memory for tpu_custom_call.1']
    #allocation9 [shape = 'u8[294912]{0}', space=vmem, size = 0x48000, scoped, tag = 'input window, operand 3, single buffered']
    #allocation10 [shape = 'u8[32768]{0}', space=vmem, size = 0x8000, scoped, tag = 'input window, operand 5, single buffered']
    #allocation11 [shape = 's32[1]{0}', space=sflag, size = 0x4, scoped, tag = 'scoped memory for tpu_custom_call.1']
    #allocation12 [shape = 'u8[262144]{0}', space=vmem, size = 0x40000, scoped, tag = 'output window, operand 0']
    %12 = vsyncpa [#allocation5], 0
    %s13 = scalar_lea.sflag [#allocation5], 1
    %14 = vsyncpa %s13, 0
    %15 = vsyncpa [#allocation8], 0
    %16 = vsyncpa [#allocation11], 0
    %17 = vsyncpa [#allocation6], 0
    %s18 = scalar_lea.sflag [#allocation6], 1
    %19 = vsyncpa %s18, 0
    loop: start=0, step=1, limit=4
    $region2: #{tpu_custom_call.1} parent=1 // loop_pre_header
      _
    $region3: #{tpu_custom_call.1} parent=1 // loop_header
      %s21 = sphi 0, %s25
      %p22 = scmp.ge.s32.totalorder %s21, 4
      %s31 = sphi 0, %s33
      %s34 = sphi 0, %s31
      %s35 = sphi 0, %s34
      %s51 = sphi 0, %s35
      %s55 = sphi 0, %s55
      %s57 = sphi 0, %s55
      %s58 = sphi 0, %s57
      %s72 = sphi 0, %s58
      %s76 = sphi 0, %s76
      %s78 = sphi 0, %s76
      %s79 = sphi 0, %s78
      %s93 = sphi 0, %s79
      %s97 = sphi 0, %s97
      %s99 = sphi 0, %s97
      %s100 = sphi 0, %s99
      %s114 = sphi 0, %s100
      %s118 = sphi 0, %s118
      %s120 = sphi 0, %s118
      %s121 = sphi 0, %s120
      %s135 = sphi 0, %s121
      %s139 = sphi 0, %s139
      %s141 = sphi 0, %s139
      %s142 = sphi 0, %s141
      %s156 = sphi 0, %s142
      %s160 = sphi 0, %s160
      %s162 = sphi 0, %s160
      %s163 = sphi 0, %s162
      %s177 = sphi 0, %s163
      %s183 = sphi 0, %s185
      %s186 = sphi 0, %s183
      %s187 = sphi 0, %s186
      %s203 = sphi 0, %s187
    $region4: #{tpu_custom_call.1} parent=1 // loop_header_branch
      %24 = sbr.rel (%p22) target = $region8
    $region5: #{tpu_custom_call.1} parent=1 // loop_body
      %s26 = ssub.s32 %s21, 1
      %s27 = ssub.s32 %s21, 2
      %s28 = sadd.s32 %s21, 1
      %s29 = ssub.s32 %s21, %s28
      %p30 = scmp.eq.s32.totalorder %s29, 0
      %s32 = sadd.s32 %s31, 1
      %s33 = scalar_select %p30, %s31, %s32
      %p36 = pneg %p30
      %p37 = scmp.eq.s32.totalorder %s21, 1
      %p38 = por %p36, %p37
      %p39 = scmp.ne.s32.totalorder %s31, %s34
      %p40 = scmp.eq.s32.totalorder %s21, 0
      %p41 = por %p39, %p40
      %p42 = scmp.ne.s32.totalorder %s31, %s34
      %p43 = scmp.eq.s32.totalorder %s26, 1
      %p44 = por %p42, %p43
      %p45 = scmp.ne.s32.totalorder %s34, %s35
      %p46 = scmp.eq.s32.totalorder %s26, 0
      %p47 = por %p45, %p46
      %p48 = scmp.ne.s32.totalorder %s34, %s35
      %p49 = scmp.eq.s32.totalorder %s27, 1
      %p50 = por %p48, %p49
      %p52 = scmp.ne.s32.totalorder %s35, %s51
      %p53 = scmp.eq.s32.totalorder %s27, 0
      %p54 = por %p52, %p53
      %s56 = sadd.s32 %s55, 1
      %p59 = scmp.eq.s32.totalorder %s21, 1
      %p60 = scmp.ne.s32.totalorder %s55, %s57
      %p61 = scmp.eq.s32.totalorder %s21, 0
      %p62 = por %p60, %p61
      %p63 = scmp.ne.s32.totalorder %s55, %s57
      %p64 = scmp.eq.s32.totalorder %s26, 1
      %p65 = por %p63, %p64
      %p66 = scmp.ne.s32.totalorder %s57, %s58
      %p67 = scmp.eq.s32.totalorder %s26, 0
      %p68 = por %p66, %p67
      %p69 = scmp.ne.s32.totalorder %s57, %s58
      %p70 = scmp.eq.s32.totalorder %s27, 1
      %p71 = por %p69, %p70
      %p73 = scmp.ne.s32.totalorder %s58, %s72
      %p74 = scmp.eq.s32.totalorder %s27, 0
      %p75 = por %p73, %p74
      %s77 = sadd.s32 %s76, 1
      %p80 = scmp.eq.s32.totalorder %s21, 1
      %p81 = scmp.ne.s32.totalorder %s76, %s78
      %p82 = scmp.eq.s32.totalorder %s21, 0
      %p83 = por %p81, %p82
      %p84 = scmp.ne.s32.totalorder %s76, %s78
      %p85 = scmp.eq.s32.totalorder %s26, 1
      %p86 = por %p84, %p85
      %p87 = scmp.ne.s32.totalorder %s78, %s79
      %p88 = scmp.eq.s32.totalorder %s26, 0
      %p89 = por %p87, %p88
      %p90 = scmp.ne.s32.totalorder %s78, %s79
      %p91 = scmp.eq.s32.totalorder %s27, 1
      %p92 = por %p90, %p91
      %p94 = scmp.ne.s32.totalorder %s79, %s93
      %p95 = scmp.eq.s32.totalorder %s27, 0
      %p96 = por %p94, %p95
      %s98 = sadd.s32 %s97, 1
      %p101 = scmp.eq.s32.totalorder %s21, 1
      %p102 = scmp.ne.s32.totalorder %s97, %s99
      %p103 = scmp.eq.s32.totalorder %s21, 0
      %p104 = por %p102, %p103
      %p105 = scmp.ne.s32.totalorder %s97, %s99
      %p106 = scmp.eq.s32.totalorder %s26, 1
      %p107 = por %p105, %p106
      %p108 = scmp.ne.s32.totalorder %s99, %s100
      %p109 = scmp.eq.s32.totalorder %s26, 0
      %p110 = por %p108, %p109
      %p111 = scmp.ne.s32.totalorder %s99, %s100
      %p112 = scmp.eq.s32.totalorder %s27, 1
      %p113 = por %p111, %p112
      %p115 = scmp.ne.s32.totalorder %s100, %s114
      %p116 = scmp.eq.s32.totalorder %s27, 0
      %p117 = por %p115, %p116
      %s119 = sadd.s32 %s118, 1
      %p122 = scmp.eq.s32.totalorder %s21, 1
      %p123 = scmp.ne.s32.totalorder %s118, %s120
      %p124 = scmp.eq.s32.totalorder %s21, 0
      %p125 = por %p123, %p124
      %p126 = scmp.ne.s32.totalorder %s118, %s120
      %p127 = scmp.eq.s32.totalorder %s26, 1
      %p128 = por %p126, %p127
      %p129 = scmp.ne.s32.totalorder %s120, %s121
      %p130 = scmp.eq.s32.totalorder %s26, 0
      %p131 = por %p129, %p130
      %p132 = scmp.ne.s32.totalorder %s120, %s121
      %p133 = scmp.eq.s32.totalorder %s27, 1
      %p134 = por %p132, %p133
      %p136 = scmp.ne.s32.totalorder %s121, %s135
      %p137 = scmp.eq.s32.totalorder %s27, 0
      %p138 = por %p136, %p137
      %s140 = sadd.s32 %s139, 1
      %p143 = scmp.eq.s32.totalorder %s21, 1
      %p144 = scmp.ne.s32.totalorder %s139, %s141
      %p145 = scmp.eq.s32.totalorder %s21, 0
      %p146 = por %p144, %p145
      %p147 = scmp.ne.s32.totalorder %s139, %s141
      %p148 = scmp.eq.s32.totalorder %s26, 1
      %p149 = por %p147, %p148
      %p150 = scmp.ne.s32.totalorder %s141, %s142
      %p151 = scmp.eq.s32.totalorder %s26, 0
      %p152 = por %p150, %p151
      %p153 = scmp.ne.s32.totalorder %s141, %s142
      %p154 = scmp.eq.s32.totalorder %s27, 1
      %p155 = por %p153, %p154
      %p157 = scmp.ne.s32.totalorder %s142, %s156
      %p158 = scmp.eq.s32.totalorder %s27, 0
      %p159 = por %p157, %p158
      %s161 = sadd.s32 %s160, 1
      %p164 = scmp.eq.s32.totalorder %s21, 1
      %p165 = scmp.ne.s32.totalorder %s160, %s162
      %p166 = scmp.eq.s32.totalorder %s21, 0
      %p167 = por %p165, %p166
      %p168 = scmp.ne.s32.totalorder %s160, %s162
      %p169 = scmp.eq.s32.totalorder %s26, 1
      %p170 = por %p168, %p169
      %p171 = scmp.ne.s32.totalorder %s162, %s163
      %p172 = scmp.eq.s32.totalorder %s26, 0
      %p173 = por %p171, %p172
      %p174 = scmp.ne.s32.totalorder %s162, %s163
      %p175 = scmp.eq.s32.totalorder %s27, 1
      %p176 = por %p174, %p175
      %p178 = scmp.ne.s32.totalorder %s163, %s177
      %p179 = scmp.eq.s32.totalorder %s27, 0
      %p180 = por %p178, %p179
      %s181 = ssub.s32 %s21, %s28
      %p182 = scmp.eq.s32.totalorder %s181, 0
      %s184 = sadd.s32 %s183, 1
      %s185 = scalar_select %p182, %s183, %s184
      %p188 = pneg %p182
      %p189 = scmp.eq.s32.totalorder %s21, 1
      %p190 = por %p188, %p189
      %p191 = scmp.ne.s32.totalorder %s183, %s186
      %p192 = scmp.eq.s32.totalorder %s21, 0
      %p193 = por %p191, %p192
      %p194 = scmp.ne.s32.totalorder %s183, %s186
      %p195 = scmp.eq.s32.totalorder %s26, 1
      %p196 = por %p194, %p195
      %p197 = scmp.ne.s32.totalorder %s186, %s187
      %p198 = scmp.eq.s32.totalorder %s26, 0
      %p199 = por %p197, %p198
      %p200 = scmp.ne.s32.totalorder %s186, %s187
      %p201 = scmp.eq.s32.totalorder %s27, 1
      %p202 = por %p200, %p201
      %p204 = scmp.ne.s32.totalorder %s187, %s203
      %p205 = scmp.eq.s32.totalorder %s27, 0
      %p206 = por %p204, %p205
      %p207 = scmp.le.s32.totalorder 1, %s21
      %p208 = scmp.lt.s32.totalorder %s21, 3
      %p209 = pnand %p207, %p208
      %p210 = pneg %p209
      // Predicated region
      $region9: #{tpu_custom_call.1} parent=5 // pred_check
        _
      $region10: #{tpu_custom_call.1} parent=5 // pred_check_branch
        %212 = sbr.rel (%p209) target = $region12
      $region11: #{tpu_custom_call.1} parent=5 // pred_region
        %s213 = ssub.s32 %s21, 1
        // Predicated region
        $region13: #{tpu_custom_call.1} parent=11 // pred_check
          %p214 = pneg %p68
        $region14: #{tpu_custom_call.1} parent=11 // pred_check_branch
          %216 = sbr.rel (%p214) target = $region16
        $region15: #{tpu_custom_call.1} parent=11 // pred_region
          %s218 = ssub.s32 1024, 1024
          %219 = vsyncadd [#allocation8], %s218
          %s220 = sshll.u32 [#allocation7], 4
          %s221 = int_to_ptr.vmem [resolvable:$true] %s220
          %226 = dma.hbm_to_vmem [thread:$0]  %s1, 1024, %s221, [#allocation8], 64, 64, 4
        $region16: #{tpu_custom_call.1} parent=11 // pred_fallthru
          _
        // Predicated region
        $region17: #{tpu_custom_call.1} parent=11 // pred_check
          %p227 = pneg %p89
        $region18: #{tpu_custom_call.1} parent=11 // pred_check_branch
          %229 = sbr.rel (%p227) target = $region20
        $region19: #{tpu_custom_call.1} parent=11 // pred_region
          _
        $region20: #{tpu_custom_call.1} parent=11 // pred_fallthru
          _
        // Predicated region
        $region21: #{tpu_custom_call.1} parent=11 // pred_check
          %p230 = pneg %p110
        $region22: #{tpu_custom_call.1} parent=11 // pred_check_branch
          %232 = sbr.rel (%p230) target = $region24
        $region23: #{tpu_custom_call.1} parent=11 // pred_region
          %s234 = ssub.s32 9216, 9216
          %235 = vsyncadd [#allocation8], %s234
          %s236 = sshll.u32 [#allocation9], 4
          %s237 = int_to_ptr.vmem [resolvable:$true] %s236
          %242 = dma.hbm_to_vmem [thread:$0]  %s3, 9216, %s237, [#allocation8], 64, 64, 4
        $region24: #{tpu_custom_call.1} parent=11 // pred_fallthru
          _
        // Predicated region
        $region25: #{tpu_custom_call.1} parent=11 // pred_check
          %p243 = pneg %p131
        $region26: #{tpu_custom_call.1} parent=11 // pred_check_branch
          %245 = sbr.rel (%p243) target = $region28
        $region27: #{tpu_custom_call.1} parent=11 // pred_region
          _
        $region28: #{tpu_custom_call.1} parent=11 // pred_fallthru
          _
        // Predicated region
        $region29: #{tpu_custom_call.1} parent=11 // pred_check
          %p246 = pneg %p152
        $region30: #{tpu_custom_call.1} parent=11 // pred_check_branch
          %248 = sbr.rel (%p246) target = $region32
        $region31: #{tpu_custom_call.1} parent=11 // pred_region
          %s250 = ssub.s32 1024, 1024
          %251 = vsyncadd [#allocation11], %s250
          %s252 = sshll.u32 [#allocation10], 4
          %s253 = int_to_ptr.vmem [resolvable:$true] %s252
          %258 = dma.hbm_to_vmem [thread:$0]  %s5, 1024, %s253, [#allocation11], 64, 64, 4
        $region32: #{tpu_custom_call.1} parent=11 // pred_fallthru
          _
        // Predicated region
        $region33: #{tpu_custom_call.1} parent=11 // pred_check
          %p259 = pneg %p173
        $region34: #{tpu_custom_call.1} parent=11 // pred_check_branch
          %261 = sbr.rel (%p259) target = $region36
        $region35: #{tpu_custom_call.1} parent=11 // pred_region
          _
        $region36: #{tpu_custom_call.1} parent=11 // pred_fallthru
          _
      $region12: #{tpu_custom_call.1} parent=5 // pred_fallthru
        _
      %p262 = scmp.lt.s32.totalorder %s21, 2
      // Predicated region
      $region37: #{tpu_custom_call.1} parent=5 // pred_check
        %p263 = pneg %p262
      $region38: #{tpu_custom_call.1} parent=5 // pred_check_branch
        %265 = sbr.rel (%p263) target = $region40
      $region39: #{tpu_custom_call.1} parent=5 // pred_region
        // Predicated region
        $region41: #{tpu_custom_call.1} parent=39 // pred_check
          %p266 = pneg %p41
        $region42: #{tpu_custom_call.1} parent=39 // pred_check_branch
          %268 = sbr.rel (%p266) target = $region44
        $region43: #{tpu_custom_call.1} parent=39 // pred_region
          %s269 = sand.u32 %s31, 1
          %s270 = scalar_lea.sflag [#allocation5], %s269
          %s271 = sand.u32 %s31, 1
          %s272 = smul.addr %s271, 256
          %s273 = scalar_lea.vmem [#allocation4], %s272
          %s275 = ssub.s32 4096, 4096
          %276 = vsyncadd %s270, %s275
          %s277 = smul.addr %s21, 32
          %s278 = smul.addr %s277, 128
          %s279 = scalar_lea.hbm %s0, %s278
          %s280 = sshll.u32 %s273, 4
          %s281 = int_to_ptr.vmem [resolvable:$true] %s280
          %286 = dma.hbm_to_vmem [thread:$0]  %s279, 4096, %s281, %s270, 128, 128, 8
        $region44: #{tpu_custom_call.1} parent=39 // pred_fallthru
          _
      $region40: #{tpu_custom_call.1} parent=5 // pred_fallthru
        _
      %p287 = scmp.le.s32.totalorder 1, %s21
      %p288 = scmp.lt.s32.totalorder %s21, 3
      %p289 = pnand %p287, %p288
      %p290 = pneg %p289
      // Predicated region
      $region45: #{tpu_custom_call.1} parent=5 // pred_check
        _
      $region46: #{tpu_custom_call.1} parent=5 // pred_check_branch
        %292 = sbr.rel (%p289) target = $region48
      $region47: #{tpu_custom_call.1} parent=5 // pred_region
        %s293 = ssub.s32 %s21, 1
        %s294 = sand.u32 %s34, 1
        %s295 = scalar_lea.sflag [#allocation5], %s294
        %s296 = sand.u32 %s34, 1
        %s297 = smul.addr %s296, 256
        %s298 = scalar_lea.vmem [#allocation4], %s297
        // Predicated region
        $region49: #{tpu_custom_call.1} parent=47 // pred_check
          %p299 = pneg %p47
        $region50: #{tpu_custom_call.1} parent=47 // pred_check_branch
          %301 = sbr.rel (%p299) target = $region52
        $region51: #{tpu_custom_call.1} parent=47 // pred_region
          %302 = dma.done %s295, 4096
        $region52: #{tpu_custom_call.1} parent=47 // pred_fallthru
          _
        // Predicated region
        $region53: #{tpu_custom_call.1} parent=47 // pred_check
          %p303 = pneg %p68
        $region54: #{tpu_custom_call.1} parent=47 // pred_check_branch
          %305 = sbr.rel (%p303) target = $region56
        $region55: #{tpu_custom_call.1} parent=47 // pred_region
          %306 = dma.done [#allocation8], 1024
        $region56: #{tpu_custom_call.1} parent=47 // pred_fallthru
          _
        // Predicated region
        $region57: #{tpu_custom_call.1} parent=47 // pred_check
          %p307 = pneg %p110
        $region58: #{tpu_custom_call.1} parent=47 // pred_check_branch
          %309 = sbr.rel (%p307) target = $region60
        $region59: #{tpu_custom_call.1} parent=47 // pred_region
          %310 = dma.done [#allocation8], 9216
        $region60: #{tpu_custom_call.1} parent=47 // pred_fallthru
          _
        // Predicated region
        $region61: #{tpu_custom_call.1} parent=47 // pred_check
          %p311 = pneg %p152
        $region62: #{tpu_custom_call.1} parent=47 // pred_check_branch
          %313 = sbr.rel (%p311) target = $region64
        $region63: #{tpu_custom_call.1} parent=47 // pred_region
          %314 = dma.done [#allocation11], 1024
        $region64: #{tpu_custom_call.1} parent=47 // pred_fallthru
          _
        %s315 = sand.u32 %s34, 1
        %s316 = scalar_lea.sflag [#allocation5], %s315
        %s317 = sand.u32 %s34, 1
        %s318 = smul.addr %s317, 256
        %s319 = scalar_lea.vmem [#allocation4], %s318
        %p320 = pneg %p47
        %p321 = pneg %p44
        %p322 = pneg %p68
        %p323 = pneg %p65
        %p324 = pneg %p89
        %p325 = pneg %p86
        %p326 = pneg %p110
        %p327 = pneg %p107
        %p328 = pneg %p131
        %p329 = pneg %p128
        %p330 = pneg %p152
        %p331 = pneg %p149
        %p332 = pneg %p173
        %p333 = pneg %p170
        %p334 = pneg %p199
        %p335 = pneg %p196
        %s336 = sand.u32 %s186, 1
        %s337 = scalar_lea.sflag [#allocation6], %s336
        %s338 = sand.u32 %s186, 1
        %s339 = smul.addr %s338, 256
        %s340 = scalar_lea.vmem [#allocation12], %s339
        %342 = vst [vmem:[#allocation2] sm:$0xf] 0
        %343 = vst [vmem:[#allocation2 + $0x4] sm:$0xf] 0
        %344 = vst [vmem:[#allocation2 + $0x8] sm:$0x1] 0
        %s345 = scalar_lea.vmem [#allocation2], 204
        %346 = vst [vmem:[%s345] sm:$0xf] 0
        %347 = vst [vmem:[%s345 + $0x4] sm:$0xf] 0
        %348 = vst [vmem:[%s345 + $0x8] sm:$0x1] 0
        %vm349 = vcmask 1040384
        %vm350 = vsmask.f32 256
        %vm351 = vmand %vm349, %vm350
        %v352 = vld [vmem:[#allocation2] sm:$0x1]
        %v353 = vsel %vm351, 0, %v352
        %354 = vst [vmem:[#allocation2] sm:$0x1] %v353
        %v355 = vld [vmem:[#allocation2 + $0xc] sm:$0x1]
        %v356 = vsel %vm351, 0, %v355
        %357 = vst [vmem:[#allocation2 + $0xc] sm:$0x1] %v356
        %v358 = vld [vmem:[#allocation2 + $0x18] sm:$0x1]
        %v359 = vsel %vm351, 0, %v358
        %360 = vst [vmem:[#allocation2 + $0x18] sm:$0x1] %v359
        %v361 = vld [vmem:[#allocation2 + $0x24] sm:$0x1]
        %v362 = vsel %vm351, 0, %v361
        %363 = vst [vmem:[#allocation2 + $0x24] sm:$0x1] %v362
        %v364 = vld [vmem:[#allocation2 + $0x30] sm:$0x1]
        %v365 = vsel %vm351, 0, %v364
        %366 = vst [vmem:[#allocation2 + $0x30] sm:$0x1] %v365
        %v367 = vld [vmem:[#allocation2 + $0x3c] sm:$0x1]
        %v368 = vsel %vm351, 0, %v367
        %369 = vst [vmem:[#allocation2 + $0x3c] sm:$0x1] %v368
        %v370 = vld [vmem:[#allocation2 + $0x48] sm:$0x1]
        %v371 = vsel %vm351, 0, %v370
        %372 = vst [vmem:[#allocation2 + $0x48] sm:$0x1] %v371
        %v373 = vld [vmem:[#allocation2 + $0x54] sm:$0x1]
        %v374 = vsel %vm351, 0, %v373
        %375 = vst [vmem:[#allocation2 + $0x54] sm:$0x1] %v374
        %v376 = vld [vmem:[#allocation2 + $0x60] sm:$0x1]
        %v377 = vsel %vm351, 0, %v376
        %378 = vst [vmem:[#allocation2 + $0x60] sm:$0x1] %v377
        %v379 = vld [vmem:[#allocation2 + $0x6c] sm:$0x1]
        %v380 = vsel %vm351, 0, %v379
        %381 = vst [vmem:[#allocation2 + $0x6c] sm:$0x1] %v380
        %v382 = vld [vmem:[#allocation2 + $0x78] sm:$0x1]
        %v383 = vsel %vm351, 0, %v382
        %384 = vst [vmem:[#allocation2 + $0x78] sm:$0x1] %v383
        %v385 = vld [vmem:[#allocation2 + $0x84] sm:$0x1]
        %v386 = vsel %vm351, 0, %v385
        %387 = vst [vmem:[#allocation2 + $0x84] sm:$0x1] %v386
        %v388 = vld [vmem:[#allocation2 + $0x90] sm:$0x1]
        %v389 = vsel %vm351, 0, %v388
        %390 = vst [vmem:[#allocation2 + $0x90] sm:$0x1] %v389
        %v391 = vld [vmem:[#allocation2 + $0x9c] sm:$0x1]
        %v392 = vsel %vm351, 0, %v391
        %393 = vst [vmem:[#allocation2 + $0x9c] sm:$0x1] %v392
        %v394 = vld [vmem:[#allocation2 + $0xa8] sm:$0x1]
        %v395 = vsel %vm351, 0, %v394
        %396 = vst [vmem:[#allocation2 + $0xa8] sm:$0x1] %v395
        %v397 = vld [vmem:[#allocation2 + $0xb4] sm:$0x1]
        %v398 = vsel %vm351, 0, %v397
        %399 = vst [vmem:[#allocation2 + $0xb4] sm:$0x1] %v398
        %v400 = vld [vmem:[#allocation2 + $0xc0] sm:$0x1]
        %v401 = vsel %vm351, 0, %v400
        %402 = vst [vmem:[#allocation2 + $0xc0] sm:$0x1] %v401
        %v403 = vld [vmem:[#allocation2 + $0xcc] sm:$0x1]
        %v404 = vsel %vm351, 0, %v403
        %405 = vst [vmem:[#allocation2 + $0xcc] sm:$0x1] %v404
        %vm406 = vsmask.f32 7938
        %vm407 = vmand %vm349, %vm406
        %v408 = vld [vmem:[#allocation2 + $0x8] sm:$0x1]
        %v409 = vsel %vm407, 0, %v408
        %410 = vst [vmem:[#allocation2 + $0x8] sm:$0x1] %v409
        %v411 = vld [vmem:[#allocation2 + $0x14] sm:$0x1]
        %v412 = vsel %vm407, 0, %v411
        %413 = vst [vmem:[#allocation2 + $0x14] sm:$0x1] %v412
        %v414 = vld [vmem:[#allocation2 + $0x20] sm:$0x1]
        %v415 = vsel %vm407, 0, %v414
        %416 = vst [vmem:[#allocation2 + $0x20] sm:$0x1] %v415
        %v417 = vld [vmem:[#allocation2 + $0x2c] sm:$0x1]
        %v418 = vsel %vm407, 0, %v417
        %419 = vst [vmem:[#allocation2 + $0x2c] sm:$0x1] %v418
        %v420 = vld [vmem:[#allocation2 + $0x38] sm:$0x1]
        %v421 = vsel %vm407, 0, %v420
        %422 = vst [vmem:[#allocation2 + $0x38] sm:$0x1] %v421
        %v423 = vld [vmem:[#allocation2 + $0x44] sm:$0x1]
        %v424 = vsel %vm407, 0, %v423
        %425 = vst [vmem:[#allocation2 + $0x44] sm:$0x1] %v424
        %v426 = vld [vmem:[#allocation2 + $0x50] sm:$0x1]
        %v427 = vsel %vm407, 0, %v426
        %428 = vst [vmem:[#allocation2 + $0x50] sm:$0x1] %v427
        %v429 = vld [vmem:[#allocation2 + $0x5c] sm:$0x1]
        %v430 = vsel %vm407, 0, %v429
        %431 = vst [vmem:[#allocation2 + $0x5c] sm:$0x1] %v430
        %v432 = vld [vmem:[#allocation2 + $0x68] sm:$0x1]
        %v433 = vsel %vm407, 0, %v432
        %434 = vst [vmem:[#allocation2 + $0x68] sm:$0x1] %v433
        %v435 = vld [vmem:[#allocation2 + $0x74] sm:$0x1]
        %v436 = vsel %vm407, 0, %v435
        %437 = vst [vmem:[#allocation2 + $0x74] sm:$0x1] %v436
        %v438 = vld [vmem:[#allocation2 + $0x80] sm:$0x1]
        %v439 = vsel %vm407, 0, %v438
        %440 = vst [vmem:[#allocation2 + $0x80] sm:$0x1] %v439
        %v441 = vld [vmem:[#allocation2 + $0x8c] sm:$0x1]
        %v442 = vsel %vm407, 0, %v441
        %443 = vst [vmem:[#allocation2 + $0x8c] sm:$0x1] %v442
        %v444 = vld [vmem:[#allocation2 + $0x98] sm:$0x1]
        %v445 = vsel %vm407, 0, %v444
        %446 = vst [vmem:[#allocation2 + $0x98] sm:$0x1] %v445
        %v447 = vld [vmem:[#allocation2 + $0xa4] sm:$0x1]
        %v448 = vsel %vm407, 0, %v447
        %449 = vst [vmem:[#allocation2 + $0xa4] sm:$0x1] %v448
        %v450 = vld [vmem:[#allocation2 + $0xb0] sm:$0x1]
        %v451 = vsel %vm407, 0, %v450
        %452 = vst [vmem:[#allocation2 + $0xb0] sm:$0x1] %v451
        %v453 = vld [vmem:[#allocation2 + $0xbc] sm:$0x1]
        %v454 = vsel %vm407, 0, %v453
        %455 = vst [vmem:[#allocation2 + $0xbc] sm:$0x1] %v454
        %v456 = vld [vmem:[#allocation2 + $0xc8] sm:$0x1]
        %v457 = vsel %vm407, 0, %v456
        %458 = vst [vmem:[#allocation2 + $0xc8] sm:$0x1] %v457
        %v459 = vld [vmem:[#allocation2 + $0xd4] sm:$0x1]
        %v460 = vsel %vm407, 0, %v459
        %461 = vst [vmem:[#allocation2 + $0xd4] sm:$0x1] %v460
        %v462 = vld [vmem:[%s298] sm:$0xff]
        %v463 = vld [vmem:[%s298 + $0x8] sm:$0xff]
        %v464 = vld [vmem:[%s298 + $0x10] sm:$0xff]
        %v465 = vld [vmem:[%s298 + $0x18] sm:$0xff]
        %v466 = vld [vmem:[%s298 + $0x20] sm:$0xff]
        %v467 = vld [vmem:[%s298 + $0x28] sm:$0xff]
        %v468 = vld [vmem:[%s298 + $0x30] sm:$0xff]
        %v469 = vld [vmem:[%s298 + $0x38] sm:$0xff]
        %v470 = vld [vmem:[%s298 + $0x40] sm:$0xff]
        %v471 = vld [vmem:[%s298 + $0x48] sm:$0xff]
        %v472 = vld [vmem:[%s298 + $0x50] sm:$0xff]
        %v473 = vld [vmem:[%s298 + $0x58] sm:$0xff]
        %v474 = vld [vmem:[%s298 + $0x60] sm:$0xff]
        %v475 = vld [vmem:[%s298 + $0x68] sm:$0xff]
        %v476 = vld [vmem:[%s298 + $0x70] sm:$0xff]
        %v477 = vld [vmem:[%s298 + $0x78] sm:$0xff]
        %v478 = vld [vmem:[%s298 + $0x80] sm:$0xff]
        %v479 = vld [vmem:[%s298 + $0x88] sm:$0xff]
        %v480 = vld [vmem:[%s298 + $0x90] sm:$0xff]
        %v481 = vld [vmem:[%s298 + $0x98] sm:$0xff]
        %v482 = vld [vmem:[%s298 + $0xa0] sm:$0xff]
        %v483 = vld [vmem:[%s298 + $0xa8] sm:$0xff]
        %v484 = vld [vmem:[%s298 + $0xb0] sm:$0xff]
        %v485 = vld [vmem:[%s298 + $0xb8] sm:$0xff]
        %v486 = vld [vmem:[%s298 + $0xc0] sm:$0xff]
        %v487 = vld [vmem:[%s298 + $0xc8] sm:$0xff]
        %v488 = vld [vmem:[%s298 + $0xd0] sm:$0xff]
        %v489 = vld [vmem:[%s298 + $0xd8] sm:$0xff]
        %v490 = vld [vmem:[%s298 + $0xe0] sm:$0xff]
        %v491 = vld [vmem:[%s298 + $0xe8] sm:$0xff]
        %v492 = vld [vmem:[%s298 + $0xf0] sm:$0xff]
        %v493 = vld [vmem:[%s298 + $0xf8] sm:$0xff]
        %v494 = vpack.c.bf16 %v463, %v462
        %v495 = vpack.c.bf16 %v465, %v464
        %v496 = vpack.c.bf16 %v467, %v466
        %v497 = vpack.c.bf16 %v469, %v468
        %v498 = vpack.c.bf16 %v471, %v470
        %v499 = vpack.c.bf16 %v473, %v472
        %v500 = vpack.c.bf16 %v475, %v474
        %v501 = vpack.c.bf16 %v477, %v476
        %v502 = vpack.c.bf16 %v479, %v478
        %v503 = vpack.c.bf16 %v481, %v480
        %v504 = vpack.c.bf16 %v483, %v482
        %v505 = vpack.c.bf16 %v485, %v484
        %v506 = vpack.c.bf16 %v487, %v486
        %v507 = vpack.c.bf16 %v489, %v488
        %v508 = vpack.c.bf16 %v491, %v490
        %v509 = vpack.c.bf16 %v493, %v492
        %v510 = vld [vmem:[#allocation7] sm:$0xf]
        %v511 = vld [vmem:[#allocation7 + $0x4] sm:$0xf]
        %v512 = vld [vmem:[#allocation7 + $0x8] sm:$0xf]
        %v513 = vld [vmem:[#allocation7 + $0xc] sm:$0xf]
        %v514 = vld [vmem:[#allocation7 + $0x10] sm:$0xf]
        %v515 = vld [vmem:[#allocation7 + $0x14] sm:$0xf]
        %v516 = vld [vmem:[#allocation7 + $0x18] sm:$0xf]
        %v517 = vld [vmem:[#allocation7 + $0x1c] sm:$0xf]
        %v518 = vld [vmem:[#allocation7 + $0x20] sm:$0xf]
        %v519 = vld [vmem:[#allocation7 + $0x24] sm:$0xf]
        %v520 = vld [vmem:[#allocation7 + $0x28] sm:$0xf]
        %v521 = vld [vmem:[#allocation7 + $0x2c] sm:$0xf]
        %v522 = vld [vmem:[#allocation7 + $0x30] sm:$0xf]
        %v523 = vld [vmem:[#allocation7 + $0x34] sm:$0xf]
        %v524 = vld [vmem:[#allocation7 + $0x38] sm:$0xf]
        %v525 = vld [vmem:[#allocation7 + $0x3c] sm:$0xf]
        %v526 = vld [vmem:[%s2] sm:$0x1]
        %v528 = vlaneseq
        %v529 = vshrl.u32 %v528, 7
        %v530 = vsub.s32 0, %v529
        %v531 = vrot.slane %v526, %v530
        %v549 = vunpack.c.l.b16 %v510
        %v550 = vunpack.c.l.b16 %v511
        %v551 = vunpack.c.l.b16 %v512
        %v552 = vunpack.c.l.b16 %v513
        %v553 = vunpack.c.l.b16 %v514
        %v554 = vunpack.c.l.b16 %v515
        %v555 = vunpack.c.l.b16 %v516
        %v556 = vunpack.c.l.b16 %v517
        %v557 = vunpack.c.l.b16 %v518
        %v558 = vunpack.c.l.b16 %v519
        %v559 = vunpack.c.l.b16 %v520
        %v560 = vunpack.c.l.b16 %v521
        %v561 = vunpack.c.l.b16 %v522
        %v562 = vunpack.c.l.b16 %v523
        %v563 = vunpack.c.l.b16 %v524
        %v564 = vunpack.c.l.b16 %v525
        %v565 = vpack.c.b16 %v550, %v549
        %v566 = vpack.c.b16 %v552, %v551
        %v567 = vpack.c.b16 %v554, %v553
        %v568 = vpack.c.b16 %v556, %v555
        %v569 = vpack.c.b16 %v558, %v557
        %v570 = vpack.c.b16 %v560, %v559
        %v571 = vpack.c.b16 %v562, %v561
        %v572 = vpack.c.b16 %v564, %v563
        %581 = vmatprep.subr.bf16.mxu0 0
        %582 = vmatpush1.bf16.msra.mxu0 %v565
        %583 = vmatprep.subr.bf16.mxu0 0
        %584 = vmatpush1.bf16.msra.mxu0 %v566
        %585 = vmatprep.subr.bf16.mxu0 0
        %586 = vmatpush1.bf16.msra.mxu0 %v567
        %587 = vmatprep.subr.bf16.mxu0 0
        %588 = vmatpush1.bf16.msra.mxu0 %v568
        %589 = vmatprep.subr.bf16.mxu0 0
        %590 = vmatpush1.bf16.msra.mxu0 %v569
        %591 = vmatprep.subr.bf16.mxu0 0
        %592 = vmatpush1.bf16.msra.mxu0 %v570
        %593 = vmatprep.subr.bf16.mxu0 0
        %594 = vmatpush1.bf16.msra.mxu0 %v571
        %595 = vmatprep.subr.bf16.mxu0 0
        %596 = vmatpush1.bf16.msra.mxu0 %v572
        %597 = vmatprep.subr.bf16.mxu0 0
        %598 = vmatpush1.bf16.msra.mxu0 0
        %599 = vmatprep.subr.bf16.mxu0 0
        %600 = vmatpush1.bf16.msra.mxu0 0
        %601 = vmatprep.subr.bf16.mxu0 0
        %602 = vmatpush1.bf16.msra.mxu0 0
        %603 = vmatprep.subr.bf16.mxu0 0
        %604 = vmatpush1.bf16.msra.mxu0 0
        %605 = vmatprep.subr.bf16.mxu0 0
        %606 = vmatpush1.bf16.msra.mxu0 0
        %607 = vmatprep.subr.bf16.mxu0 0
        %608 = vmatpush1.bf16.msra.mxu0 0
        %609 = vmatprep.subr.bf16.mxu0 0
        %610 = vmatpush1.bf16.msra.mxu0 0
        %611 = vmatprep.subr.bf16.mxu0 0
        %612 = vmatpush1.bf16.msra.mxu0 0
        %613 = vmatprep.mubr.bf16.mxu0 0
        %614 = vmatmul.mubr.bf16.gmra.mrb[0].mxu0 %v494
        %v615 = vpop.f32.mrb[0].mxu0
        %v616 = vadd.f32 %v531, %v615
        %v617 = vpop.f32.mrb[0].mxu0
        %v618 = vpop.f32.mrb[0].mxu0
        %v619 = vadd.f32 %v531, %v618
        %v620 = vpop.f32.mrb[0].mxu0
        %621 = vmatprep.mubr.bf16.mxu0 0
        %622 = vmatmul.mubr.bf16.gmra.mrb[0].mxu0 %v495
        %v623 = vpop.f32.mrb[0].mxu0
        %v624 = vadd.f32 %v531, %v623
        %v625 = vpop.f32.mrb[0].mxu0
        %v626 = vpop.f32.mrb[0].mxu0
        %v627 = vadd.f32 %v531, %v626
        %v628 = vpop.f32.mrb[0].mxu0
        %629 = vmatprep.mubr.bf16.mxu0 0
        %630 = vmatmul.mubr.bf16.gmra.mrb[0].mxu0 %v496
        %v631 = vpop.f32.mrb[0].mxu0
        %v632 = vadd.f32 %v531, %v631
        %v633 = vpop.f32.mrb[0].mxu0
        %v634 = vpop.f32.mrb[0].mxu0
        %v635 = vadd.f32 %v531, %v634
        %v636 = vpop.f32.mrb[0].mxu0
        %637 = vmatprep.mubr.bf16.mxu0 0
        %638 = vmatmul.mubr.bf16.gmra.mrb[0].mxu0 %v497
        %v639 = vpop.f32.mrb[0].mxu0
        %v640 = vadd.f32 %v531, %v639
        %v641 = vpop.f32.mrb[0].mxu0
        %v642 = vpop.f32.mrb[0].mxu0
        %v643 = vadd.f32 %v531, %v642
        %v644 = vpop.f32.mrb[0].mxu0
        %645 = vmatprep.mubr.bf16.mxu0 0
        %646 = vmatmul.mubr.bf16.gmra.mrb[0].mxu0 %v498
        %v647 = vpop.f32.mrb[0].mxu0
        %v648 = vadd.f32 %v531, %v647
        %v649 = vpop.f32.mrb[0].mxu0
        %v650 = vpop.f32.mrb[0].mxu0
        %v651 = vadd.f32 %v531, %v650
        %v652 = vpop.f32.mrb[0].mxu0
        %653 = vmatprep.mubr.bf16.mxu0 0
        %654 = vmatmul.mubr.bf16.gmra.mrb[0].mxu0 %v499
        %v655 = vpop.f32.mrb[0].mxu0
        %v656 = vadd.f32 %v531, %v655
        %v657 = vpop.f32.mrb[0].mxu0
        %v658 = vpop.f32.mrb[0].mxu0
        %v659 = vadd.f32 %v531, %v658
        %v660 = vpop.f32.mrb[0].mxu0
        %661 = vmatprep.mubr.bf16.mxu0 0
        %662 = vmatmul.mubr.bf16.gmra.mrb[0].mxu0 %v500
        %v663 = vpop.f32.mrb[0].mxu0
        %v664 = vadd.f32 %v531, %v663
        %v665 = vpop.f32.mrb[0].mxu0
        %v666 = vpop.f32.mrb[0].mxu0
        %v667 = vadd.f32 %v531, %v666
        %v668 = vpop.f32.mrb[0].mxu0
        %669 = vmatprep.mubr.bf16.mxu0 0
        %670 = vmatmul.mubr.bf16.gmra.mrb[0].mxu0 %v501
        %v671 = vpop.f32.mrb[0].mxu0
        %v672 = vadd.f32 %v531, %v671
        %v673 = vpop.f32.mrb[0].mxu0
        %v674 = vpop.f32.mrb[0].mxu0
        %v675 = vadd.f32 %v531, %v674
        %v676 = vpop.f32.mrb[0].mxu0
        %677 = vmatprep.mubr.bf16.mxu0 0
        %678 = vmatmul.mubr.bf16.gmra.mrb[0].mxu0 %v502
        %v679 = vpop.f32.mrb[0].mxu0
        %v680 = vadd.f32 %v531, %v679
        %v681 = vpop.f32.mrb[0].mxu0
        %v682 = vpop.f32.mrb[0].mxu0
        %v683 = vadd.f32 %v531, %v682
        %v684 = vpop.f32.mrb[0].mxu0
        %685 = vmatprep.mubr.bf16.mxu0 0
        %686 = vmatmul.mubr.bf16.gmra.mrb[0].mxu0 %v503
        %v687 = vpop.f32.mrb[0].mxu0
        %v688 = vadd.f32 %v531, %v687
        %v689 = vpop.f32.mrb[0].mxu0
        %v690 = vpop.f32.mrb[0].mxu0
        %v691 = vadd.f32 %v531, %v690
        %v692 = vpop.f32.mrb[0].mxu0
        %693 = vmatprep.mubr.bf16.mxu0 0
        %694 = vmatmul.mubr.bf16.gmra.mrb[0].mxu0 %v504
        %v695 = vpop.f32.mrb[0].mxu0
        %v696 = vadd.f32 %v531, %v695
        %v697 = vpop.f32.mrb[0].mxu0
        %v698 = vpop.f32.mrb[0].mxu0
        %v699 = vadd.f32 %v531, %v698
        %v700 = vpop.f32.mrb[0].mxu0
        %701 = vmatprep.mubr.bf16.mxu0 0
        %702 = vmatmul.mubr.bf16.gmra.mrb[0].mxu0 %v505
        %v703 = vpop.f32.mrb[0].mxu0
        %v704 = vadd.f32 %v531, %v703
        %v705 = vpop.f32.mrb[0].mxu0
        %v706 = vpop.f32.mrb[0].mxu0
        %v707 = vadd.f32 %v531, %v706
        %v708 = vpop.f32.mrb[0].mxu0
        %709 = vmatprep.mubr.bf16.mxu0 0
        %710 = vmatmul.mubr.bf16.gmra.mrb[0].mxu0 %v506
        %v711 = vpop.f32.mrb[0].mxu0
        %v712 = vadd.f32 %v531, %v711
        %v713 = vpop.f32.mrb[0].mxu0
        %v714 = vpop.f32.mrb[0].mxu0
        %v715 = vadd.f32 %v531, %v714
        %v716 = vpop.f32.mrb[0].mxu0
        %717 = vmatprep.mubr.bf16.mxu0 0
        %718 = vmatmul.mubr.bf16.gmra.mrb[0].mxu0 %v507
        %v719 = vpop.f32.mrb[0].mxu0
        %v720 = vadd.f32 %v531, %v719
        %v721 = vpop.f32.mrb[0].mxu0
        %v722 = vpop.f32.mrb[0].mxu0
        %v723 = vadd.f32 %v531, %v722
        %v724 = vpop.f32.mrb[0].mxu0
        %725 = vmatprep.mubr.bf16.mxu0 0
        %726 = vmatmul.mubr.bf16.gmra.mrb[0].mxu0 %v508
        %v727 = vpop.f32.mrb[0].mxu0
        %v728 = vadd.f32 %v531, %v727
        %v729 = vpop.f32.mrb[0].mxu0
        %v730 = vpop.f32.mrb[0].mxu0
        %v731 = vadd.f32 %v531, %v730
        %v732 = vpop.f32.mrb[0].mxu0
        %733 = vmatprep.mubr.bf16.mxu0 0
        %734 = vmatmul.mubr.bf16.gmra.mrb[0].mxu0 %v509
        %v735 = vpop.f32.mrb[0].mxu0
        %v736 = vadd.f32 %v531, %v735
        %v737 = vpop.f32.mrb[0].mxu0
        %v738 = vpop.f32.mrb[0].mxu0
        %v739 = vadd.f32 %v531, %v738
        %v740 = vpop.f32.mrb[0].mxu0
        %741 = vdwg.mxu0
        %v742 = vmax.f32 %v616, 0.0
        %v743 = vmax.f32 %v619, 0.0
        %v744 = vmax.f32 %v624, 0.0
        %v745 = vmax.f32 %v627, 0.0
        %v746 = vmax.f32 %v632, 0.0
        %v747 = vmax.f32 %v635, 0.0
        %v748 = vmax.f32 %v640, 0.0
        %v749 = vmax.f32 %v643, 0.0
        %v750 = vmax.f32 %v648, 0.0
        %v751 = vmax.f32 %v651, 0.0
        %v752 = vmax.f32 %v656, 0.0
        %v753 = vmax.f32 %v659, 0.0
        %v754 = vmax.f32 %v664, 0.0
        %v755 = vmax.f32 %v667, 0.0
        %v756 = vmax.f32 %v672, 0.0
        %v757 = vmax.f32 %v675, 0.0
        %v758 = vmax.f32 %v680, 0.0
        %v759 = vmax.f32 %v683, 0.0
        %v760 = vmax.f32 %v688, 0.0
        %v761 = vmax.f32 %v691, 0.0
        %v762 = vmax.f32 %v696, 0.0
        %v763 = vmax.f32 %v699, 0.0
        %v764 = vmax.f32 %v704, 0.0
        %v765 = vmax.f32 %v707, 0.0
        %v766 = vmax.f32 %v712, 0.0
        %v767 = vmax.f32 %v715, 0.0
        %v768 = vmax.f32 %v720, 0.0
        %v769 = vmax.f32 %v723, 0.0
        %v770 = vmax.f32 %v728, 0.0
        %v771 = vmax.f32 %v731, 0.0
        %v772 = vmax.f32 %v736, 0.0
        %v773 = vmax.f32 %v739, 0.0
        %v774 = vpack.c.bf16 %v743, %v742
        %v775 = vpack.c.bf16 %v745, %v744
        %v776 = vpack.c.bf16 %v747, %v746
        %v777 = vpack.c.bf16 %v749, %v748
        %v778 = vpack.c.bf16 %v751, %v750
        %v779 = vpack.c.bf16 %v753, %v752
        %v780 = vpack.c.bf16 %v755, %v754
        %v781 = vpack.c.bf16 %v757, %v756
        %v782 = vpack.c.bf16 %v759, %v758
        %v783 = vpack.c.bf16 %v761, %v760
        %v784 = vpack.c.bf16 %v763, %v762
        %v785 = vpack.c.bf16 %v765, %v764
        %v786 = vpack.c.bf16 %v767, %v766
        %v787 = vpack.c.bf16 %v769, %v768
        %v788 = vpack.c.bf16 %v771, %v770
        %v789 = vpack.c.bf16 %v773, %v772
        %v806 = vunpack.c.l.b16 %v774
        %v807 = vunpack.c.h.b16 %v774
        %v808 = vunpack.c.l.b16 %v775
        %v809 = vunpack.c.h.b16 %v775
        %v810 = vunpack.c.l.b16 %v776
        %v811 = vunpack.c.h.b16 %v776
        %v812 = vunpack.c.l.b16 %v777
        %v813 = vunpack.c.h.b16 %v777
        %v814 = vunpack.c.l.b16 %v778
        %v815 = vunpack.c.h.b16 %v778
        %v816 = vunpack.c.l.b16 %v779
        %v817 = vunpack.c.h.b16 %v779
        %v818 = vunpack.c.l.b16 %v780
        %v819 = vunpack.c.h.b16 %v780
        %v820 = vunpack.c.l.b16 %v781
        %v821 = vunpack.c.h.b16 %v781
        %v822 = vunpack.c.l.b16 %v782
        %v823 = vunpack.c.h.b16 %v782
        %v824 = vunpack.c.l.b16 %v783
        %v825 = vunpack.c.h.b16 %v783
        %v826 = vunpack.c.l.b16 %v784
        %v827 = vunpack.c.h.b16 %v784
        %v828 = vunpack.c.l.b16 %v785
        %v829 = vunpack.c.h.b16 %v785
        %v830 = vunpack.c.l.b16 %v786
        %v831 = vunpack.c.h.b16 %v786
        %v832 = vunpack.c.l.b16 %v787
        %v833 = vunpack.c.h.b16 %v787
        %v834 = vunpack.c.l.b16 %v788
        %v835 = vunpack.c.h.b16 %v788
        %v836 = vunpack.c.l.b16 %v789
        %v837 = vunpack.c.h.b16 %v789
        %v838 = vpack.c.b16 %v806, %v806
        %v839 = vpack.c.b16 %v807, %v807
        %v840 = vpack.c.b16 %v808, %v808
        %v841 = vpack.c.b16 %v809, %v809
        %v842 = vpack.c.b16 %v810, %v810
        %v843 = vpack.c.b16 %v811, %v811
        %v844 = vpack.c.b16 %v812, %v812
        %v845 = vpack.c.b16 %v813, %v813
        %v846 = vpack.c.b16 %v814, %v814
        %v847 = vpack.c.b16 %v815, %v815
        %v848 = vpack.c.b16 %v816, %v816
        %v849 = vpack.c.b16 %v817, %v817
        %v850 = vpack.c.b16 %v818, %v818
        %v851 = vpack.c.b16 %v819, %v819
        %v852 = vpack.c.b16 %v820, %v820
        %v853 = vpack.c.b16 %v821, %v821
        %v854 = vpack.c.b16 %v822, %v822
        %v855 = vpack.c.b16 %v823, %v823
        %v856 = vpack.c.b16 %v824, %v824
        %v857 = vpack.c.b16 %v825, %v825
        %v858 = vpack.c.b16 %v826, %v826
        %v859 = vpack.c.b16 %v827, %v827
        %v860 = vpack.c.b16 %v828, %v828
        %v861 = vpack.c.b16 %v829, %v829
        %v862 = vpack.c.b16 %v830, %v830
        %v863 = vpack.c.b16 %v831, %v831
        %v864 = vpack.c.b16 %v832, %v832
        %v865 = vpack.c.b16 %v833, %v833
        %v866 = vpack.c.b16 %v834, %v834
        %v867 = vpack.c.b16 %v835, %v835
        %v868 = vpack.c.b16 %v836, %v836
        %v869 = vpack.c.b16 %v837, %v837
        %vm870 = vsmask.f32 4368
        %vm871 = vmor %vm350, %vm870
        %v873 = vshrl.u32 %v838, 16
        %v875 = vrot.slane %v873, 7
        %v876 = vshll.u32 %v838, 16
        %v878 = vor.u32 %v875, %v876
        %v879 = vrot.slane %v875, 4
        %v881 = vshrl.u32 %v839, 16
        %v883 = vrot.slane %v881, 7
        %v884 = vshll.u32 %v839, 16
        %v886 = vor.u32 %v883, %v884
        %v887 = vsel %vm871, %v879, %v886
        %v888 = vrot.slane %v883, 4
        %v890 = vshrl.u32 %v840, 16
        %v892 = vrot.slane %v890, 7
        %v893 = vshll.u32 %v840, 16
        %v895 = vor.u32 %v892, %v893
        %v896 = vrot.slane %v892, 4
        %v898 = vshrl.u32 %v841, 16
        %v900 = vrot.slane %v898, 7
        %v901 = vshll.u32 %v841, 16
        %v903 = vor.u32 %v900, %v901
        %v904 = vsel %vm871, %v896, %v903
        %v905 = vrot.slane %v900, 4
        %v907 = vshrl.u32 %v842, 16
        %v909 = vrot.slane %v907, 7
        %v910 = vshll.u32 %v842, 16
        %v912 = vor.u32 %v909, %v910
        %v913 = vrot.slane %v909, 4
        %v915 = vshrl.u32 %v843, 16
        %v917 = vrot.slane %v915, 7
        %v918 = vshll.u32 %v843, 16
        %v920 = vor.u32 %v917, %v918
        %v921 = vsel %vm871, %v913, %v920
        %v922 = vrot.slane %v917, 4
        %v924 = vshrl.u32 %v844, 16
        %v926 = vrot.slane %v924, 7
        %v927 = vshll.u32 %v844, 16
        %v929 = vor.u32 %v926, %v927
        %v930 = vrot.slane %v926, 4
        %v932 = vshrl.u32 %v845, 16
        %v934 = vrot.slane %v932, 7
        %v935 = vshll.u32 %v845, 16
        %v937 = vor.u32 %v934, %v935
        %v938 = vsel %vm871, %v930, %v937
        %v939 = vrot.slane %v934, 4
        %v941 = vshrl.u32 %v846, 16
        %v943 = vrot.slane %v941, 7
        %v944 = vshll.u32 %v846, 16
        %v946 = vor.u32 %v943, %v944
        %v947 = vrot.slane %v943, 4
        %v949 = vshrl.u32 %v847, 16
        %v951 = vrot.slane %v949, 7
        %v952 = vshll.u32 %v847, 16
        %v954 = vor.u32 %v951, %v952
        %v955 = vsel %vm871, %v947, %v954
        %v956 = vrot.slane %v951, 4
        %v958 = vshrl.u32 %v848, 16
        %v960 = vrot.slane %v958, 7
        %v961 = vshll.u32 %v848, 16
        %v963 = vor.u32 %v960, %v961
        %v964 = vrot.slane %v960, 4
        %v966 = vshrl.u32 %v849, 16
        %v968 = vrot.slane %v966, 7
        %v969 = vshll.u32 %v849, 16
        %v971 = vor.u32 %v968, %v969
        %v972 = vsel %vm871, %v964, %v971
        %v973 = vrot.slane %v968, 4
        %v975 = vshrl.u32 %v850, 16
        %v977 = vrot.slane %v975, 7
        %v978 = vshll.u32 %v850, 16
        %v980 = vor.u32 %v977, %v978
        %v981 = vrot.slane %v977, 4
        %v983 = vshrl.u32 %v851, 16
        %v985 = vrot.slane %v983, 7
        %v986 = vshll.u32 %v851, 16
        %v988 = vor.u32 %v985, %v986
        %v989 = vsel %vm871, %v981, %v988
        %v990 = vrot.slane %v985, 4
        %v992 = vshrl.u32 %v852, 16
        %v994 = vrot.slane %v992, 7
        %v995 = vshll.u32 %v852, 16
        %v997 = vor.u32 %v994, %v995
        %v998 = vrot.slane %v994, 4
        %v1000 = vshrl.u32 %v853, 16
        %v1002 = vrot.slane %v1000, 7
        %v1003 = vshll.u32 %v853, 16
        %v1005 = vor.u32 %v1002, %v1003
        %v1006 = vsel %vm871, %v998, %v1005
        %v1007 = vrot.slane %v1002, 4
        %v1009 = vshrl.u32 %v854, 16
        %v1011 = vrot.slane %v1009, 7
        %v1012 = vshll.u32 %v854, 16
        %v1014 = vor.u32 %v1011, %v1012
        %v1015 = vrot.slane %v1011, 4
        %v1017 = vshrl.u32 %v855, 16
        %v1019 = vrot.slane %v1017, 7
        %v1020 = vshll.u32 %v855, 16
        %v1022 = vor.u32 %v1019, %v1020
        %v1023 = vsel %vm871, %v1015, %v1022
        %v1024 = vrot.slane %v1019, 4
        %v1026 = vshrl.u32 %v856, 16
        %v1028 = vrot.slane %v1026, 7
        %v1029 = vshll.u32 %v856, 16
        %v1031 = vor.u32 %v1028, %v1029
        %v1032 = vrot.slane %v1028, 4
        %v1034 = vshrl.u32 %v857, 16
        %v1036 = vrot.slane %v1034, 7
        %v1037 = vshll.u32 %v857, 16
        %v1039 = vor.u32 %v1036, %v1037
        %v1040 = vsel %vm871, %v1032, %v1039
        %v1041 = vrot.slane %v1036, 4
        %v1043 = vshrl.u32 %v858, 16
        %v1045 = vrot.slane %v1043, 7
        %v1046 = vshll.u32 %v858, 16
        %v1048 = vor.u32 %v1045, %v1046
        %v1049 = vrot.slane %v1045, 4
        %v1051 = vshrl.u32 %v859, 16
        %v1053 = vrot.slane %v1051, 7
        %v1054 = vshll.u32 %v859, 16
        %v1056 = vor.u32 %v1053, %v1054
        %v1057 = vsel %vm871, %v1049, %v1056
        %v1058 = vrot.slane %v1053, 4
        %v1060 = vshrl.u32 %v860, 16
        %v1062 = vrot.slane %v1060, 7
        %v1063 = vshll.u32 %v860, 16
        %v1065 = vor.u32 %v1062, %v1063
        %v1066 = vrot.slane %v1062, 4
        %v1068 = vshrl.u32 %v861, 16
        %v1070 = vrot.slane %v1068, 7
        %v1071 = vshll.u32 %v861, 16
        %v1073 = vor.u32 %v1070, %v1071
        %v1074 = vsel %vm871, %v1066, %v1073
        %v1075 = vrot.slane %v1070, 4
        %v1077 = vshrl.u32 %v862, 16
        %v1079 = vrot.slane %v1077, 7
        %v1080 = vshll.u32 %v862, 16
        %v1082 = vor.u32 %v1079, %v1080
        %v1083 = vrot.slane %v1079, 4
        %v1085 = vshrl.u32 %v863, 16
        %v1087 = vrot.slane %v1085, 7
        %v1088 = vshll.u32 %v863, 16
        %v1090 = vor.u32 %v1087, %v1088
        %v1091 = vsel %vm871, %v1083, %v1090
        %v1092 = vrot.slane %v1087, 4
        %v1094 = vshrl.u32 %v864, 16
        %v1096 = vrot.slane %v1094, 7
        %v1097 = vshll.u32 %v864, 16
        %v1099 = vor.u32 %v1096, %v1097
        %v1100 = vrot.slane %v1096, 4
        %v1102 = vshrl.u32 %v865, 16
        %v1104 = vrot.slane %v1102, 7
        %v1105 = vshll.u32 %v865, 16
        %v1107 = vor.u32 %v1104, %v1105
        %v1108 = vsel %vm871, %v1100, %v1107
        %v1109 = vrot.slane %v1104, 4
        %v1111 = vshrl.u32 %v866, 16
        %v1113 = vrot.slane %v1111, 7
        %v1114 = vshll.u32 %v866, 16
        %v1116 = vor.u32 %v1113, %v1114
        %v1117 = vrot.slane %v1113, 4
        %v1119 = vshrl.u32 %v867, 16
        %v1121 = vrot.slane %v1119, 7
        %v1122 = vshll.u32 %v867, 16
        %v1124 = vor.u32 %v1121, %v1122
        %v1125 = vsel %vm871, %v1117, %v1124
        %v1126 = vrot.slane %v1121, 4
        %v1128 = vshrl.u32 %v868, 16
        %v1130 = vrot.slane %v1128, 7
        %v1131 = vshll.u32 %v868, 16
        %v1133 = vor.u32 %v1130, %v1131
        %v1134 = vrot.slane %v1130, 4
        %v1136 = vshrl.u32 %v869, 16
        %v1138 = vrot.slane %v1136, 7
        %v1139 = vshll.u32 %v869, 16
        %v1141 = vor.u32 %v1138, %v1139
        %v1142 = vsel %vm871, %v1134, %v1141
        %v1143 = vrot.slane %v1138, 4
        %s1192 = scalar_lea.vmem [#allocation2], 12
        %vm1193 = vcmask 1043456
        %vm1194 = vmand %vm1193, %vm406
        %v1195 = vld [vmem:[%s1192] sm:$0xf]
        %v1196 = vsel %vm1194, %v878, %v1195
        %1197 = vst [vmem:[%s1192] sm:$0xf] %v1196
        %1198 = vst [vmem:[%s1192 + $0x4] sm:$0xf] %v887
        %v1199 = vld [vmem:[%s1192 + $0x8] sm:$0x1]
        %v1200 = vsel %vm351, %v888, %v1199
        %1201 = vst [vmem:[%s1192 + $0x8] sm:$0x1] %v1200
        %v1202 = vld [vmem:[%s1192 + $0xc] sm:$0xf]
        %v1203 = vsel %vm1194, %v895, %v1202
        %1204 = vst [vmem:[%s1192 + $0xc] sm:$0xf] %v1203
        %1205 = vst [vmem:[%s1192 + $0x10] sm:$0xf] %v904
        %v1206 = vld [vmem:[%s1192 + $0x14] sm:$0x1]
        %v1207 = vsel %vm351, %v905, %v1206
        %1208 = vst [vmem:[%s1192 + $0x14] sm:$0x1] %v1207
        %v1209 = vld [vmem:[%s1192 + $0x18] sm:$0xf]
        %v1210 = vsel %vm1194, %v912, %v1209
        %1211 = vst [vmem:[%s1192 + $0x18] sm:$0xf] %v1210
        %1212 = vst [vmem:[%s1192 + $0x1c] sm:$0xf] %v921
        %v1213 = vld [vmem:[%s1192 + $0x20] sm:$0x1]
        %v1214 = vsel %vm351, %v922, %v1213
        %1215 = vst [vmem:[%s1192 + $0x20] sm:$0x1] %v1214
        %v1216 = vld [vmem:[%s1192 + $0x24] sm:$0xf]
        %v1217 = vsel %vm1194, %v929, %v1216
        %1218 = vst [vmem:[%s1192 + $0x24] sm:$0xf] %v1217
        %1219 = vst [vmem:[%s1192 + $0x28] sm:$0xf] %v938
        %v1220 = vld [vmem:[%s1192 + $0x2c] sm:$0x1]
        %v1221 = vsel %vm351, %v939, %v1220
        %1222 = vst [vmem:[%s1192 + $0x2c] sm:$0x1] %v1221
        %v1223 = vld [vmem:[%s1192 + $0x30] sm:$0xf]
        %v1224 = vsel %vm1194, %v946, %v1223
        %1225 = vst [vmem:[%s1192 + $0x30] sm:$0xf] %v1224
        %1226 = vst [vmem:[%s1192 + $0x34] sm:$0xf] %v955
        %v1227 = vld [vmem:[%s1192 + $0x38] sm:$0x1]
        %v1228 = vsel %vm351, %v956, %v1227
        %1229 = vst [vmem:[%s1192 + $0x38] sm:$0x1] %v1228
        %v1230 = vld [vmem:[%s1192 + $0x3c] sm:$0xf]
        %v1231 = vsel %vm1194, %v963, %v1230
        %1232 = vst [vmem:[%s1192 + $0x3c] sm:$0xf] %v1231
        %1233 = vst [vmem:[%s1192 + $0x40] sm:$0xf] %v972
        %v1234 = vld [vmem:[%s1192 + $0x44] sm:$0x1]
        %v1235 = vsel %vm351, %v973, %v1234
        %1236 = vst [vmem:[%s1192 + $0x44] sm:$0x1] %v1235
        %v1237 = vld [vmem:[%s1192 + $0x48] sm:$0xf]
        %v1238 = vsel %vm1194, %v980, %v1237
        %1239 = vst [vmem:[%s1192 + $0x48] sm:$0xf] %v1238
        %1240 = vst [vmem:[%s1192 + $0x4c] sm:$0xf] %v989
        %v1241 = vld [vmem:[%s1192 + $0x50] sm:$0x1]
        %v1242 = vsel %vm351, %v990, %v1241
        %1243 = vst [vmem:[%s1192 + $0x50] sm:$0x1] %v1242
        %v1244 = vld [vmem:[%s1192 + $0x54] sm:$0xf]
        %v1245 = vsel %vm1194, %v997, %v1244
        %1246 = vst [vmem:[%s1192 + $0x54] sm:$0xf] %v1245
        %1247 = vst [vmem:[%s1192 + $0x58] sm:$0xf] %v1006
        %v1248 = vld [vmem:[%s1192 + $0x5c] sm:$0x1]
        %v1249 = vsel %vm351, %v1007, %v1248
        %1250 = vst [vmem:[%s1192 + $0x5c] sm:$0x1] %v1249
        %v1251 = vld [vmem:[%s1192 + $0x60] sm:$0xf]
        %v1252 = vsel %vm1194, %v1014, %v1251
        %1253 = vst [vmem:[%s1192 + $0x60] sm:$0xf] %v1252
        %1254 = vst [vmem:[%s1192 + $0x64] sm:$0xf] %v1023
        %v1255 = vld [vmem:[%s1192 + $0x68] sm:$0x1]
        %v1256 = vsel %vm351, %v1024, %v1255
        %1257 = vst [vmem:[%s1192 + $0x68] sm:$0x1] %v1256
        %v1258 = vld [vmem:[%s1192 + $0x6c] sm:$0xf]
        %v1259 = vsel %vm1194, %v1031, %v1258
        %1260 = vst [vmem:[%s1192 + $0x6c] sm:$0xf] %v1259
        %1261 = vst [vmem:[%s1192 + $0x70] sm:$0xf] %v1040
        %v1262 = vld [vmem:[%s1192 + $0x74] sm:$0x1]
        %v1263 = vsel %vm351, %v1041, %v1262
        %1264 = vst [vmem:[%s1192 + $0x74] sm:$0x1] %v1263
        %v1265 = vld [vmem:[%s1192 + $0x78] sm:$0xf]
        %v1266 = vsel %vm1194, %v1048, %v1265
        %1267 = vst [vmem:[%s1192 + $0x78] sm:$0xf] %v1266
        %1268 = vst [vmem:[%s1192 + $0x7c] sm:$0xf] %v1057
        %v1269 = vld [vmem:[%s1192 + $0x80] sm:$0x1]
        %v1270 = vsel %vm351, %v1058, %v1269
        %1271 = vst [vmem:[%s1192 + $0x80] sm:$0x1] %v1270
        %v1272 = vld [vmem:[%s1192 + $0x84] sm:$0xf]
        %v1273 = vsel %vm1194, %v1065, %v1272
        %1274 = vst [vmem:[%s1192 + $0x84] sm:$0xf] %v1273
        %1275 = vst [vmem:[%s1192 + $0x88] sm:$0xf] %v1074
        %v1276 = vld [vmem:[%s1192 + $0x8c] sm:$0x1]
        %v1277 = vsel %vm351, %v1075, %v1276
        %1278 = vst [vmem:[%s1192 + $0x8c] sm:$0x1] %v1277
        %v1279 = vld [vmem:[%s1192 + $0x90] sm:$0xf]
        %v1280 = vsel %vm1194, %v1082, %v1279
        %1281 = vst [vmem:[%s1192 + $0x90] sm:$0xf] %v1280
        %1282 = vst [vmem:[%s1192 + $0x94] sm:$0xf] %v1091
        %v1283 = vld [vmem:[%s1192 + $0x98] sm:$0x1]
        %v1284 = vsel %vm351, %v1092, %v1283
        %1285 = vst [vmem:[%s1192 + $0x98] sm:$0x1] %v1284
        %v1286 = vld [vmem:[%s1192 + $0x9c] sm:$0xf]
        %v1287 = vsel %vm1194, %v1099, %v1286
        %1288 = vst [vmem:[%s1192 + $0x9c] sm:$0xf] %v1287
        %1289 = vst [vmem:[%s1192 + $0xa0] sm:$0xf] %v1108
        %v1290 = vld [vmem:[%s1192 + $0xa4] sm:$0x1]
        %v1291 = vsel %vm351, %v1109, %v1290
        %1292 = vst [vmem:[%s1192 + $0xa4] sm:$0x1] %v1291
        %v1293 = vld [vmem:[%s1192 + $0xa8] sm:$0xf]
        %v1294 = vsel %vm1194, %v1116, %v1293
        %1295 = vst [vmem:[%s1192 + $0xa8] sm:$0xf] %v1294
        %1296 = vst [vmem:[%s1192 + $0xac] sm:$0xf] %v1125
        %v1297 = vld [vmem:[%s1192 + $0xb0] sm:$0x1]
        %v1298 = vsel %vm351, %v1126, %v1297
        %1299 = vst [vmem:[%s1192 + $0xb0] sm:$0x1] %v1298
        %v1300 = vld [vmem:[%s1192 + $0xb4] sm:$0xf]
        %v1301 = vsel %vm1194, %v1133, %v1300
        %1302 = vst [vmem:[%s1192 + $0xb4] sm:$0xf] %v1301
        %1303 = vst [vmem:[%s1192 + $0xb8] sm:$0xf] %v1142
        %v1304 = vld [vmem:[%s1192 + $0xbc] sm:$0x1]
        %v1305 = vsel %vm351, %v1143, %v1304
        %1306 = vst [vmem:[%s1192 + $0xbc] sm:$0x1] %v1305
        %v1307 = vld [vmem:[#allocation2] sm:$0xf]
        %v1308 = vld [vmem:[#allocation2 + $0x4] sm:$0xf]
        %v1309 = vld [vmem:[#allocation2 + $0xc] sm:$0xf]
        %v1310 = vld [vmem:[#allocation2 + $0x10] sm:$0xf]
        %v1311 = vld [vmem:[#allocation2 + $0x18] sm:$0xf]
        %v1312 = vld [vmem:[#allocation2 + $0x1c] sm:$0xf]
        %v1313 = vld [vmem:[#allocation2 + $0x24] sm:$0xf]
        %v1314 = vld [vmem:[#allocation2 + $0x28] sm:$0xf]
        %v1315 = vld [vmem:[#allocation2 + $0x30] sm:$0xf]
        %v1316 = vld [vmem:[#allocation2 + $0x34] sm:$0xf]
        %v1317 = vld [vmem:[#allocation2 + $0x3c] sm:$0xf]
        %v1318 = vld [vmem:[#allocation2 + $0x40] sm:$0xf]
        %v1319 = vld [vmem:[#allocation2 + $0x48] sm:$0xf]
        %v1320 = vld [vmem:[#allocation2 + $0x4c] sm:$0xf]
        %v1321 = vld [vmem:[#allocation2 + $0x54] sm:$0xf]
        %v1322 = vld [vmem:[#allocation2 + $0x58] sm:$0xf]
        %v1323 = vld [vmem:[#allocation2 + $0x60] sm:$0xf]
        %v1324 = vld [vmem:[#allocation2 + $0x64] sm:$0xf]
        %v1325 = vld [vmem:[#allocation2 + $0x6c] sm:$0xf]
        %v1326 = vld [vmem:[#allocation2 + $0x70] sm:$0xf]
        %v1327 = vld [vmem:[#allocation2 + $0x78] sm:$0xf]
        %v1328 = vld [vmem:[#allocation2 + $0x7c] sm:$0xf]
        %v1329 = vld [vmem:[#allocation2 + $0x84] sm:$0xf]
        %v1330 = vld [vmem:[#allocation2 + $0x88] sm:$0xf]
        %v1331 = vld [vmem:[#allocation2 + $0x90] sm:$0xf]
        %v1332 = vld [vmem:[#allocation2 + $0x94] sm:$0xf]
        %v1333 = vld [vmem:[#allocation2 + $0x9c] sm:$0xf]
        %v1334 = vld [vmem:[#allocation2 + $0xa0] sm:$0xf]
        %v1335 = vld [vmem:[#allocation2 + $0xa8] sm:$0xf]
        %v1336 = vld [vmem:[#allocation2 + $0xac] sm:$0xf]
        %v1337 = vld [vmem:[#allocation2 + $0xb4] sm:$0xf]
        %v1338 = vld [vmem:[#allocation2 + $0xb8] sm:$0xf]
        %v1371 = vunpack.c.l.b16 %v1307
        %v1372 = vunpack.c.l.b16 %v1308
        %v1373 = vunpack.c.l.b16 %v1309
        %v1374 = vunpack.c.l.b16 %v1310
        %v1375 = vunpack.c.l.b16 %v1311
        %v1376 = vunpack.c.l.b16 %v1312
        %v1377 = vunpack.c.l.b16 %v1313
        %v1378 = vunpack.c.l.b16 %v1314
        %v1379 = vunpack.c.l.b16 %v1315
        %v1380 = vunpack.c.l.b16 %v1316
        %v1381 = vunpack.c.l.b16 %v1317
        %v1382 = vunpack.c.l.b16 %v1318
        %v1383 = vunpack.c.l.b16 %v1319
        %v1384 = vunpack.c.l.b16 %v1320
        %v1385 = vunpack.c.l.b16 %v1321
        %v1386 = vunpack.c.l.b16 %v1322
        %v1387 = vunpack.c.l.b16 %v1323
        %v1388 = vunpack.c.l.b16 %v1324
        %v1389 = vunpack.c.l.b16 %v1325
        %v1390 = vunpack.c.l.b16 %v1326
        %v1391 = vunpack.c.l.b16 %v1327
        %v1392 = vunpack.c.l.b16 %v1328
        %v1393 = vunpack.c.l.b16 %v1329
        %v1394 = vunpack.c.l.b16 %v1330
        %v1395 = vunpack.c.l.b16 %v1331
        %v1396 = vunpack.c.l.b16 %v1332
        %v1397 = vunpack.c.l.b16 %v1333
        %v1398 = vunpack.c.l.b16 %v1334
        %v1399 = vunpack.c.l.b16 %v1335
        %v1400 = vunpack.c.l.b16 %v1336
        %v1401 = vunpack.c.l.b16 %v1337
        %v1402 = vunpack.c.l.b16 %v1338
        %v1403 = vpack.c.b16 %v1372, %v1371
        %v1404 = vpack.c.b16 %v1374, %v1373
        %v1405 = vpack.c.b16 %v1376, %v1375
        %v1406 = vpack.c.b16 %v1378, %v1377
        %v1407 = vpack.c.b16 %v1380, %v1379
        %v1408 = vpack.c.b16 %v1382, %v1381
        %v1409 = vpack.c.b16 %v1384, %v1383
        %v1410 = vpack.c.b16 %v1386, %v1385
        %v1411 = vpack.c.b16 %v1388, %v1387
        %v1412 = vpack.c.b16 %v1390, %v1389
        %v1413 = vpack.c.b16 %v1392, %v1391
        %v1414 = vpack.c.b16 %v1394, %v1393
        %v1415 = vpack.c.b16 %v1396, %v1395
        %v1416 = vpack.c.b16 %v1398, %v1397
        %v1417 = vpack.c.b16 %v1400, %v1399
        %v1418 = vpack.c.b16 %v1402, %v1401
        %1435 = vst [vmem:[#allocation3] sm:$0xff] %v1403
        %1436 = vst [vmem:[#allocation3 + $0x48] sm:$0xff] %v1404
        %1437 = vst [vmem:[#allocation3 + $0x90] sm:$0xff] %v1405
        %1438 = vst [vmem:[#allocation3 + $0xd8] sm:$0xff] %v1406
        %1439 = vst [vmem:[#allocation3 + $0x120] sm:$0xff] %v1407
        %1440 = vst [vmem:[#allocation3 + $0x168] sm:$0xff] %v1408
        %1441 = vst [vmem:[#allocation3 + $0x1b0] sm:$0xff] %v1409
        %1442 = vst [vmem:[#allocation3 + $0x1f8] sm:$0xff] %v1410
        %1443 = vst [vmem:[#allocation3 + $0x240] sm:$0xff] %v1411
        %1444 = vst [vmem:[#allocation3 + $0x288] sm:$0xff] %v1412
        %1445 = vst [vmem:[#allocation3 + $0x2d0] sm:$0xff] %v1413
        %1446 = vst [vmem:[#allocation3 + $0x318] sm:$0xff] %v1414
        %1447 = vst [vmem:[#allocation3 + $0x360] sm:$0xff] %v1415
        %1448 = vst [vmem:[#allocation3 + $0x3a8] sm:$0xff] %v1416
        %1449 = vst [vmem:[#allocation3 + $0x3f0] sm:$0xff] %v1417
        %1450 = vst [vmem:[#allocation3 + $0x438] sm:$0xff] %v1418
        %v1451 = vld [vmem:[#allocation2] sm:$0xf]
        %v1452 = vld [vmem:[#allocation2 + $0x4] sm:$0xf]
        %v1453 = vld [vmem:[#allocation2 + $0x8] sm:$0x1]
        %v1454 = vld [vmem:[#allocation2 + $0xc] sm:$0xf]
        %v1455 = vld [vmem:[#allocation2 + $0x10] sm:$0xf]
        %v1456 = vld [vmem:[#allocation2 + $0x14] sm:$0x1]
        %v1457 = vld [vmem:[#allocation2 + $0x18] sm:$0xf]
        %v1458 = vld [vmem:[#allocation2 + $0x1c] sm:$0xf]
        %v1459 = vld [vmem:[#allocation2 + $0x20] sm:$0x1]
        %v1460 = vld [vmem:[#allocation2 + $0x24] sm:$0xf]
        %v1461 = vld [vmem:[#allocation2 + $0x28] sm:$0xf]
        %v1462 = vld [vmem:[#allocation2 + $0x2c] sm:$0x1]
        %v1463 = vld [vmem:[#allocation2 + $0x30] sm:$0xf]
        %v1464 = vld [vmem:[#allocation2 + $0x34] sm:$0xf]
        %v1465 = vld [vmem:[#allocation2 + $0x38] sm:$0x1]
        %v1466 = vld [vmem:[#allocation2 + $0x3c] sm:$0xf]
        %v1467 = vld [vmem:[#allocation2 + $0x40] sm:$0xf]
        %v1468 = vld [vmem:[#allocation2 + $0x44] sm:$0x1]
        %v1469 = vld [vmem:[#allocation2 + $0x48] sm:$0xf]
        %v1470 = vld [vmem:[#allocation2 + $0x4c] sm:$0xf]
        %v1471 = vld [vmem:[#allocation2 + $0x50] sm:$0x1]
        %v1472 = vld [vmem:[#allocation2 + $0x54] sm:$0xf]
        %v1473 = vld [vmem:[#allocation2 + $0x58] sm:$0xf]
        %v1474 = vld [vmem:[#allocation2 + $0x5c] sm:$0x1]
        %v1475 = vld [vmem:[#allocation2 + $0x60] sm:$0xf]
        %v1476 = vld [vmem:[#allocation2 + $0x64] sm:$0xf]
        %v1477 = vld [vmem:[#allocation2 + $0x68] sm:$0x1]
        %v1478 = vld [vmem:[#allocation2 + $0x6c] sm:$0xf]
        %v1479 = vld [vmem:[#allocation2 + $0x70] sm:$0xf]
        %v1480 = vld [vmem:[#allocation2 + $0x74] sm:$0x1]
        %v1481 = vld [vmem:[#allocation2 + $0x78] sm:$0xf]
        %v1482 = vld [vmem:[#allocation2 + $0x7c] sm:$0xf]
        %v1483 = vld [vmem:[#allocation2 + $0x80] sm:$0x1]
        %v1484 = vld [vmem:[#allocation2 + $0x84] sm:$0xf]
        %v1485 = vld [vmem:[#allocation2 + $0x88] sm:$0xf]
        %v1486 = vld [vmem:[#allocation2 + $0x8c] sm:$0x1]
        %v1487 = vld [vmem:[#allocation2 + $0x90] sm:$0xf]
        %v1488 = vld [vmem:[#allocation2 + $0x94] sm:$0xf]
        %v1489 = vld [vmem:[#allocation2 + $0x98] sm:$0x1]
        %v1490 = vld [vmem:[#allocation2 + $0x9c] sm:$0xf]
        %v1491 = vld [vmem:[#allocation2 + $0xa0] sm:$0xf]
        %v1492 = vld [vmem:[#allocation2 + $0xa4] sm:$0x1]
        %v1493 = vld [vmem:[#allocation2 + $0xa8] sm:$0xf]
        %v1494 = vld [vmem:[#allocation2 + $0xac] sm:$0xf]
        %v1495 = vld [vmem:[#allocation2 + $0xb0] sm:$0x1]
        %v1496 = vld [vmem:[#allocation2 + $0xb4] sm:$0xf]
        %v1497 = vld [vmem:[#allocation2 + $0xb8] sm:$0xf]
        %v1498 = vld [vmem:[#allocation2 + $0xbc] sm:$0x1]
        %vm1499 = vsmask.f32 3328
        %vm1500 = vsmask.f32 7440
        %vm1501 = vmor %vm1499, %vm1500
        %v1503 = vshrl.u32 %v1451, 16
        %v1505 = vrot.slane %v1503, 4
        %v1506 = vshll.u32 %v1451, 16
        %v1508 = vrot.slane %v1506, 5
        %v1509 = vor.u32 %v1505, %v1508
        %v1510 = vrot.slane %v1509, 4
        %v1512 = vshll.u32 %v1452, 16
        %v1514 = vrot.slane %v1512, 5
        %v1515 = vsel %vm1501, %v1510, %v1514
        %v1516 = vshrl.u32 %v1452, 16
        %v1518 = vrot.slane %v1516, 4
        %v1519 = vor.u32 %v1518, %v1514
        %v1520 = vrot.slane %v1519, 4
        %v1522 = vshll.u32 %v1453, 16
        %v1524 = vrot.slane %v1522, 5
        %v1525 = vsel %vm1501, %v1520, %v1524
        %v1527 = vshrl.u32 %v1454, 16
        %v1529 = vrot.slane %v1527, 4
        %v1530 = vshll.u32 %v1454, 16
        %v1532 = vrot.slane %v1530, 5
        %v1533 = vor.u32 %v1529, %v1532
        %v1534 = vrot.slane %v1533, 4
        %v1536 = vshll.u32 %v1455, 16
        %v1538 = vrot.slane %v1536, 5
        %v1539 = vsel %vm1501, %v1534, %v1538
        %v1540 = vshrl.u32 %v1455, 16
        %v1542 = vrot.slane %v1540, 4
        %v1543 = vor.u32 %v1542, %v1538
        %v1544 = vrot.slane %v1543, 4
        %v1546 = vshll.u32 %v1456, 16
        %v1548 = vrot.slane %v1546, 5
        %v1549 = vsel %vm1501, %v1544, %v1548
        %v1551 = vshrl.u32 %v1457, 16
        %v1553 = vrot.slane %v1551, 4
        %v1554 = vshll.u32 %v1457, 16
        %v1556 = vrot.slane %v1554, 5
        %v1557 = vor.u32 %v1553, %v1556
        %v1558 = vrot.slane %v1557, 4
        %v1560 = vshll.u32 %v1458, 16
        %v1562 = vrot.slane %v1560, 5
        %v1563 = vsel %vm1501, %v1558, %v1562
        %v1564 = vshrl.u32 %v1458, 16
        %v1566 = vrot.slane %v1564, 4
        %v1567 = vor.u32 %v1566, %v1562
        %v1568 = vrot.slane %v1567, 4
        %v1570 = vshll.u32 %v1459, 16
        %v1572 = vrot.slane %v1570, 5
        %v1573 = vsel %vm1501, %v1568, %v1572
        %v1575 = vshrl.u32 %v1460, 16
        %v1577 = vrot.slane %v1575, 4
        %v1578 = vshll.u32 %v1460, 16
        %v1580 = vrot.slane %v1578, 5
        %v1581 = vor.u32 %v1577, %v1580
        %v1582 = vrot.slane %v1581, 4
        %v1584 = vshll.u32 %v1461, 16
        %v1586 = vrot.slane %v1584, 5
        %v1587 = vsel %vm1501, %v1582, %v1586
        %v1588 = vshrl.u32 %v1461, 16
        %v1590 = vrot.slane %v1588, 4
        %v1591 = vor.u32 %v1590, %v1586
        %v1592 = vrot.slane %v1591, 4
        %v1594 = vshll.u32 %v1462, 16
        %v1596 = vrot.slane %v1594, 5
        %v1597 = vsel %vm1501, %v1592, %v1596
        %v1599 = vshrl.u32 %v1463, 16
        %v1601 = vrot.slane %v1599, 4
        %v1602 = vshll.u32 %v1463, 16
        %v1604 = vrot.slane %v1602, 5
        %v1605 = vor.u32 %v1601, %v1604
        %v1606 = vrot.slane %v1605, 4
        %v1608 = vshll.u32 %v1464, 16
        %v1610 = vrot.slane %v1608, 5
        %v1611 = vsel %vm1501, %v1606, %v1610
        %v1612 = vshrl.u32 %v1464, 16
        %v1614 = vrot.slane %v1612, 4
        %v1615 = vor.u32 %v1614, %v1610
        %v1616 = vrot.slane %v1615, 4
        %v1618 = vshll.u32 %v1465, 16
        %v1620 = vrot.slane %v1618, 5
        %v1621 = vsel %vm1501, %v1616, %v1620
        %v1623 = vshrl.u32 %v1466, 16
        %v1625 = vrot.slane %v1623, 4
        %v1626 = vshll.u32 %v1466, 16
        %v1628 = vrot.slane %v1626, 5
        %v1629 = vor.u32 %v1625, %v1628
        %v1630 = vrot.slane %v1629, 4
        %v1632 = vshll.u32 %v1467, 16
        %v1634 = vrot.slane %v1632, 5
        %v1635 = vsel %vm1501, %v1630, %v1634
        %v1636 = vshrl.u32 %v1467, 16
        %v1638 = vrot.slane %v1636, 4
        %v1639 = vor.u32 %v1638, %v1634
        %v1640 = vrot.slane %v1639, 4
        %v1642 = vshll.u32 %v1468, 16
        %v1644 = vrot.slane %v1642, 5
        %v1645 = vsel %vm1501, %v1640, %v1644
        %v1647 = vshrl.u32 %v1469, 16
        %v1649 = vrot.slane %v1647, 4
        %v1650 = vshll.u32 %v1469, 16
        %v1652 = vrot.slane %v1650, 5
        %v1653 = vor.u32 %v1649, %v1652
        %v1654 = vrot.slane %v1653, 4
        %v1656 = vshll.u32 %v1470, 16
        %v1658 = vrot.slane %v1656, 5
        %v1659 = vsel %vm1501, %v1654, %v1658
        %v1660 = vshrl.u32 %v1470, 16
        %v1662 = vrot.slane %v1660, 4
        %v1663 = vor.u32 %v1662, %v1658
        %v1664 = vrot.slane %v1663, 4
        %v1666 = vshll.u32 %v1471, 16
        %v1668 = vrot.slane %v1666, 5
        %v1669 = vsel %vm1501, %v1664, %v1668
        %v1671 = vshrl.u32 %v1472, 16
        %v1673 = vrot.slane %v1671, 4
        %v1674 = vshll.u32 %v1472, 16
        %v1676 = vrot.slane %v1674, 5
        %v1677 = vor.u32 %v1673, %v1676
        %v1678 = vrot.slane %v1677, 4
        %v1680 = vshll.u32 %v1473, 16
        %v1682 = vrot.slane %v1680, 5
        %v1683 = vsel %vm1501, %v1678, %v1682
        %v1684 = vshrl.u32 %v1473, 16
        %v1686 = vrot.slane %v1684, 4
        %v1687 = vor.u32 %v1686, %v1682
        %v1688 = vrot.slane %v1687, 4
        %v1690 = vshll.u32 %v1474, 16
        %v1692 = vrot.slane %v1690, 5
        %v1693 = vsel %vm1501, %v1688, %v1692
        %v1695 = vshrl.u32 %v1475, 16
        %v1697 = vrot.slane %v1695, 4
        %v1698 = vshll.u32 %v1475, 16
        %v1700 = vrot.slane %v1698, 5
        %v1701 = vor.u32 %v1697, %v1700
        %v1702 = vrot.slane %v1701, 4
        %v1704 = vshll.u32 %v1476, 16
        %v1706 = vrot.slane %v1704, 5
        %v1707 = vsel %vm1501, %v1702, %v1706
        %v1708 = vshrl.u32 %v1476, 16
        %v1710 = vrot.slane %v1708, 4
        %v1711 = vor.u32 %v1710, %v1706
        %v1712 = vrot.slane %v1711, 4
        %v1714 = vshll.u32 %v1477, 16
        %v1716 = vrot.slane %v1714, 5
        %v1717 = vsel %vm1501, %v1712, %v1716
        %v1719 = vshrl.u32 %v1478, 16
        %v1721 = vrot.slane %v1719, 4
        %v1722 = vshll.u32 %v1478, 16
        %v1724 = vrot.slane %v1722, 5
        %v1725 = vor.u32 %v1721, %v1724
        %v1726 = vrot.slane %v1725, 4
        %v1728 = vshll.u32 %v1479, 16
        %v1730 = vrot.slane %v1728, 5
        %v1731 = vsel %vm1501, %v1726, %v1730
        %v1732 = vshrl.u32 %v1479, 16
        %v1734 = vrot.slane %v1732, 4
        %v1735 = vor.u32 %v1734, %v1730
        %v1736 = vrot.slane %v1735, 4
        %v1738 = vshll.u32 %v1480, 16
        %v1740 = vrot.slane %v1738, 5
        %v1741 = vsel %vm1501, %v1736, %v1740
        %v1743 = vshrl.u32 %v1481, 16
        %v1745 = vrot.slane %v1743, 4
        %v1746 = vshll.u32 %v1481, 16
        %v1748 = vrot.slane %v1746, 5
        %v1749 = vor.u32 %v1745, %v1748
        %v1750 = vrot.slane %v1749, 4
        %v1752 = vshll.u32 %v1482, 16
        %v1754 = vrot.slane %v1752, 5
        %v1755 = vsel %vm1501, %v1750, %v1754
        %v1756 = vshrl.u32 %v1482, 16
        %v1758 = vrot.slane %v1756, 4
        %v1759 = vor.u32 %v1758, %v1754
        %v1760 = vrot.slane %v1759, 4
        %v1762 = vshll.u32 %v1483, 16
        %v1764 = vrot.slane %v1762, 5
        %v1765 = vsel %vm1501, %v1760, %v1764
        %v1767 = vshrl.u32 %v1484, 16
        %v1769 = vrot.slane %v1767, 4
        %v1770 = vshll.u32 %v1484, 16
        %v1772 = vrot.slane %v1770, 5
        %v1773 = vor.u32 %v1769, %v1772
        %v1774 = vrot.slane %v1773, 4
        %v1776 = vshll.u32 %v1485, 16
        %v1778 = vrot.slane %v1776, 5
        %v1779 = vsel %vm1501, %v1774, %v1778
        %v1780 = vshrl.u32 %v1485, 16
        %v1782 = vrot.slane %v1780, 4
        %v1783 = vor.u32 %v1782, %v1778
        %v1784 = vrot.slane %v1783, 4
        %v1786 = vshll.u32 %v1486, 16
        %v1788 = vrot.slane %v1786, 5
        %v1789 = vsel %vm1501, %v1784, %v1788
        %v1791 = vshrl.u32 %v1487, 16
        %v1793 = vrot.slane %v1791, 4
        %v1794 = vshll.u32 %v1487, 16
        %v1796 = vrot.slane %v1794, 5
        %v1797 = vor.u32 %v1793, %v1796
        %v1798 = vrot.slane %v1797, 4
        %v1800 = vshll.u32 %v1488, 16
        %v1802 = vrot.slane %v1800, 5
        %v1803 = vsel %vm1501, %v1798, %v1802
        %v1804 = vshrl.u32 %v1488, 16
        %v1806 = vrot.slane %v1804, 4
        %v1807 = vor.u32 %v1806, %v1802
        %v1808 = vrot.slane %v1807, 4
        %v1810 = vshll.u32 %v1489, 16
        %v1812 = vrot.slane %v1810, 5
        %v1813 = vsel %vm1501, %v1808, %v1812
        %v1815 = vshrl.u32 %v1490, 16
        %v1817 = vrot.slane %v1815, 4
        %v1818 = vshll.u32 %v1490, 16
        %v1820 = vrot.slane %v1818, 5
        %v1821 = vor.u32 %v1817, %v1820
        %v1822 = vrot.slane %v1821, 4
        %v1824 = vshll.u32 %v1491, 16
        %v1826 = vrot.slane %v1824, 5
        %v1827 = vsel %vm1501, %v1822, %v1826
        %v1828 = vshrl.u32 %v1491, 16
        %v1830 = vrot.slane %v1828, 4
        %v1831 = vor.u32 %v1830, %v1826
        %v1832 = vrot.slane %v1831, 4
        %v1834 = vshll.u32 %v1492, 16
        %v1836 = vrot.slane %v1834, 5
        %v1837 = vsel %vm1501, %v1832, %v1836
        %v1839 = vshrl.u32 %v1493, 16
        %v1841 = vrot.slane %v1839, 4
        %v1842 = vshll.u32 %v1493, 16
        %v1844 = vrot.slane %v1842, 5
        %v1845 = vor.u32 %v1841, %v1844
        %v1846 = vrot.slane %v1845, 4
        %v1848 = vshll.u32 %v1494, 16
        %v1850 = vrot.slane %v1848, 5
        %v1851 = vsel %vm1501, %v1846, %v1850
        %v1852 = vshrl.u32 %v1494, 16
        %v1854 = vrot.slane %v1852, 4
        %v1855 = vor.u32 %v1854, %v1850
        %v1856 = vrot.slane %v1855, 4
        %v1858 = vshll.u32 %v1495, 16
        %v1860 = vrot.slane %v1858, 5
        %v1861 = vsel %vm1501, %v1856, %v1860
        %v1863 = vshrl.u32 %v1496, 16
        %v1865 = vrot.slane %v1863, 4
        %v1866 = vshll.u32 %v1496, 16
        %v1868 = vrot.slane %v1866, 5
        %v1869 = vor.u32 %v1865, %v1868
        %v1870 = vrot.slane %v1869, 4
        %v1872 = vshll.u32 %v1497, 16
        %v1874 = vrot.slane %v1872, 5
        %v1875 = vsel %vm1501, %v1870, %v1874
        %v1876 = vshrl.u32 %v1497, 16
        %v1878 = vrot.slane %v1876, 4
        %v1879 = vor.u32 %v1878, %v1874
        %v1880 = vrot.slane %v1879, 4
        %v1882 = vshll.u32 %v1498, 16
        %v1884 = vrot.slane %v1882, 5
        %v1885 = vsel %vm1501, %v1880, %v1884
        %v1886 = vunpack.c.l.b16 %v1515
        %v1887 = vunpack.c.l.b16 %v1525
        %v1888 = vunpack.c.l.b16 %v1539
        %v1889 = vunpack.c.l.b16 %v1549
        %v1890 = vunpack.c.l.b16 %v1563
        %v1891 = vunpack.c.l.b16 %v1573
        %v1892 = vunpack.c.l.b16 %v1587
        %v1893 = vunpack.c.l.b16 %v1597
        %v1894 = vunpack.c.l.b16 %v1611
        %v1895 = vunpack.c.l.b16 %v1621
        %v1896 = vunpack.c.l.b16 %v1635
        %v1897 = vunpack.c.l.b16 %v1645
        %v1898 = vunpack.c.l.b16 %v1659
        %v1899 = vunpack.c.l.b16 %v1669
        %v1900 = vunpack.c.l.b16 %v1683
        %v1901 = vunpack.c.l.b16 %v1693
        %v1902 = vunpack.c.l.b16 %v1707
        %v1903 = vunpack.c.l.b16 %v1717
        %v1904 = vunpack.c.l.b16 %v1731
        %v1905 = vunpack.c.l.b16 %v1741
        %v1906 = vunpack.c.l.b16 %v1755
        %v1907 = vunpack.c.l.b16 %v1765
        %v1908 = vunpack.c.l.b16 %v1779
        %v1909 = vunpack.c.l.b16 %v1789
        %v1910 = vunpack.c.l.b16 %v1803
        %v1911 = vunpack.c.l.b16 %v1813
        %v1912 = vunpack.c.l.b16 %v1827
        %v1913 = vunpack.c.l.b16 %v1837
        %v1914 = vunpack.c.l.b16 %v1851
        %v1915 = vunpack.c.l.b16 %v1861
        %v1916 = vunpack.c.l.b16 %v1875
        %v1917 = vunpack.c.l.b16 %v1885
        %v1918 = vpack.c.b16 %v1887, %v1886
        %v1919 = vpack.c.b16 %v1889, %v1888
        %v1920 = vpack.c.b16 %v1891, %v1890
        %v1921 = vpack.c.b16 %v1893, %v1892
        %v1922 = vpack.c.b16 %v1895, %v1894
        %v1923 = vpack.c.b16 %v1897, %v1896
        %v1924 = vpack.c.b16 %v1899, %v1898
        %v1925 = vpack.c.b16 %v1901, %v1900
        %v1926 = vpack.c.b16 %v1903, %v1902
        %v1927 = vpack.c.b16 %v1905, %v1904
        %v1928 = vpack.c.b16 %v1907, %v1906
        %v1929 = vpack.c.b16 %v1909, %v1908
        %v1930 = vpack.c.b16 %v1911, %v1910
        %v1931 = vpack.c.b16 %v1913, %v1912
        %v1932 = vpack.c.b16 %v1915, %v1914
        %v1933 = vpack.c.b16 %v1917, %v1916
        %1950 = vst [vmem:[#allocation3 + $0x8] sm:$0xff] %v1918
        %1951 = vst [vmem:[#allocation3 + $0x50] sm:$0xff] %v1919
        %1952 = vst [vmem:[#allocation3 + $0x98] sm:$0xff] %v1920
        %1953 = vst [vmem:[#allocation3 + $0xe0] sm:$0xff] %v1921
        %1954 = vst [vmem:[#allocation3 + $0x128] sm:$0xff] %v1922
        %1955 = vst [vmem:[#allocation3 + $0x170] sm:$0xff] %v1923
        %1956 = vst [vmem:[#allocation3 + $0x1b8] sm:$0xff] %v1924
        %1957 = vst [vmem:[#allocation3 + $0x200] sm:$0xff] %v1925
        %1958 = vst [vmem:[#allocation3 + $0x248] sm:$0xff] %v1926
        %1959 = vst [vmem:[#allocation3 + $0x290] sm:$0xff] %v1927
        %1960 = vst [vmem:[#allocation3 + $0x2d8] sm:$0xff] %v1928
        %1961 = vst [vmem:[#allocation3 + $0x320] sm:$0xff] %v1929
        %1962 = vst [vmem:[#allocation3 + $0x368] sm:$0xff] %v1930
        %1963 = vst [vmem:[#allocation3 + $0x3b0] sm:$0xff] %v1931
        %1964 = vst [vmem:[#allocation3 + $0x3f8] sm:$0xff] %v1932
        %1965 = vst [vmem:[#allocation3 + $0x440] sm:$0xff] %v1933
        %v1966 = vld [vmem:[#allocation2] sm:$0xe]
        %v1967 = vld [vmem:[#allocation2 + $0x4] sm:$0xf]
        %v1968 = vld [vmem:[#allocation2 + $0x8] sm:$0x1]
        %v1969 = vld [vmem:[#allocation2 + $0xc] sm:$0xe]
        %v1970 = vld [vmem:[#allocation2 + $0x10] sm:$0xf]
        %v1971 = vld [vmem:[#allocation2 + $0x14] sm:$0x1]
        %v1972 = vld [vmem:[#allocation2 + $0x18] sm:$0xe]
        %v1973 = vld [vmem:[#allocation2 + $0x1c] sm:$0xf]
        %v1974 = vld [vmem:[#allocation2 + $0x20] sm:$0x1]
        %v1975 = vld [vmem:[#allocation2 + $0x24] sm:$0xe]
        %v1976 = vld [vmem:[#allocation2 + $0x28] sm:$0xf]
        %v1977 = vld [vmem:[#allocation2 + $0x2c] sm:$0x1]
        %v1978 = vld [vmem:[#allocation2 + $0x30] sm:$0xe]
        %v1979 = vld [vmem:[#allocation2 + $0x34] sm:$0xf]
        %v1980 = vld [vmem:[#allocation2 + $0x38] sm:$0x1]
        %v1981 = vld [vmem:[#allocation2 + $0x3c] sm:$0xe]
        %v1982 = vld [vmem:[#allocation2 + $0x40] sm:$0xf]
        %v1983 = vld [vmem:[#allocation2 + $0x44] sm:$0x1]
        %v1984 = vld [vmem:[#allocation2 + $0x48] sm:$0xe]
        %v1985 = vld [vmem:[#allocation2 + $0x4c] sm:$0xf]
        %v1986 = vld [vmem:[#allocation2 + $0x50] sm:$0x1]
        %v1987 = vld [vmem:[#allocation2 + $0x54] sm:$0xe]
        %v1988 = vld [vmem:[#allocation2 + $0x58] sm:$0xf]
        %v1989 = vld [vmem:[#allocation2 + $0x5c] sm:$0x1]
        %v1990 = vld [vmem:[#allocation2 + $0x60] sm:$0xe]
        %v1991 = vld [vmem:[#allocation2 + $0x64] sm:$0xf]
        %v1992 = vld [vmem:[#allocation2 + $0x68] sm:$0x1]
        %v1993 = vld [vmem:[#allocation2 + $0x6c] sm:$0xe]
        %v1994 = vld [vmem:[#allocation2 + $0x70] sm:$0xf]
        %v1995 = vld [vmem:[#allocation2 + $0x74] sm:$0x1]
        %v1996 = vld [vmem:[#allocation2 + $0x78] sm:$0xe]
        %v1997 = vld [vmem:[#allocation2 + $0x7c] sm:$0xf]
        %v1998 = vld [vmem:[#allocation2 + $0x80] sm:$0x1]
        %v1999 = vld [vmem:[#allocation2 + $0x84] sm:$0xe]
        %v2000 = vld [vmem:[#allocation2 + $0x88] sm:$0xf]
        %v2001 = vld [vmem:[#allocation2 + $0x8c] sm:$0x1]
        %v2002 = vld [vmem:[#allocation2 + $0x90] sm:$0xe]
        %v2003 = vld [vmem:[#allocation2 + $0x94] sm:$0xf]
        %v2004 = vld [vmem:[#allocation2 + $0x98] sm:$0x1]
        %v2005 = vld [vmem:[#allocation2 + $0x9c] sm:$0xe]
        %v2006 = vld [vmem:[#allocation2 + $0xa0] sm:$0xf]
        %v2007 = vld [vmem:[#allocation2 + $0xa4] sm:$0x1]
        %v2008 = vld [vmem:[#allocation2 + $0xa8] sm:$0xe]
        %v2009 = vld [vmem:[#allocation2 + $0xac] sm:$0xf]
        %v2010 = vld [vmem:[#allocation2 + $0xb0] sm:$0x1]
        %v2011 = vld [vmem:[#allocation2 + $0xb4] sm:$0xe]
        %v2012 = vld [vmem:[#allocation2 + $0xb8] sm:$0xf]
        %v2013 = vld [vmem:[#allocation2 + $0xbc] sm:$0x1]
        %vm2062 = vcmask 1042432
        %vm2063 = vcmask 1046532
        %vm2064 = vmor %vm2062, %vm2063
        %v2065 = vrot.slane %v1966, 5
        %v2066 = vrot.slane %v2065, 4
        %v2067 = vrot.slane %v1967, 5
        %v2068 = vsel %vm2064, %v2066, %v2067
        %v2069 = vrot.slane %v2067, 4
        %v2070 = vrot.slane %v1968, 5
        %v2071 = vsel %vm2064, %v2069, %v2070
        %v2072 = vrot.slane %v1969, 5
        %v2073 = vrot.slane %v2072, 4
        %v2074 = vrot.slane %v1970, 5
        %v2075 = vsel %vm2064, %v2073, %v2074
        %v2076 = vrot.slane %v2074, 4
        %v2077 = vrot.slane %v1971, 5
        %v2078 = vsel %vm2064, %v2076, %v2077
        %v2079 = vrot.slane %v1972, 5
        %v2080 = vrot.slane %v2079, 4
        %v2081 = vrot.slane %v1973, 5
        %v2082 = vsel %vm2064, %v2080, %v2081
        %v2083 = vrot.slane %v2081, 4
        %v2084 = vrot.slane %v1974, 5
        %v2085 = vsel %vm2064, %v2083, %v2084
        %v2086 = vrot.slane %v1975, 5
        %v2087 = vrot.slane %v2086, 4
        %v2088 = vrot.slane %v1976, 5
        %v2089 = vsel %vm2064, %v2087, %v2088
        %v2090 = vrot.slane %v2088, 4
        %v2091 = vrot.slane %v1977, 5
        %v2092 = vsel %vm2064, %v2090, %v2091
        %v2093 = vrot.slane %v1978, 5
        %v2094 = vrot.slane %v2093, 4
        %v2095 = vrot.slane %v1979, 5
        %v2096 = vsel %vm2064, %v2094, %v2095
        %v2097 = vrot.slane %v2095, 4
        %v2098 = vrot.slane %v1980, 5
        %v2099 = vsel %vm2064, %v2097, %v2098
        %v2100 = vrot.slane %v1981, 5
        %v2101 = vrot.slane %v2100, 4
        %v2102 = vrot.slane %v1982, 5
        %v2103 = vsel %vm2064, %v2101, %v2102
        %v2104 = vrot.slane %v2102, 4
        %v2105 = vrot.slane %v1983, 5
        %v2106 = vsel %vm2064, %v2104, %v2105
        %v2107 = vrot.slane %v1984, 5
        %v2108 = vrot.slane %v2107, 4
        %v2109 = vrot.slane %v1985, 5
        %v2110 = vsel %vm2064, %v2108, %v2109
        %v2111 = vrot.slane %v2109, 4
        %v2112 = vrot.slane %v1986, 5
        %v2113 = vsel %vm2064, %v2111, %v2112
        %v2114 = vrot.slane %v1987, 5
        %v2115 = vrot.slane %v2114, 4
        %v2116 = vrot.slane %v1988, 5
        %v2117 = vsel %vm2064, %v2115, %v2116
        %v2118 = vrot.slane %v2116, 4
        %v2119 = vrot.slane %v1989, 5
        %v2120 = vsel %vm2064, %v2118, %v2119
        %v2121 = vrot.slane %v1990, 5
        %v2122 = vrot.slane %v2121, 4
        %v2123 = vrot.slane %v1991, 5
        %v2124 = vsel %vm2064, %v2122, %v2123
        %v2125 = vrot.slane %v2123, 4
        %v2126 = vrot.slane %v1992, 5
        %v2127 = vsel %vm2064, %v2125, %v2126
        %v2128 = vrot.slane %v1993, 5
        %v2129 = vrot.slane %v2128, 4
        %v2130 = vrot.slane %v1994, 5
        %v2131 = vsel %vm2064, %v2129, %v2130
        %v2132 = vrot.slane %v2130, 4
        %v2133 = vrot.slane %v1995, 5
        %v2134 = vsel %vm2064, %v2132, %v2133
        %v2135 = vrot.slane %v1996, 5
        %v2136 = vrot.slane %v2135, 4
        %v2137 = vrot.slane %v1997, 5
        %v2138 = vsel %vm2064, %v2136, %v2137
        %v2139 = vrot.slane %v2137, 4
        %v2140 = vrot.slane %v1998, 5
        %v2141 = vsel %vm2064, %v2139, %v2140
        %v2142 = vrot.slane %v1999, 5
        %v2143 = vrot.slane %v2142, 4
        %v2144 = vrot.slane %v2000, 5
        %v2145 = vsel %vm2064, %v2143, %v2144
        %v2146 = vrot.slane %v2144, 4
        %v2147 = vrot.slane %v2001, 5
        %v2148 = vsel %vm2064, %v2146, %v2147
        %v2149 = vrot.slane %v2002, 5
        %v2150 = vrot.slane %v2149, 4
        %v2151 = vrot.slane %v2003, 5
        %v2152 = vsel %vm2064, %v2150, %v2151
        %v2153 = vrot.slane %v2151, 4
        %v2154 = vrot.slane %v2004, 5
        %v2155 = vsel %vm2064, %v2153, %v2154
        %v2156 = vrot.slane %v2005, 5
        %v2157 = vrot.slane %v2156, 4
        %v2158 = vrot.slane %v2006, 5
        %v2159 = vsel %vm2064, %v2157, %v2158
        %v2160 = vrot.slane %v2158, 4
        %v2161 = vrot.slane %v2007, 5
        %v2162 = vsel %vm2064, %v2160, %v2161
        %v2163 = vrot.slane %v2008, 5
        %v2164 = vrot.slane %v2163, 4
        %v2165 = vrot.slane %v2009, 5
        %v2166 = vsel %vm2064, %v2164, %v2165
        %v2167 = vrot.slane %v2165, 4
        %v2168 = vrot.slane %v2010, 5
        %v2169 = vsel %vm2064, %v2167, %v2168
        %v2170 = vrot.slane %v2011, 5
        %v2171 = vrot.slane %v2170, 4
        %v2172 = vrot.slane %v2012, 5
        %v2173 = vsel %vm2064, %v2171, %v2172
        %v2174 = vrot.slane %v2172, 4
        %v2175 = vrot.slane %v2013, 5
        %v2176 = vsel %vm2064, %v2174, %v2175
        %v2177 = vunpack.c.l.b16 %v2068
        %v2178 = vunpack.c.l.b16 %v2071
        %v2179 = vunpack.c.l.b16 %v2075
        %v2180 = vunpack.c.l.b16 %v2078
        %v2181 = vunpack.c.l.b16 %v2082
        %v2182 = vunpack.c.l.b16 %v2085
        %v2183 = vunpack.c.l.b16 %v2089
        %v2184 = vunpack.c.l.b16 %v2092
        %v2185 = vunpack.c.l.b16 %v2096
        %v2186 = vunpack.c.l.b16 %v2099
        %v2187 = vunpack.c.l.b16 %v2103
        %v2188 = vunpack.c.l.b16 %v2106
        %v2189 = vunpack.c.l.b16 %v2110
        %v2190 = vunpack.c.l.b16 %v2113
        %v2191 = vunpack.c.l.b16 %v2117
        %v2192 = vunpack.c.l.b16 %v2120
        %v2193 = vunpack.c.l.b16 %v2124
        %v2194 = vunpack.c.l.b16 %v2127
        %v2195 = vunpack.c.l.b16 %v2131
        %v2196 = vunpack.c.l.b16 %v2134
        %v2197 = vunpack.c.l.b16 %v2138
        %v2198 = vunpack.c.l.b16 %v2141
        %v2199 = vunpack.c.l.b16 %v2145
        %v2200 = vunpack.c.l.b16 %v2148
        %v2201 = vunpack.c.l.b16 %v2152
        %v2202 = vunpack.c.l.b16 %v2155
        %v2203 = vunpack.c.l.b16 %v2159
        %v2204 = vunpack.c.l.b16 %v2162
        %v2205 = vunpack.c.l.b16 %v2166
        %v2206 = vunpack.c.l.b16 %v2169
        %v2207 = vunpack.c.l.b16 %v2173
        %v2208 = vunpack.c.l.b16 %v2176
        %v2209 = vpack.c.b16 %v2178, %v2177
        %v2210 = vpack.c.b16 %v2180, %v2179
        %v2211 = vpack.c.b16 %v2182, %v2181
        %v2212 = vpack.c.b16 %v2184, %v2183
        %v2213 = vpack.c.b16 %v2186, %v2185
        %v2214 = vpack.c.b16 %v2188, %v2187
        %v2215 = vpack.c.b16 %v2190, %v2189
        %v2216 = vpack.c.b16 %v2192, %v2191
        %v2217 = vpack.c.b16 %v2194, %v2193
        %v2218 = vpack.c.b16 %v2196, %v2195
        %v2219 = vpack.c.b16 %v2198, %v2197
        %v2220 = vpack.c.b16 %v2200, %v2199
        %v2221 = vpack.c.b16 %v2202, %v2201
        %v2222 = vpack.c.b16 %v2204, %v2203
        %v2223 = vpack.c.b16 %v2206, %v2205
        %v2224 = vpack.c.b16 %v2208, %v2207
        %2241 = vst [vmem:[#allocation3 + $0x10] sm:$0xff] %v2209
        %2242 = vst [vmem:[#allocation3 + $0x58] sm:$0xff] %v2210
        %2243 = vst [vmem:[#allocation3 + $0xa0] sm:$0xff] %v2211
        %2244 = vst [vmem:[#allocation3 + $0xe8] sm:$0xff] %v2212
        %2245 = vst [vmem:[#allocation3 + $0x130] sm:$0xff] %v2213
        %2246 = vst [vmem:[#allocation3 + $0x178] sm:$0xff] %v2214
        %2247 = vst [vmem:[#allocation3 + $0x1c0] sm:$0xff] %v2215
        %2248 = vst [vmem:[#allocation3 + $0x208] sm:$0xff] %v2216
        %2249 = vst [vmem:[#allocation3 + $0x250] sm:$0xff] %v2217
        %2250 = vst [vmem:[#allocation3 + $0x298] sm:$0xff] %v2218
        %2251 = vst [vmem:[#allocation3 + $0x2e0] sm:$0xff] %v2219
        %2252 = vst [vmem:[#allocation3 + $0x328] sm:$0xff] %v2220
        %2253 = vst [vmem:[#allocation3 + $0x370] sm:$0xff] %v2221
        %2254 = vst [vmem:[#allocation3 + $0x3b8] sm:$0xff] %v2222
        %2255 = vst [vmem:[#allocation3 + $0x400] sm:$0xff] %v2223
        %2256 = vst [vmem:[#allocation3 + $0x448] sm:$0xff] %v2224
        %v2257 = vld [vmem:[%s1192] sm:$0xf]
        %v2258 = vld [vmem:[%s1192 + $0x4] sm:$0xf]
        %v2259 = vld [vmem:[%s1192 + $0xc] sm:$0xf]
        %v2260 = vld [vmem:[%s1192 + $0x10] sm:$0xf]
        %v2261 = vld [vmem:[%s1192 + $0x18] sm:$0xf]
        %v2262 = vld [vmem:[%s1192 + $0x1c] sm:$0xf]
        %v2263 = vld [vmem:[%s1192 + $0x24] sm:$0xf]
        %v2264 = vld [vmem:[%s1192 + $0x28] sm:$0xf]
        %v2265 = vld [vmem:[%s1192 + $0x30] sm:$0xf]
        %v2266 = vld [vmem:[%s1192 + $0x34] sm:$0xf]
        %v2267 = vld [vmem:[%s1192 + $0x3c] sm:$0xf]
        %v2268 = vld [vmem:[%s1192 + $0x40] sm:$0xf]
        %v2269 = vld [vmem:[%s1192 + $0x48] sm:$0xf]
        %v2270 = vld [vmem:[%s1192 + $0x4c] sm:$0xf]
        %v2271 = vld [vmem:[%s1192 + $0x54] sm:$0xf]
        %v2272 = vld [vmem:[%s1192 + $0x58] sm:$0xf]
        %v2273 = vld [vmem:[%s1192 + $0x60] sm:$0xf]
        %v2274 = vld [vmem:[%s1192 + $0x64] sm:$0xf]
        %v2275 = vld [vmem:[%s1192 + $0x6c] sm:$0xf]
        %v2276 = vld [vmem:[%s1192 + $0x70] sm:$0xf]
        %v2277 = vld [vmem:[%s1192 + $0x78] sm:$0xf]
        %v2278 = vld [vmem:[%s1192 + $0x7c] sm:$0xf]
        %v2279 = vld [vmem:[%s1192 + $0x84] sm:$0xf]
        %v2280 = vld [vmem:[%s1192 + $0x88] sm:$0xf]
        %v2281 = vld [vmem:[%s1192 + $0x90] sm:$0xf]
        %v2282 = vld [vmem:[%s1192 + $0x94] sm:$0xf]
        %v2283 = vld [vmem:[%s1192 + $0x9c] sm:$0xf]
        %v2284 = vld [vmem:[%s1192 + $0xa0] sm:$0xf]
        %v2285 = vld [vmem:[%s1192 + $0xa8] sm:$0xf]
        %v2286 = vld [vmem:[%s1192 + $0xac] sm:$0xf]
        %v2287 = vld [vmem:[%s1192 + $0xb4] sm:$0xf]
        %v2288 = vld [vmem:[%s1192 + $0xb8] sm:$0xf]
        %v2321 = vunpack.c.l.b16 %v2257
        %v2322 = vunpack.c.l.b16 %v2258
        %v2323 = vunpack.c.l.b16 %v2259
        %v2324 = vunpack.c.l.b16 %v2260
        %v2325 = vunpack.c.l.b16 %v2261
        %v2326 = vunpack.c.l.b16 %v2262
        %v2327 = vunpack.c.l.b16 %v2263
        %v2328 = vunpack.c.l.b16 %v2264
        %v2329 = vunpack.c.l.b16 %v2265
        %v2330 = vunpack.c.l.b16 %v2266
        %v2331 = vunpack.c.l.b16 %v2267
        %v2332 = vunpack.c.l.b16 %v2268
        %v2333 = vunpack.c.l.b16 %v2269
        %v2334 = vunpack.c.l.b16 %v2270
        %v2335 = vunpack.c.l.b16 %v2271
        %v2336 = vunpack.c.l.b16 %v2272
        %v2337 = vunpack.c.l.b16 %v2273
        %v2338 = vunpack.c.l.b16 %v2274
        %v2339 = vunpack.c.l.b16 %v2275
        %v2340 = vunpack.c.l.b16 %v2276
        %v2341 = vunpack.c.l.b16 %v2277
        %v2342 = vunpack.c.l.b16 %v2278
        %v2343 = vunpack.c.l.b16 %v2279
        %v2344 = vunpack.c.l.b16 %v2280
        %v2345 = vunpack.c.l.b16 %v2281
        %v2346 = vunpack.c.l.b16 %v2282
        %v2347 = vunpack.c.l.b16 %v2283
        %v2348 = vunpack.c.l.b16 %v2284
        %v2349 = vunpack.c.l.b16 %v2285
        %v2350 = vunpack.c.l.b16 %v2286
        %v2351 = vunpack.c.l.b16 %v2287
        %v2352 = vunpack.c.l.b16 %v2288
        %v2353 = vpack.c.b16 %v2322, %v2321
        %v2354 = vpack.c.b16 %v2324, %v2323
        %v2355 = vpack.c.b16 %v2326, %v2325
        %v2356 = vpack.c.b16 %v2328, %v2327
        %v2357 = vpack.c.b16 %v2330, %v2329
        %v2358 = vpack.c.b16 %v2332, %v2331
        %v2359 = vpack.c.b16 %v2334, %v2333
        %v2360 = vpack.c.b16 %v2336, %v2335
        %v2361 = vpack.c.b16 %v2338, %v2337
        %v2362 = vpack.c.b16 %v2340, %v2339
        %v2363 = vpack.c.b16 %v2342, %v2341
        %v2364 = vpack.c.b16 %v2344, %v2343
        %v2365 = vpack.c.b16 %v2346, %v2345
        %v2366 = vpack.c.b16 %v2348, %v2347
        %v2367 = vpack.c.b16 %v2350, %v2349
        %v2368 = vpack.c.b16 %v2352, %v2351
        %2385 = vst [vmem:[#allocation3 + $0x18] sm:$0xff] %v2353
        %2386 = vst [vmem:[#allocation3 + $0x60] sm:$0xff] %v2354
        %2387 = vst [vmem:[#allocation3 + $0xa8] sm:$0xff] %v2355
        %2388 = vst [vmem:[#allocation3 + $0xf0] sm:$0xff] %v2356
        %2389 = vst [vmem:[#allocation3 + $0x138] sm:$0xff] %v2357
        %2390 = vst [vmem:[#allocation3 + $0x180] sm:$0xff] %v2358
        %2391 = vst [vmem:[#allocation3 + $0x1c8] sm:$0xff] %v2359
        %2392 = vst [vmem:[#allocation3 + $0x210] sm:$0xff] %v2360
        %2393 = vst [vmem:[#allocation3 + $0x258] sm:$0xff] %v2361
        %2394 = vst [vmem:[#allocation3 + $0x2a0] sm:$0xff] %v2362
        %2395 = vst [vmem:[#allocation3 + $0x2e8] sm:$0xff] %v2363
        %2396 = vst [vmem:[#allocation3 + $0x330] sm:$0xff] %v2364
        %2397 = vst [vmem:[#allocation3 + $0x378] sm:$0xff] %v2365
        %2398 = vst [vmem:[#allocation3 + $0x3c0] sm:$0xff] %v2366
        %2399 = vst [vmem:[#allocation3 + $0x408] sm:$0xff] %v2367
        %2400 = vst [vmem:[#allocation3 + $0x450] sm:$0xff] %v2368
        %v2401 = vld [vmem:[%s1192] sm:$0xf]
        %v2402 = vld [vmem:[%s1192 + $0x4] sm:$0xf]
        %v2403 = vld [vmem:[%s1192 + $0x8] sm:$0x1]
        %v2404 = vld [vmem:[%s1192 + $0xc] sm:$0xf]
        %v2405 = vld [vmem:[%s1192 + $0x10] sm:$0xf]
        %v2406 = vld [vmem:[%s1192 + $0x14] sm:$0x1]
        %v2407 = vld [vmem:[%s1192 + $0x18] sm:$0xf]
        %v2408 = vld [vmem:[%s1192 + $0x1c] sm:$0xf]
        %v2409 = vld [vmem:[%s1192 + $0x20] sm:$0x1]
        %v2410 = vld [vmem:[%s1192 + $0x24] sm:$0xf]
        %v2411 = vld [vmem:[%s1192 + $0x28] sm:$0xf]
        %v2412 = vld [vmem:[%s1192 + $0x2c] sm:$0x1]
        %v2413 = vld [vmem:[%s1192 + $0x30] sm:$0xf]
        %v2414 = vld [vmem:[%s1192 + $0x34] sm:$0xf]
        %v2415 = vld [vmem:[%s1192 + $0x38] sm:$0x1]
        %v2416 = vld [vmem:[%s1192 + $0x3c] sm:$0xf]
        %v2417 = vld [vmem:[%s1192 + $0x40] sm:$0xf]
        %v2418 = vld [vmem:[%s1192 + $0x44] sm:$0x1]
        %v2419 = vld [vmem:[%s1192 + $0x48] sm:$0xf]
        %v2420 = vld [vmem:[%s1192 + $0x4c] sm:$0xf]
        %v2421 = vld [vmem:[%s1192 + $0x50] sm:$0x1]
        %v2422 = vld [vmem:[%s1192 + $0x54] sm:$0xf]
        %v2423 = vld [vmem:[%s1192 + $0x58] sm:$0xf]
        %v2424 = vld [vmem:[%s1192 + $0x5c] sm:$0x1]
        %v2425 = vld [vmem:[%s1192 + $0x60] sm:$0xf]
        %v2426 = vld [vmem:[%s1192 + $0x64] sm:$0xf]
        %v2427 = vld [vmem:[%s1192 + $0x68] sm:$0x1]
        %v2428 = vld [vmem:[%s1192 + $0x6c] sm:$0xf]
        %v2429 = vld [vmem:[%s1192 + $0x70] sm:$0xf]
        %v2430 = vld [vmem:[%s1192 + $0x74] sm:$0x1]
        %v2431 = vld [vmem:[%s1192 + $0x78] sm:$0xf]
        %v2432 = vld [vmem:[%s1192 + $0x7c] sm:$0xf]
        %v2433 = vld [vmem:[%s1192 + $0x80] sm:$0x1]
        %v2434 = vld [vmem:[%s1192 + $0x84] sm:$0xf]
        %v2435 = vld [vmem:[%s1192 + $0x88] sm:$0xf]
        %v2436 = vld [vmem:[%s1192 + $0x8c] sm:$0x1]
        %v2437 = vld [vmem:[%s1192 + $0x90] sm:$0xf]
        %v2438 = vld [vmem:[%s1192 + $0x94] sm:$0xf]
        %v2439 = vld [vmem:[%s1192 + $0x98] sm:$0x1]
        %v2440 = vld [vmem:[%s1192 + $0x9c] sm:$0xf]
        %v2441 = vld [vmem:[%s1192 + $0xa0] sm:$0xf]
        %v2442 = vld [vmem:[%s1192 + $0xa4] sm:$0x1]
        %v2443 = vld [vmem:[%s1192 + $0xa8] sm:$0xf]
        %v2444 = vld [vmem:[%s1192 + $0xac] sm:$0xf]
        %v2445 = vld [vmem:[%s1192 + $0xb0] sm:$0x1]
        %v2446 = vld [vmem:[%s1192 + $0xb4] sm:$0xf]
        %v2447 = vld [vmem:[%s1192 + $0xb8] sm:$0xf]
        %v2448 = vld [vmem:[%s1192 + $0xbc] sm:$0x1]
        %v2450 = vshrl.u32 %v2401, 16
        %v2452 = vrot.slane %v2450, 4
        %v2453 = vshll.u32 %v2401, 16
        %v2455 = vrot.slane %v2453, 5
        %v2456 = vor.u32 %v2452, %v2455
        %v2457 = vrot.slane %v2456, 4
        %v2459 = vshll.u32 %v2402, 16
        %v2461 = vrot.slane %v2459, 5
        %v2462 = vsel %vm1501, %v2457, %v2461
        %v2463 = vshrl.u32 %v2402, 16
        %v2465 = vrot.slane %v2463, 4
        %v2466 = vor.u32 %v2465, %v2461
        %v2467 = vrot.slane %v2466, 4
        %v2469 = vshll.u32 %v2403, 16
        %v2471 = vrot.slane %v2469, 5
        %v2472 = vsel %vm1501, %v2467, %v2471
        %v2474 = vshrl.u32 %v2404, 16
        %v2476 = vrot.slane %v2474, 4
        %v2477 = vshll.u32 %v2404, 16
        %v2479 = vrot.slane %v2477, 5
        %v2480 = vor.u32 %v2476, %v2479
        %v2481 = vrot.slane %v2480, 4
        %v2483 = vshll.u32 %v2405, 16
        %v2485 = vrot.slane %v2483, 5
        %v2486 = vsel %vm1501, %v2481, %v2485
        %v2487 = vshrl.u32 %v2405, 16
        %v2489 = vrot.slane %v2487, 4
        %v2490 = vor.u32 %v2489, %v2485
        %v2491 = vrot.slane %v2490, 4
        %v2493 = vshll.u32 %v2406, 16
        %v2495 = vrot.slane %v2493, 5
        %v2496 = vsel %vm1501, %v2491, %v2495
        %v2498 = vshrl.u32 %v2407, 16
        %v2500 = vrot.slane %v2498, 4
        %v2501 = vshll.u32 %v2407, 16
        %v2503 = vrot.slane %v2501, 5
        %v2504 = vor.u32 %v2500, %v2503
        %v2505 = vrot.slane %v2504, 4
        %v2507 = vshll.u32 %v2408, 16
        %v2509 = vrot.slane %v2507, 5
        %v2510 = vsel %vm1501, %v2505, %v2509
        %v2511 = vshrl.u32 %v2408, 16
        %v2513 = vrot.slane %v2511, 4
        %v2514 = vor.u32 %v2513, %v2509
        %v2515 = vrot.slane %v2514, 4
        %v2517 = vshll.u32 %v2409, 16
        %v2519 = vrot.slane %v2517, 5
        %v2520 = vsel %vm1501, %v2515, %v2519
        %v2522 = vshrl.u32 %v2410, 16
        %v2524 = vrot.slane %v2522, 4
        %v2525 = vshll.u32 %v2410, 16
        %v2527 = vrot.slane %v2525, 5
        %v2528 = vor.u32 %v2524, %v2527
        %v2529 = vrot.slane %v2528, 4
        %v2531 = vshll.u32 %v2411, 16
        %v2533 = vrot.slane %v2531, 5
        %v2534 = vsel %vm1501, %v2529, %v2533
        %v2535 = vshrl.u32 %v2411, 16
        %v2537 = vrot.slane %v2535, 4
        %v2538 = vor.u32 %v2537, %v2533
        %v2539 = vrot.slane %v2538, 4
        %v2541 = vshll.u32 %v2412, 16
        %v2543 = vrot.slane %v2541, 5
        %v2544 = vsel %vm1501, %v2539, %v2543
        %v2546 = vshrl.u32 %v2413, 16
        %v2548 = vrot.slane %v2546, 4
        %v2549 = vshll.u32 %v2413, 16
        %v2551 = vrot.slane %v2549, 5
        %v2552 = vor.u32 %v2548, %v2551
        %v2553 = vrot.slane %v2552, 4
        %v2555 = vshll.u32 %v2414, 16
        %v2557 = vrot.slane %v2555, 5
        %v2558 = vsel %vm1501, %v2553, %v2557
        %v2559 = vshrl.u32 %v2414, 16
        %v2561 = vrot.slane %v2559, 4
        %v2562 = vor.u32 %v2561, %v2557
        %v2563 = vrot.slane %v2562, 4
        %v2565 = vshll.u32 %v2415, 16
        %v2567 = vrot.slane %v2565, 5
        %v2568 = vsel %vm1501, %v2563, %v2567
        %v2570 = vshrl.u32 %v2416, 16
        %v2572 = vrot.slane %v2570, 4
        %v2573 = vshll.u32 %v2416, 16
        %v2575 = vrot.slane %v2573, 5
        %v2576 = vor.u32 %v2572, %v2575
        %v2577 = vrot.slane %v2576, 4
        %v2579 = vshll.u32 %v2417, 16
        %v2581 = vrot.slane %v2579, 5
        %v2582 = vsel %vm1501, %v2577, %v2581
        %v2583 = vshrl.u32 %v2417, 16
        %v2585 = vrot.slane %v2583, 4
        %v2586 = vor.u32 %v2585, %v2581
        %v2587 = vrot.slane %v2586, 4
        %v2589 = vshll.u32 %v2418, 16
        %v2591 = vrot.slane %v2589, 5
        %v2592 = vsel %vm1501, %v2587, %v2591
        %v2594 = vshrl.u32 %v2419, 16
        %v2596 = vrot.slane %v2594, 4
        %v2597 = vshll.u32 %v2419, 16
        %v2599 = vrot.slane %v2597, 5
        %v2600 = vor.u32 %v2596, %v2599
        %v2601 = vrot.slane %v2600, 4
        %v2603 = vshll.u32 %v2420, 16
        %v2605 = vrot.slane %v2603, 5
        %v2606 = vsel %vm1501, %v2601, %v2605
        %v2607 = vshrl.u32 %v2420, 16
        %v2609 = vrot.slane %v2607, 4
        %v2610 = vor.u32 %v2609, %v2605
        %v2611 = vrot.slane %v2610, 4
        %v2613 = vshll.u32 %v2421, 16
        %v2615 = vrot.slane %v2613, 5
        %v2616 = vsel %vm1501, %v2611, %v2615
        %v2618 = vshrl.u32 %v2422, 16
        %v2620 = vrot.slane %v2618, 4
        %v2621 = vshll.u32 %v2422, 16
        %v2623 = vrot.slane %v2621, 5
        %v2624 = vor.u32 %v2620, %v2623
        %v2625 = vrot.slane %v2624, 4
        %v2627 = vshll.u32 %v2423, 16
        %v2629 = vrot.slane %v2627, 5
        %v2630 = vsel %vm1501, %v2625, %v2629
        %v2631 = vshrl.u32 %v2423, 16
        %v2633 = vrot.slane %v2631, 4
        %v2634 = vor.u32 %v2633, %v2629
        %v2635 = vrot.slane %v2634, 4
        %v2637 = vshll.u32 %v2424, 16
        %v2639 = vrot.slane %v2637, 5
        %v2640 = vsel %vm1501, %v2635, %v2639
        %v2642 = vshrl.u32 %v2425, 16
        %v2644 = vrot.slane %v2642, 4
        %v2645 = vshll.u32 %v2425, 16
        %v2647 = vrot.slane %v2645, 5
        %v2648 = vor.u32 %v2644, %v2647
        %v2649 = vrot.slane %v2648, 4
        %v2651 = vshll.u32 %v2426, 16
        %v2653 = vrot.slane %v2651, 5
        %v2654 = vsel %vm1501, %v2649, %v2653
        %v2655 = vshrl.u32 %v2426, 16
        %v2657 = vrot.slane %v2655, 4
        %v2658 = vor.u32 %v2657, %v2653
        %v2659 = vrot.slane %v2658, 4
        %v2661 = vshll.u32 %v2427, 16
        %v2663 = vrot.slane %v2661, 5
        %v2664 = vsel %vm1501, %v2659, %v2663
        %v2666 = vshrl.u32 %v2428, 16
        %v2668 = vrot.slane %v2666, 4
        %v2669 = vshll.u32 %v2428, 16
        %v2671 = vrot.slane %v2669, 5
        %v2672 = vor.u32 %v2668, %v2671
        %v2673 = vrot.slane %v2672, 4
        %v2675 = vshll.u32 %v2429, 16
        %v2677 = vrot.slane %v2675, 5
        %v2678 = vsel %vm1501, %v2673, %v2677
        %v2679 = vshrl.u32 %v2429, 16
        %v2681 = vrot.slane %v2679, 4
        %v2682 = vor.u32 %v2681, %v2677
        %v2683 = vrot.slane %v2682, 4
        %v2685 = vshll.u32 %v2430, 16
        %v2687 = vrot.slane %v2685, 5
        %v2688 = vsel %vm1501, %v2683, %v2687
        %v2690 = vshrl.u32 %v2431, 16
        %v2692 = vrot.slane %v2690, 4
        %v2693 = vshll.u32 %v2431, 16
        %v2695 = vrot.slane %v2693, 5
        %v2696 = vor.u32 %v2692, %v2695
        %v2697 = vrot.slane %v2696, 4
        %v2699 = vshll.u32 %v2432, 16
        %v2701 = vrot.slane %v2699, 5
        %v2702 = vsel %vm1501, %v2697, %v2701
        %v2703 = vshrl.u32 %v2432, 16
        %v2705 = vrot.slane %v2703, 4
        %v2706 = vor.u32 %v2705, %v2701
        %v2707 = vrot.slane %v2706, 4
        %v2709 = vshll.u32 %v2433, 16
        %v2711 = vrot.slane %v2709, 5
        %v2712 = vsel %vm1501, %v2707, %v2711
        %v2714 = vshrl.u32 %v2434, 16
        %v2716 = vrot.slane %v2714, 4
        %v2717 = vshll.u32 %v2434, 16
        %v2719 = vrot.slane %v2717, 5
        %v2720 = vor.u32 %v2716, %v2719
        %v2721 = vrot.slane %v2720, 4
        %v2723 = vshll.u32 %v2435, 16
        %v2725 = vrot.slane %v2723, 5
        %v2726 = vsel %vm1501, %v2721, %v2725
        %v2727 = vshrl.u32 %v2435, 16
        %v2729 = vrot.slane %v2727, 4
        %v2730 = vor.u32 %v2729, %v2725
        %v2731 = vrot.slane %v2730, 4
        %v2733 = vshll.u32 %v2436, 16
        %v2735 = vrot.slane %v2733, 5
        %v2736 = vsel %vm1501, %v2731, %v2735
        %v2738 = vshrl.u32 %v2437, 16
        %v2740 = vrot.slane %v2738, 4
        %v2741 = vshll.u32 %v2437, 16
        %v2743 = vrot.slane %v2741, 5
        %v2744 = vor.u32 %v2740, %v2743
        %v2745 = vrot.slane %v2744, 4
        %v2747 = vshll.u32 %v2438, 16
        %v2749 = vrot.slane %v2747, 5
        %v2750 = vsel %vm1501, %v2745, %v2749
        %v2751 = vshrl.u32 %v2438, 16
        %v2753 = vrot.slane %v2751, 4
        %v2754 = vor.u32 %v2753, %v2749
        %v2755 = vrot.slane %v2754, 4
        %v2757 = vshll.u32 %v2439, 16
        %v2759 = vrot.slane %v2757, 5
        %v2760 = vsel %vm1501, %v2755, %v2759
        %v2762 = vshrl.u32 %v2440, 16
        %v2764 = vrot.slane %v2762, 4
        %v2765 = vshll.u32 %v2440, 16
        %v2767 = vrot.slane %v2765, 5
        %v2768 = vor.u32 %v2764, %v2767
        %v2769 = vrot.slane %v2768, 4
        %v2771 = vshll.u32 %v2441, 16
        %v2773 = vrot.slane %v2771, 5
        %v2774 = vsel %vm1501, %v2769, %v2773
        %v2775 = vshrl.u32 %v2441, 16
        %v2777 = vrot.slane %v2775, 4
        %v2778 = vor.u32 %v2777, %v2773
        %v2779 = vrot.slane %v2778, 4
        %v2781 = vshll.u32 %v2442, 16
        %v2783 = vrot.slane %v2781, 5
        %v2784 = vsel %vm1501, %v2779, %v2783
        %v2786 = vshrl.u32 %v2443, 16
        %v2788 = vrot.slane %v2786, 4
        %v2789 = vshll.u32 %v2443, 16
        %v2791 = vrot.slane %v2789, 5
        %v2792 = vor.u32 %v2788, %v2791
        %v2793 = vrot.slane %v2792, 4
        %v2795 = vshll.u32 %v2444, 16
        %v2797 = vrot.slane %v2795, 5
        %v2798 = vsel %vm1501, %v2793, %v2797
        %v2799 = vshrl.u32 %v2444, 16
        %v2801 = vrot.slane %v2799, 4
        %v2802 = vor.u32 %v2801, %v2797
        %v2803 = vrot.slane %v2802, 4
        %v2805 = vshll.u32 %v2445, 16
        %v2807 = vrot.slane %v2805, 5
        %v2808 = vsel %vm1501, %v2803, %v2807
        %v2810 = vshrl.u32 %v2446, 16
        %v2812 = vrot.slane %v2810, 4
        %v2813 = vshll.u32 %v2446, 16
        %v2815 = vrot.slane %v2813, 5
        %v2816 = vor.u32 %v2812, %v2815
        %v2817 = vrot.slane %v2816, 4
        %v2819 = vshll.u32 %v2447, 16
        %v2821 = vrot.slane %v2819, 5
        %v2822 = vsel %vm1501, %v2817, %v2821
        %v2823 = vshrl.u32 %v2447, 16
        %v2825 = vrot.slane %v2823, 4
        %v2826 = vor.u32 %v2825, %v2821
        %v2827 = vrot.slane %v2826, 4
        %v2829 = vshll.u32 %v2448, 16
        %v2831 = vrot.slane %v2829, 5
        %v2832 = vsel %vm1501, %v2827, %v2831
        %v2833 = vunpack.c.l.b16 %v2462
        %v2834 = vunpack.c.l.b16 %v2472
        %v2835 = vunpack.c.l.b16 %v2486
        %v2836 = vunpack.c.l.b16 %v2496
        %v2837 = vunpack.c.l.b16 %v2510
        %v2838 = vunpack.c.l.b16 %v2520
        %v2839 = vunpack.c.l.b16 %v2534
        %v2840 = vunpack.c.l.b16 %v2544
        %v2841 = vunpack.c.l.b16 %v2558
        %v2842 = vunpack.c.l.b16 %v2568
        %v2843 = vunpack.c.l.b16 %v2582
        %v2844 = vunpack.c.l.b16 %v2592
        %v2845 = vunpack.c.l.b16 %v2606
        %v2846 = vunpack.c.l.b16 %v2616
        %v2847 = vunpack.c.l.b16 %v2630
        %v2848 = vunpack.c.l.b16 %v2640
        %v2849 = vunpack.c.l.b16 %v2654
        %v2850 = vunpack.c.l.b16 %v2664
        %v2851 = vunpack.c.l.b16 %v2678
        %v2852 = vunpack.c.l.b16 %v2688
        %v2853 = vunpack.c.l.b16 %v2702
        %v2854 = vunpack.c.l.b16 %v2712
        %v2855 = vunpack.c.l.b16 %v2726
        %v2856 = vunpack.c.l.b16 %v2736
        %v2857 = vunpack.c.l.b16 %v2750
        %v2858 = vunpack.c.l.b16 %v2760
        %v2859 = vunpack.c.l.b16 %v2774
        %v2860 = vunpack.c.l.b16 %v2784
        %v2861 = vunpack.c.l.b16 %v2798
        %v2862 = vunpack.c.l.b16 %v2808
        %v2863 = vunpack.c.l.b16 %v2822
        %v2864 = vunpack.c.l.b16 %v2832
        %v2865 = vpack.c.b16 %v2834, %v2833
        %v2866 = vpack.c.b16 %v2836, %v2835
        %v2867 = vpack.c.b16 %v2838, %v2837
        %v2868 = vpack.c.b16 %v2840, %v2839
        %v2869 = vpack.c.b16 %v2842, %v2841
        %v2870 = vpack.c.b16 %v2844, %v2843
        %v2871 = vpack.c.b16 %v2846, %v2845
        %v2872 = vpack.c.b16 %v2848, %v2847
        %v2873 = vpack.c.b16 %v2850, %v2849
        %v2874 = vpack.c.b16 %v2852, %v2851
        %v2875 = vpack.c.b16 %v2854, %v2853
        %v2876 = vpack.c.b16 %v2856, %v2855
        %v2877 = vpack.c.b16 %v2858, %v2857
        %v2878 = vpack.c.b16 %v2860, %v2859
        %v2879 = vpack.c.b16 %v2862, %v2861
        %v2880 = vpack.c.b16 %v2864, %v2863
        %2897 = vst [vmem:[#allocation3 + $0x20] sm:$0xff] %v2865
        %2898 = vst [vmem:[#allocation3 + $0x68] sm:$0xff] %v2866
        %2899 = vst [vmem:[#allocation3 + $0xb0] sm:$0xff] %v2867
        %2900 = vst [vmem:[#allocation3 + $0xf8] sm:$0xff] %v2868
        %2901 = vst [vmem:[#allocation3 + $0x140] sm:$0xff] %v2869
        %2902 = vst [vmem:[#allocation3 + $0x188] sm:$0xff] %v2870
        %2903 = vst [vmem:[#allocation3 + $0x1d0] sm:$0xff] %v2871
        %2904 = vst [vmem:[#allocation3 + $0x218] sm:$0xff] %v2872
        %2905 = vst [vmem:[#allocation3 + $0x260] sm:$0xff] %v2873
        %2906 = vst [vmem:[#allocation3 + $0x2a8] sm:$0xff] %v2874
        %2907 = vst [vmem:[#allocation3 + $0x2f0] sm:$0xff] %v2875
        %2908 = vst [vmem:[#allocation3 + $0x338] sm:$0xff] %v2876
        %2909 = vst [vmem:[#allocation3 + $0x380] sm:$0xff] %v2877
        %2910 = vst [vmem:[#allocation3 + $0x3c8] sm:$0xff] %v2878
        %2911 = vst [vmem:[#allocation3 + $0x410] sm:$0xff] %v2879
        %2912 = vst [vmem:[#allocation3 + $0x458] sm:$0xff] %v2880
        %v2913 = vld [vmem:[%s1192] sm:$0xe]
        %v2914 = vld [vmem:[%s1192 + $0x4] sm:$0xf]
        %v2915 = vld [vmem:[%s1192 + $0x8] sm:$0x1]
        %v2916 = vld [vmem:[%s1192 + $0xc] sm:$0xe]
        %v2917 = vld [vmem:[%s1192 + $0x10] sm:$0xf]
        %v2918 = vld [vmem:[%s1192 + $0x14] sm:$0x1]
        %v2919 = vld [vmem:[%s1192 + $0x18] sm:$0xe]
        %v2920 = vld [vmem:[%s1192 + $0x1c] sm:$0xf]
        %v2921 = vld [vmem:[%s1192 + $0x20] sm:$0x1]
        %v2922 = vld [vmem:[%s1192 + $0x24] sm:$0xe]
        %v2923 = vld [vmem:[%s1192 + $0x28] sm:$0xf]
        %v2924 = vld [vmem:[%s1192 + $0x2c] sm:$0x1]
        %v2925 = vld [vmem:[%s1192 + $0x30] sm:$0xe]
        %v2926 = vld [vmem:[%s1192 + $0x34] sm:$0xf]
        %v2927 = vld [vmem:[%s1192 + $0x38] sm:$0x1]
        %v2928 = vld [vmem:[%s1192 + $0x3c] sm:$0xe]
        %v2929 = vld [vmem:[%s1192 + $0x40] sm:$0xf]
        %v2930 = vld [vmem:[%s1192 + $0x44] sm:$0x1]
        %v2931 = vld [vmem:[%s1192 + $0x48] sm:$0xe]
        %v2932 = vld [vmem:[%s1192 + $0x4c] sm:$0xf]
        %v2933 = vld [vmem:[%s1192 + $0x50] sm:$0x1]
        %v2934 = vld [vmem:[%s1192 + $0x54] sm:$0xe]
        %v2935 = vld [vmem:[%s1192 + $0x58] sm:$0xf]
        %v2936 = vld [vmem:[%s1192 + $0x5c] sm:$0x1]
        %v2937 = vld [vmem:[%s1192 + $0x60] sm:$0xe]
        %v2938 = vld [vmem:[%s1192 + $0x64] sm:$0xf]
        %v2939 = vld [vmem:[%s1192 + $0x68] sm:$0x1]
        %v2940 = vld [vmem:[%s1192 + $0x6c] sm:$0xe]
        %v2941 = vld [vmem:[%s1192 + $0x70] sm:$0xf]
        %v2942 = vld [vmem:[%s1192 + $0x74] sm:$0x1]
        %v2943 = vld [vmem:[%s1192 + $0x78] sm:$0xe]
        %v2944 = vld [vmem:[%s1192 + $0x7c] sm:$0xf]
        %v2945 = vld [vmem:[%s1192 + $0x80] sm:$0x1]
        %v2946 = vld [vmem:[%s1192 + $0x84] sm:$0xe]
        %v2947 = vld [vmem:[%s1192 + $0x88] sm:$0xf]
        %v2948 = vld [vmem:[%s1192 + $0x8c] sm:$0x1]
        %v2949 = vld [vmem:[%s1192 + $0x90] sm:$0xe]
        %v2950 = vld [vmem:[%s1192 + $0x94] sm:$0xf]
        %v2951 = vld [vmem:[%s1192 + $0x98] sm:$0x1]
        %v2952 = vld [vmem:[%s1192 + $0x9c] sm:$0xe]
        %v2953 = vld [vmem:[%s1192 + $0xa0] sm:$0xf]
        %v2954 = vld [vmem:[%s1192 + $0xa4] sm:$0x1]
        %v2955 = vld [vmem:[%s1192 + $0xa8] sm:$0xe]
        %v2956 = vld [vmem:[%s1192 + $0xac] sm:$0xf]
        %v2957 = vld [vmem:[%s1192 + $0xb0] sm:$0x1]
        %v2958 = vld [vmem:[%s1192 + $0xb4] sm:$0xe]
        %v2959 = vld [vmem:[%s1192 + $0xb8] sm:$0xf]
        %v2960 = vld [vmem:[%s1192 + $0xbc] sm:$0x1]
        %v3009 = vrot.slane %v2913, 5
        %v3010 = vrot.slane %v3009, 4
        %v3011 = vrot.slane %v2914, 5
        %v3012 = vsel %vm2064, %v3010, %v3011
        %v3013 = vrot.slane %v3011, 4
        %v3014 = vrot.slane %v2915, 5
        %v3015 = vsel %vm2064, %v3013, %v3014
        %v3016 = vrot.slane %v2916, 5
        %v3017 = vrot.slane %v3016, 4
        %v3018 = vrot.slane %v2917, 5
        %v3019 = vsel %vm2064, %v3017, %v3018
        %v3020 = vrot.slane %v3018, 4
        %v3021 = vrot.slane %v2918, 5
        %v3022 = vsel %vm2064, %v3020, %v3021
        %v3023 = vrot.slane %v2919, 5
        %v3024 = vrot.slane %v3023, 4
        %v3025 = vrot.slane %v2920, 5
        %v3026 = vsel %vm2064, %v3024, %v3025
        %v3027 = vrot.slane %v3025, 4
        %v3028 = vrot.slane %v2921, 5
        %v3029 = vsel %vm2064, %v3027, %v3028
        %v3030 = vrot.slane %v2922, 5
        %v3031 = vrot.slane %v3030, 4
        %v3032 = vrot.slane %v2923, 5
        %v3033 = vsel %vm2064, %v3031, %v3032
        %v3034 = vrot.slane %v3032, 4
        %v3035 = vrot.slane %v2924, 5
        %v3036 = vsel %vm2064, %v3034, %v3035
        %v3037 = vrot.slane %v2925, 5
        %v3038 = vrot.slane %v3037, 4
        %v3039 = vrot.slane %v2926, 5
        %v3040 = vsel %vm2064, %v3038, %v3039
        %v3041 = vrot.slane %v3039, 4
        %v3042 = vrot.slane %v2927, 5
        %v3043 = vsel %vm2064, %v3041, %v3042
        %v3044 = vrot.slane %v2928, 5
        %v3045 = vrot.slane %v3044, 4
        %v3046 = vrot.slane %v2929, 5
        %v3047 = vsel %vm2064, %v3045, %v3046
        %v3048 = vrot.slane %v3046, 4
        %v3049 = vrot.slane %v2930, 5
        %v3050 = vsel %vm2064, %v3048, %v3049
        %v3051 = vrot.slane %v2931, 5
        %v3052 = vrot.slane %v3051, 4
        %v3053 = vrot.slane %v2932, 5
        %v3054 = vsel %vm2064, %v3052, %v3053
        %v3055 = vrot.slane %v3053, 4
        %v3056 = vrot.slane %v2933, 5
        %v3057 = vsel %vm2064, %v3055, %v3056
        %v3058 = vrot.slane %v2934, 5
        %v3059 = vrot.slane %v3058, 4
        %v3060 = vrot.slane %v2935, 5
        %v3061 = vsel %vm2064, %v3059, %v3060
        %v3062 = vrot.slane %v3060, 4
        %v3063 = vrot.slane %v2936, 5
        %v3064 = vsel %vm2064, %v3062, %v3063
        %v3065 = vrot.slane %v2937, 5
        %v3066 = vrot.slane %v3065, 4
        %v3067 = vrot.slane %v2938, 5
        %v3068 = vsel %vm2064, %v3066, %v3067
        %v3069 = vrot.slane %v3067, 4
        %v3070 = vrot.slane %v2939, 5
        %v3071 = vsel %vm2064, %v3069, %v3070
        %v3072 = vrot.slane %v2940, 5
        %v3073 = vrot.slane %v3072, 4
        %v3074 = vrot.slane %v2941, 5
        %v3075 = vsel %vm2064, %v3073, %v3074
        %v3076 = vrot.slane %v3074, 4
        %v3077 = vrot.slane %v2942, 5
        %v3078 = vsel %vm2064, %v3076, %v3077
        %v3079 = vrot.slane %v2943, 5
        %v3080 = vrot.slane %v3079, 4
        %v3081 = vrot.slane %v2944, 5
        %v3082 = vsel %vm2064, %v3080, %v3081
        %v3083 = vrot.slane %v3081, 4
        %v3084 = vrot.slane %v2945, 5
        %v3085 = vsel %vm2064, %v3083, %v3084
        %v3086 = vrot.slane %v2946, 5
        %v3087 = vrot.slane %v3086, 4
        %v3088 = vrot.slane %v2947, 5
        %v3089 = vsel %vm2064, %v3087, %v3088
        %v3090 = vrot.slane %v3088, 4
        %v3091 = vrot.slane %v2948, 5
        %v3092 = vsel %vm2064, %v3090, %v3091
        %v3093 = vrot.slane %v2949, 5
        %v3094 = vrot.slane %v3093, 4
        %v3095 = vrot.slane %v2950, 5
        %v3096 = vsel %vm2064, %v3094, %v3095
        %v3097 = vrot.slane %v3095, 4
        %v3098 = vrot.slane %v2951, 5
        %v3099 = vsel %vm2064, %v3097, %v3098
        %v3100 = vrot.slane %v2952, 5
        %v3101 = vrot.slane %v3100, 4
        %v3102 = vrot.slane %v2953, 5
        %v3103 = vsel %vm2064, %v3101, %v3102
        %v3104 = vrot.slane %v3102, 4
        %v3105 = vrot.slane %v2954, 5
        %v3106 = vsel %vm2064, %v3104, %v3105
        %v3107 = vrot.slane %v2955, 5
        %v3108 = vrot.slane %v3107, 4
        %v3109 = vrot.slane %v2956, 5
        %v3110 = vsel %vm2064, %v3108, %v3109
        %v3111 = vrot.slane %v3109, 4
        %v3112 = vrot.slane %v2957, 5
        %v3113 = vsel %vm2064, %v3111, %v3112
        %v3114 = vrot.slane %v2958, 5
        %v3115 = vrot.slane %v3114, 4
        %v3116 = vrot.slane %v2959, 5
        %v3117 = vsel %vm2064, %v3115, %v3116
        %v3118 = vrot.slane %v3116, 4
        %v3119 = vrot.slane %v2960, 5
        %v3120 = vsel %vm2064, %v3118, %v3119
        %v3121 = vunpack.c.l.b16 %v3012
        %v3122 = vunpack.c.l.b16 %v3015
        %v3123 = vunpack.c.l.b16 %v3019
        %v3124 = vunpack.c.l.b16 %v3022
        %v3125 = vunpack.c.l.b16 %v3026
        %v3126 = vunpack.c.l.b16 %v3029
        %v3127 = vunpack.c.l.b16 %v3033
        %v3128 = vunpack.c.l.b16 %v3036
        %v3129 = vunpack.c.l.b16 %v3040
        %v3130 = vunpack.c.l.b16 %v3043
        %v3131 = vunpack.c.l.b16 %v3047
        %v3132 = vunpack.c.l.b16 %v3050
        %v3133 = vunpack.c.l.b16 %v3054
        %v3134 = vunpack.c.l.b16 %v3057
        %v3135 = vunpack.c.l.b16 %v3061
        %v3136 = vunpack.c.l.b16 %v3064
        %v3137 = vunpack.c.l.b16 %v3068
        %v3138 = vunpack.c.l.b16 %v3071
        %v3139 = vunpack.c.l.b16 %v3075
        %v3140 = vunpack.c.l.b16 %v3078
        %v3141 = vunpack.c.l.b16 %v3082
        %v3142 = vunpack.c.l.b16 %v3085
        %v3143 = vunpack.c.l.b16 %v3089
        %v3144 = vunpack.c.l.b16 %v3092
        %v3145 = vunpack.c.l.b16 %v3096
        %v3146 = vunpack.c.l.b16 %v3099
        %v3147 = vunpack.c.l.b16 %v3103
        %v3148 = vunpack.c.l.b16 %v3106
        %v3149 = vunpack.c.l.b16 %v3110
        %v3150 = vunpack.c.l.b16 %v3113
        %v3151 = vunpack.c.l.b16 %v3117
        %v3152 = vunpack.c.l.b16 %v3120
        %v3153 = vpack.c.b16 %v3122, %v3121
        %v3154 = vpack.c.b16 %v3124, %v3123
        %v3155 = vpack.c.b16 %v3126, %v3125
        %v3156 = vpack.c.b16 %v3128, %v3127
        %v3157 = vpack.c.b16 %v3130, %v3129
        %v3158 = vpack.c.b16 %v3132, %v3131
        %v3159 = vpack.c.b16 %v3134, %v3133
        %v3160 = vpack.c.b16 %v3136, %v3135
        %v3161 = vpack.c.b16 %v3138, %v3137
        %v3162 = vpack.c.b16 %v3140, %v3139
        %v3163 = vpack.c.b16 %v3142, %v3141
        %v3164 = vpack.c.b16 %v3144, %v3143
        %v3165 = vpack.c.b16 %v3146, %v3145
        %v3166 = vpack.c.b16 %v3148, %v3147
        %v3167 = vpack.c.b16 %v3150, %v3149
        %v3168 = vpack.c.b16 %v3152, %v3151
        %3185 = vst [vmem:[#allocation3 + $0x28] sm:$0xff] %v3153
        %3186 = vst [vmem:[#allocation3 + $0x70] sm:$0xff] %v3154
        %3187 = vst [vmem:[#allocation3 + $0xb8] sm:$0xff] %v3155
        %3188 = vst [vmem:[#allocation3 + $0x100] sm:$0xff] %v3156
        %3189 = vst [vmem:[#allocation3 + $0x148] sm:$0xff] %v3157
        %3190 = vst [vmem:[#allocation3 + $0x190] sm:$0xff] %v3158
        %3191 = vst [vmem:[#allocation3 + $0x1d8] sm:$0xff] %v3159
        %3192 = vst [vmem:[#allocation3 + $0x220] sm:$0xff] %v3160
        %3193 = vst [vmem:[#allocation3 + $0x268] sm:$0xff] %v3161
        %3194 = vst [vmem:[#allocation3 + $0x2b0] sm:$0xff] %v3162
        %3195 = vst [vmem:[#allocation3 + $0x2f8] sm:$0xff] %v3163
        %3196 = vst [vmem:[#allocation3 + $0x340] sm:$0xff] %v3164
        %3197 = vst [vmem:[#allocation3 + $0x388] sm:$0xff] %v3165
        %3198 = vst [vmem:[#allocation3 + $0x3d0] sm:$0xff] %v3166
        %3199 = vst [vmem:[#allocation3 + $0x418] sm:$0xff] %v3167
        %3200 = vst [vmem:[#allocation3 + $0x460] sm:$0xff] %v3168
        %s3201 = scalar_lea.vmem [#allocation2], 24
        %v3202 = vld [vmem:[%s3201] sm:$0xf]
        %v3203 = vld [vmem:[%s3201 + $0x4] sm:$0xf]
        %v3204 = vld [vmem:[%s3201 + $0xc] sm:$0xf]
        %v3205 = vld [vmem:[%s3201 + $0x10] sm:$0xf]
        %v3206 = vld [vmem:[%s3201 + $0x18] sm:$0xf]
        %v3207 = vld [vmem:[%s3201 + $0x1c] sm:$0xf]
        %v3208 = vld [vmem:[%s3201 + $0x24] sm:$0xf]
        %v3209 = vld [vmem:[%s3201 + $0x28] sm:$0xf]
        %v3210 = vld [vmem:[%s3201 + $0x30] sm:$0xf]
        %v3211 = vld [vmem:[%s3201 + $0x34] sm:$0xf]
        %v3212 = vld [vmem:[%s3201 + $0x3c] sm:$0xf]
        %v3213 = vld [vmem:[%s3201 + $0x40] sm:$0xf]
        %v3214 = vld [vmem:[%s3201 + $0x48] sm:$0xf]
        %v3215 = vld [vmem:[%s3201 + $0x4c] sm:$0xf]
        %v3216 = vld [vmem:[%s3201 + $0x54] sm:$0xf]
        %v3217 = vld [vmem:[%s3201 + $0x58] sm:$0xf]
        %v3218 = vld [vmem:[%s3201 + $0x60] sm:$0xf]
        %v3219 = vld [vmem:[%s3201 + $0x64] sm:$0xf]
        %v3220 = vld [vmem:[%s3201 + $0x6c] sm:$0xf]
        %v3221 = vld [vmem:[%s3201 + $0x70] sm:$0xf]
        %v3222 = vld [vmem:[%s3201 + $0x78] sm:$0xf]
        %v3223 = vld [vmem:[%s3201 + $0x7c] sm:$0xf]
        %v3224 = vld [vmem:[%s3201 + $0x84] sm:$0xf]
        %v3225 = vld [vmem:[%s3201 + $0x88] sm:$0xf]
        %v3226 = vld [vmem:[%s3201 + $0x90] sm:$0xf]
        %v3227 = vld [vmem:[%s3201 + $0x94] sm:$0xf]
        %v3228 = vld [vmem:[%s3201 + $0x9c] sm:$0xf]
        %v3229 = vld [vmem:[%s3201 + $0xa0] sm:$0xf]
        %v3230 = vld [vmem:[%s3201 + $0xa8] sm:$0xf]
        %v3231 = vld [vmem:[%s3201 + $0xac] sm:$0xf]
        %v3232 = vld [vmem:[%s3201 + $0xb4] sm:$0xf]
        %v3233 = vld [vmem:[%s3201 + $0xb8] sm:$0xf]
        %v3266 = vunpack.c.l.b16 %v3202
        %v3267 = vunpack.c.l.b16 %v3203
        %v3268 = vunpack.c.l.b16 %v3204
        %v3269 = vunpack.c.l.b16 %v3205
        %v3270 = vunpack.c.l.b16 %v3206
        %v3271 = vunpack.c.l.b16 %v3207
        %v3272 = vunpack.c.l.b16 %v3208
        %v3273 = vunpack.c.l.b16 %v3209
        %v3274 = vunpack.c.l.b16 %v3210
        %v3275 = vunpack.c.l.b16 %v3211
        %v3276 = vunpack.c.l.b16 %v3212
        %v3277 = vunpack.c.l.b16 %v3213
        %v3278 = vunpack.c.l.b16 %v3214
        %v3279 = vunpack.c.l.b16 %v3215
        %v3280 = vunpack.c.l.b16 %v3216
        %v3281 = vunpack.c.l.b16 %v3217
        %v3282 = vunpack.c.l.b16 %v3218
        %v3283 = vunpack.c.l.b16 %v3219
        %v3284 = vunpack.c.l.b16 %v3220
        %v3285 = vunpack.c.l.b16 %v3221
        %v3286 = vunpack.c.l.b16 %v3222
        %v3287 = vunpack.c.l.b16 %v3223
        %v3288 = vunpack.c.l.b16 %v3224
        %v3289 = vunpack.c.l.b16 %v3225
        %v3290 = vunpack.c.l.b16 %v3226
        %v3291 = vunpack.c.l.b16 %v3227
        %v3292 = vunpack.c.l.b16 %v3228
        %v3293 = vunpack.c.l.b16 %v3229
        %v3294 = vunpack.c.l.b16 %v3230
        %v3295 = vunpack.c.l.b16 %v3231
        %v3296 = vunpack.c.l.b16 %v3232
        %v3297 = vunpack.c.l.b16 %v3233
        %v3298 = vpack.c.b16 %v3267, %v3266
        %v3299 = vpack.c.b16 %v3269, %v3268
        %v3300 = vpack.c.b16 %v3271, %v3270
        %v3301 = vpack.c.b16 %v3273, %v3272
        %v3302 = vpack.c.b16 %v3275, %v3274
        %v3303 = vpack.c.b16 %v3277, %v3276
        %v3304 = vpack.c.b16 %v3279, %v3278
        %v3305 = vpack.c.b16 %v3281, %v3280
        %v3306 = vpack.c.b16 %v3283, %v3282
        %v3307 = vpack.c.b16 %v3285, %v3284
        %v3308 = vpack.c.b16 %v3287, %v3286
        %v3309 = vpack.c.b16 %v3289, %v3288
        %v3310 = vpack.c.b16 %v3291, %v3290
        %v3311 = vpack.c.b16 %v3293, %v3292
        %v3312 = vpack.c.b16 %v3295, %v3294
        %v3313 = vpack.c.b16 %v3297, %v3296
        %3330 = vst [vmem:[#allocation3 + $0x30] sm:$0xff] %v3298
        %3331 = vst [vmem:[#allocation3 + $0x78] sm:$0xff] %v3299
        %3332 = vst [vmem:[#allocation3 + $0xc0] sm:$0xff] %v3300
        %3333 = vst [vmem:[#allocation3 + $0x108] sm:$0xff] %v3301
        %3334 = vst [vmem:[#allocation3 + $0x150] sm:$0xff] %v3302
        %3335 = vst [vmem:[#allocation3 + $0x198] sm:$0xff] %v3303
        %3336 = vst [vmem:[#allocation3 + $0x1e0] sm:$0xff] %v3304
        %3337 = vst [vmem:[#allocation3 + $0x228] sm:$0xff] %v3305
        %3338 = vst [vmem:[#allocation3 + $0x270] sm:$0xff] %v3306
        %3339 = vst [vmem:[#allocation3 + $0x2b8] sm:$0xff] %v3307
        %3340 = vst [vmem:[#allocation3 + $0x300] sm:$0xff] %v3308
        %3341 = vst [vmem:[#allocation3 + $0x348] sm:$0xff] %v3309
        %3342 = vst [vmem:[#allocation3 + $0x390] sm:$0xff] %v3310
        %3343 = vst [vmem:[#allocation3 + $0x3d8] sm:$0xff] %v3311
        %3344 = vst [vmem:[#allocation3 + $0x420] sm:$0xff] %v3312
        %3345 = vst [vmem:[#allocation3 + $0x468] sm:$0xff] %v3313
        %v3346 = vld [vmem:[%s3201] sm:$0xf]
        %v3347 = vld [vmem:[%s3201 + $0x4] sm:$0xf]
        %v3348 = vld [vmem:[%s3201 + $0x8] sm:$0x1]
        %v3349 = vld [vmem:[%s3201 + $0xc] sm:$0xf]
        %v3350 = vld [vmem:[%s3201 + $0x10] sm:$0xf]
        %v3351 = vld [vmem:[%s3201 + $0x14] sm:$0x1]
        %v3352 = vld [vmem:[%s3201 + $0x18] sm:$0xf]
        %v3353 = vld [vmem:[%s3201 + $0x1c] sm:$0xf]
        %v3354 = vld [vmem:[%s3201 + $0x20] sm:$0x1]
        %v3355 = vld [vmem:[%s3201 + $0x24] sm:$0xf]
        %v3356 = vld [vmem:[%s3201 + $0x28] sm:$0xf]
        %v3357 = vld [vmem:[%s3201 + $0x2c] sm:$0x1]
        %v3358 = vld [vmem:[%s3201 + $0x30] sm:$0xf]
        %v3359 = vld [vmem:[%s3201 + $0x34] sm:$0xf]
        %v3360 = vld [vmem:[%s3201 + $0x38] sm:$0x1]
        %v3361 = vld [vmem:[%s3201 + $0x3c] sm:$0xf]
        %v3362 = vld [vmem:[%s3201 + $0x40] sm:$0xf]
        %v3363 = vld [vmem:[%s3201 + $0x44] sm:$0x1]
        %v3364 = vld [vmem:[%s3201 + $0x48] sm:$0xf]
        %v3365 = vld [vmem:[%s3201 + $0x4c] sm:$0xf]
        %v3366 = vld [vmem:[%s3201 + $0x50] sm:$0x1]
        %v3367 = vld [vmem:[%s3201 + $0x54] sm:$0xf]
        %v3368 = vld [vmem:[%s3201 + $0x58] sm:$0xf]
        %v3369 = vld [vmem:[%s3201 + $0x5c] sm:$0x1]
        %v3370 = vld [vmem:[%s3201 + $0x60] sm:$0xf]
        %v3371 = vld [vmem:[%s3201 + $0x64] sm:$0xf]
        %v3372 = vld [vmem:[%s3201 + $0x68] sm:$0x1]
        %v3373 = vld [vmem:[%s3201 + $0x6c] sm:$0xf]
        %v3374 = vld [vmem:[%s3201 + $0x70] sm:$0xf]
        %v3375 = vld [vmem:[%s3201 + $0x74] sm:$0x1]
        %v3376 = vld [vmem:[%s3201 + $0x78] sm:$0xf]
        %v3377 = vld [vmem:[%s3201 + $0x7c] sm:$0xf]
        %v3378 = vld [vmem:[%s3201 + $0x80] sm:$0x1]
        %v3379 = vld [vmem:[%s3201 + $0x84] sm:$0xf]
        %v3380 = vld [vmem:[%s3201 + $0x88] sm:$0xf]
        %v3381 = vld [vmem:[%s3201 + $0x8c] sm:$0x1]
        %v3382 = vld [vmem:[%s3201 + $0x90] sm:$0xf]
        %v3383 = vld [vmem:[%s3201 + $0x94] sm:$0xf]
        %v3384 = vld [vmem:[%s3201 + $0x98] sm:$0x1]
        %v3385 = vld [vmem:[%s3201 + $0x9c] sm:$0xf]
        %v3386 = vld [vmem:[%s3201 + $0xa0] sm:$0xf]
        %v3387 = vld [vmem:[%s3201 + $0xa4] sm:$0x1]
        %v3388 = vld [vmem:[%s3201 + $0xa8] sm:$0xf]
        %v3389 = vld [vmem:[%s3201 + $0xac] sm:$0xf]
        %v3390 = vld [vmem:[%s3201 + $0xb0] sm:$0x1]
        %v3391 = vld [vmem:[%s3201 + $0xb4] sm:$0xf]
        %v3392 = vld [vmem:[%s3201 + $0xb8] sm:$0xf]
        %v3393 = vld [vmem:[%s3201 + $0xbc] sm:$0x1]
        %v3395 = vshrl.u32 %v3346, 16
        %v3397 = vrot.slane %v3395, 4
        %v3398 = vshll.u32 %v3346, 16
        %v3400 = vrot.slane %v3398, 5
        %v3401 = vor.u32 %v3397, %v3400
        %v3402 = vrot.slane %v3401, 4
        %v3404 = vshll.u32 %v3347, 16
        %v3406 = vrot.slane %v3404, 5
        %v3407 = vsel %vm1501, %v3402, %v3406
        %v3408 = vshrl.u32 %v3347, 16
        %v3410 = vrot.slane %v3408, 4
        %v3411 = vor.u32 %v3410, %v3406
        %v3412 = vrot.slane %v3411, 4
        %v3414 = vshll.u32 %v3348, 16
        %v3416 = vrot.slane %v3414, 5
        %v3417 = vsel %vm1501, %v3412, %v3416
        %v3419 = vshrl.u32 %v3349, 16
        %v3421 = vrot.slane %v3419, 4
        %v3422 = vshll.u32 %v3349, 16
        %v3424 = vrot.slane %v3422, 5
        %v3425 = vor.u32 %v3421, %v3424
        %v3426 = vrot.slane %v3425, 4
        %v3428 = vshll.u32 %v3350, 16
        %v3430 = vrot.slane %v3428, 5
        %v3431 = vsel %vm1501, %v3426, %v3430
        %v3432 = vshrl.u32 %v3350, 16
        %v3434 = vrot.slane %v3432, 4
        %v3435 = vor.u32 %v3434, %v3430
        %v3436 = vrot.slane %v3435, 4
        %v3438 = vshll.u32 %v3351, 16
        %v3440 = vrot.slane %v3438, 5
        %v3441 = vsel %vm1501, %v3436, %v3440
        %v3443 = vshrl.u32 %v3352, 16
        %v3445 = vrot.slane %v3443, 4
        %v3446 = vshll.u32 %v3352, 16
        %v3448 = vrot.slane %v3446, 5
        %v3449 = vor.u32 %v3445, %v3448
        %v3450 = vrot.slane %v3449, 4
        %v3452 = vshll.u32 %v3353, 16
        %v3454 = vrot.slane %v3452, 5
        %v3455 = vsel %vm1501, %v3450, %v3454
        %v3456 = vshrl.u32 %v3353, 16
        %v3458 = vrot.slane %v3456, 4
        %v3459 = vor.u32 %v3458, %v3454
        %v3460 = vrot.slane %v3459, 4
        %v3462 = vshll.u32 %v3354, 16
        %v3464 = vrot.slane %v3462, 5
        %v3465 = vsel %vm1501, %v3460, %v3464
        %v3467 = vshrl.u32 %v3355, 16
        %v3469 = vrot.slane %v3467, 4
        %v3470 = vshll.u32 %v3355, 16
        %v3472 = vrot.slane %v3470, 5
        %v3473 = vor.u32 %v3469, %v3472
        %v3474 = vrot.slane %v3473, 4
        %v3476 = vshll.u32 %v3356, 16
        %v3478 = vrot.slane %v3476, 5
        %v3479 = vsel %vm1501, %v3474, %v3478
        %v3480 = vshrl.u32 %v3356, 16
        %v3482 = vrot.slane %v3480, 4
        %v3483 = vor.u32 %v3482, %v3478
        %v3484 = vrot.slane %v3483, 4
        %v3486 = vshll.u32 %v3357, 16
        %v3488 = vrot.slane %v3486, 5
        %v3489 = vsel %vm1501, %v3484, %v3488
        %v3491 = vshrl.u32 %v3358, 16
        %v3493 = vrot.slane %v3491, 4
        %v3494 = vshll.u32 %v3358, 16
        %v3496 = vrot.slane %v3494, 5
        %v3497 = vor.u32 %v3493, %v3496
        %v3498 = vrot.slane %v3497, 4
        %v3500 = vshll.u32 %v3359, 16
        %v3502 = vrot.slane %v3500, 5
        %v3503 = vsel %vm1501, %v3498, %v3502
        %v3504 = vshrl.u32 %v3359, 16
        %v3506 = vrot.slane %v3504, 4
        %v3507 = vor.u32 %v3506, %v3502
        %v3508 = vrot.slane %v3507, 4
        %v3510 = vshll.u32 %v3360, 16
        %v3512 = vrot.slane %v3510, 5
        %v3513 = vsel %vm1501, %v3508, %v3512
        %v3515 = vshrl.u32 %v3361, 16
        %v3517 = vrot.slane %v3515, 4
        %v3518 = vshll.u32 %v3361, 16
        %v3520 = vrot.slane %v3518, 5
        %v3521 = vor.u32 %v3517, %v3520
        %v3522 = vrot.slane %v3521, 4
        %v3524 = vshll.u32 %v3362, 16
        %v3526 = vrot.slane %v3524, 5
        %v3527 = vsel %vm1501, %v3522, %v3526
        %v3528 = vshrl.u32 %v3362, 16
        %v3530 = vrot.slane %v3528, 4
        %v3531 = vor.u32 %v3530, %v3526
        %v3532 = vrot.slane %v3531, 4
        %v3534 = vshll.u32 %v3363, 16
        %v3536 = vrot.slane %v3534, 5
        %v3537 = vsel %vm1501, %v3532, %v3536
        %v3539 = vshrl.u32 %v3364, 16
        %v3541 = vrot.slane %v3539, 4
        %v3542 = vshll.u32 %v3364, 16
        %v3544 = vrot.slane %v3542, 5
        %v3545 = vor.u32 %v3541, %v3544
        %v3546 = vrot.slane %v3545, 4
        %v3548 = vshll.u32 %v3365, 16
        %v3550 = vrot.slane %v3548, 5
        %v3551 = vsel %vm1501, %v3546, %v3550
        %v3552 = vshrl.u32 %v3365, 16
        %v3554 = vrot.slane %v3552, 4
        %v3555 = vor.u32 %v3554, %v3550
        %v3556 = vrot.slane %v3555, 4
        %v3558 = vshll.u32 %v3366, 16
        %v3560 = vrot.slane %v3558, 5
        %v3561 = vsel %vm1501, %v3556, %v3560
        %v3563 = vshrl.u32 %v3367, 16
        %v3565 = vrot.slane %v3563, 4
        %v3566 = vshll.u32 %v3367, 16
        %v3568 = vrot.slane %v3566, 5
        %v3569 = vor.u32 %v3565, %v3568
        %v3570 = vrot.slane %v3569, 4
        %v3572 = vshll.u32 %v3368, 16
        %v3574 = vrot.slane %v3572, 5
        %v3575 = vsel %vm1501, %v3570, %v3574
        %v3576 = vshrl.u32 %v3368, 16
        %v3578 = vrot.slane %v3576, 4
        %v3579 = vor.u32 %v3578, %v3574
        %v3580 = vrot.slane %v3579, 4
        %v3582 = vshll.u32 %v3369, 16
        %v3584 = vrot.slane %v3582, 5
        %v3585 = vsel %vm1501, %v3580, %v3584
        %v3587 = vshrl.u32 %v3370, 16
        %v3589 = vrot.slane %v3587, 4
        %v3590 = vshll.u32 %v3370, 16
        %v3592 = vrot.slane %v3590, 5
        %v3593 = vor.u32 %v3589, %v3592
        %v3594 = vrot.slane %v3593, 4
        %v3596 = vshll.u32 %v3371, 16
        %v3598 = vrot.slane %v3596, 5
        %v3599 = vsel %vm1501, %v3594, %v3598
        %v3600 = vshrl.u32 %v3371, 16
        %v3602 = vrot.slane %v3600, 4
        %v3603 = vor.u32 %v3602, %v3598
        %v3604 = vrot.slane %v3603, 4
        %v3606 = vshll.u32 %v3372, 16
        %v3608 = vrot.slane %v3606, 5
        %v3609 = vsel %vm1501, %v3604, %v3608
        %v3611 = vshrl.u32 %v3373, 16
        %v3613 = vrot.slane %v3611, 4
        %v3614 = vshll.u32 %v3373, 16
        %v3616 = vrot.slane %v3614, 5
        %v3617 = vor.u32 %v3613, %v3616
        %v3618 = vrot.slane %v3617, 4
        %v3620 = vshll.u32 %v3374, 16
        %v3622 = vrot.slane %v3620, 5
        %v3623 = vsel %vm1501, %v3618, %v3622
        %v3624 = vshrl.u32 %v3374, 16
        %v3626 = vrot.slane %v3624, 4
        %v3627 = vor.u32 %v3626, %v3622
        %v3628 = vrot.slane %v3627, 4
        %v3630 = vshll.u32 %v3375, 16
        %v3632 = vrot.slane %v3630, 5
        %v3633 = vsel %vm1501, %v3628, %v3632
        %v3635 = vshrl.u32 %v3376, 16
        %v3637 = vrot.slane %v3635, 4
        %v3638 = vshll.u32 %v3376, 16
        %v3640 = vrot.slane %v3638, 5
        %v3641 = vor.u32 %v3637, %v3640
        %v3642 = vrot.slane %v3641, 4
        %v3644 = vshll.u32 %v3377, 16
        %v3646 = vrot.slane %v3644, 5
        %v3647 = vsel %vm1501, %v3642, %v3646
        %v3648 = vshrl.u32 %v3377, 16
        %v3650 = vrot.slane %v3648, 4
        %v3651 = vor.u32 %v3650, %v3646
        %v3652 = vrot.slane %v3651, 4
        %v3654 = vshll.u32 %v3378, 16
        %v3656 = vrot.slane %v3654, 5
        %v3657 = vsel %vm1501, %v3652, %v3656
        %v3659 = vshrl.u32 %v3379, 16
        %v3661 = vrot.slane %v3659, 4
        %v3662 = vshll.u32 %v3379, 16
        %v3664 = vrot.slane %v3662, 5
        %v3665 = vor.u32 %v3661, %v3664
        %v3666 = vrot.slane %v3665, 4
        %v3668 = vshll.u32 %v3380, 16
        %v3670 = vrot.slane %v3668, 5
        %v3671 = vsel %vm1501, %v3666, %v3670
        %v3672 = vshrl.u32 %v3380, 16
        %v3674 = vrot.slane %v3672, 4
        %v3675 = vor.u32 %v3674, %v3670
        %v3676 = vrot.slane %v3675, 4
        %v3678 = vshll.u32 %v3381, 16
        %v3680 = vrot.slane %v3678, 5
        %v3681 = vsel %vm1501, %v3676, %v3680
        %v3683 = vshrl.u32 %v3382, 16
        %v3685 = vrot.slane %v3683, 4
        %v3686 = vshll.u32 %v3382, 16
        %v3688 = vrot.slane %v3686, 5
        %v3689 = vor.u32 %v3685, %v3688
        %v3690 = vrot.slane %v3689, 4
        %v3692 = vshll.u32 %v3383, 16
        %v3694 = vrot.slane %v3692, 5
        %v3695 = vsel %vm1501, %v3690, %v3694
        %v3696 = vshrl.u32 %v3383, 16
        %v3698 = vrot.slane %v3696, 4
        %v3699 = vor.u32 %v3698, %v3694
        %v3700 = vrot.slane %v3699, 4
        %v3702 = vshll.u32 %v3384, 16
        %v3704 = vrot.slane %v3702, 5
        %v3705 = vsel %vm1501, %v3700, %v3704
        %v3707 = vshrl.u32 %v3385, 16
        %v3709 = vrot.slane %v3707, 4
        %v3710 = vshll.u32 %v3385, 16
        %v3712 = vrot.slane %v3710, 5
        %v3713 = vor.u32 %v3709, %v3712
        %v3714 = vrot.slane %v3713, 4
        %v3716 = vshll.u32 %v3386, 16
        %v3718 = vrot.slane %v3716, 5
        %v3719 = vsel %vm1501, %v3714, %v3718
        %v3720 = vshrl.u32 %v3386, 16
        %v3722 = vrot.slane %v3720, 4
        %v3723 = vor.u32 %v3722, %v3718
        %v3724 = vrot.slane %v3723, 4
        %v3726 = vshll.u32 %v3387, 16
        %v3728 = vrot.slane %v3726, 5
        %v3729 = vsel %vm1501, %v3724, %v3728
        %v3731 = vshrl.u32 %v3388, 16
        %v3733 = vrot.slane %v3731, 4
        %v3734 = vshll.u32 %v3388, 16
        %v3736 = vrot.slane %v3734, 5
        %v3737 = vor.u32 %v3733, %v3736
        %v3738 = vrot.slane %v3737, 4
        %v3740 = vshll.u32 %v3389, 16
        %v3742 = vrot.slane %v3740, 5
        %v3743 = vsel %vm1501, %v3738, %v3742
        %v3744 = vshrl.u32 %v3389, 16
        %v3746 = vrot.slane %v3744, 4
        %v3747 = vor.u32 %v3746, %v3742
        %v3748 = vrot.slane %v3747, 4
        %v3750 = vshll.u32 %v3390, 16
        %v3752 = vrot.slane %v3750, 5
        %v3753 = vsel %vm1501, %v3748, %v3752
        %v3755 = vshrl.u32 %v3391, 16
        %v3757 = vrot.slane %v3755, 4
        %v3758 = vshll.u32 %v3391, 16
        %v3760 = vrot.slane %v3758, 5
        %v3761 = vor.u32 %v3757, %v3760
        %v3762 = vrot.slane %v3761, 4
        %v3764 = vshll.u32 %v3392, 16
        %v3766 = vrot.slane %v3764, 5
        %v3767 = vsel %vm1501, %v3762, %v3766
        %v3768 = vshrl.u32 %v3392, 16
        %v3770 = vrot.slane %v3768, 4
        %v3771 = vor.u32 %v3770, %v3766
        %v3772 = vrot.slane %v3771, 4
        %v3774 = vshll.u32 %v3393, 16
        %v3776 = vrot.slane %v3774, 5
        %v3777 = vsel %vm1501, %v3772, %v3776
        %v3778 = vunpack.c.l.b16 %v3407
        %v3779 = vunpack.c.l.b16 %v3417
        %v3780 = vunpack.c.l.b16 %v3431
        %v3781 = vunpack.c.l.b16 %v3441
        %v3782 = vunpack.c.l.b16 %v3455
        %v3783 = vunpack.c.l.b16 %v3465
        %v3784 = vunpack.c.l.b16 %v3479
        %v3785 = vunpack.c.l.b16 %v3489
        %v3786 = vunpack.c.l.b16 %v3503
        %v3787 = vunpack.c.l.b16 %v3513
        %v3788 = vunpack.c.l.b16 %v3527
        %v3789 = vunpack.c.l.b16 %v3537
        %v3790 = vunpack.c.l.b16 %v3551
        %v3791 = vunpack.c.l.b16 %v3561
        %v3792 = vunpack.c.l.b16 %v3575
        %v3793 = vunpack.c.l.b16 %v3585
        %v3794 = vunpack.c.l.b16 %v3599
        %v3795 = vunpack.c.l.b16 %v3609
        %v3796 = vunpack.c.l.b16 %v3623
        %v3797 = vunpack.c.l.b16 %v3633
        %v3798 = vunpack.c.l.b16 %v3647
        %v3799 = vunpack.c.l.b16 %v3657
        %v3800 = vunpack.c.l.b16 %v3671
        %v3801 = vunpack.c.l.b16 %v3681
        %v3802 = vunpack.c.l.b16 %v3695
        %v3803 = vunpack.c.l.b16 %v3705
        %v3804 = vunpack.c.l.b16 %v3719
        %v3805 = vunpack.c.l.b16 %v3729
        %v3806 = vunpack.c.l.b16 %v3743
        %v3807 = vunpack.c.l.b16 %v3753
        %v3808 = vunpack.c.l.b16 %v3767
        %v3809 = vunpack.c.l.b16 %v3777
        %v3810 = vpack.c.b16 %v3779, %v3778
        %v3811 = vpack.c.b16 %v3781, %v3780
        %v3812 = vpack.c.b16 %v3783, %v3782
        %v3813 = vpack.c.b16 %v3785, %v3784
        %v3814 = vpack.c.b16 %v3787, %v3786
        %v3815 = vpack.c.b16 %v3789, %v3788
        %v3816 = vpack.c.b16 %v3791, %v3790
        %v3817 = vpack.c.b16 %v3793, %v3792
        %v3818 = vpack.c.b16 %v3795, %v3794
        %v3819 = vpack.c.b16 %v3797, %v3796
        %v3820 = vpack.c.b16 %v3799, %v3798
        %v3821 = vpack.c.b16 %v3801, %v3800
        %v3822 = vpack.c.b16 %v3803, %v3802
        %v3823 = vpack.c.b16 %v3805, %v3804
        %v3824 = vpack.c.b16 %v3807, %v3806
        %v3825 = vpack.c.b16 %v3809, %v3808
        %3842 = vst [vmem:[#allocation3 + $0x38] sm:$0xff] %v3810
        %3843 = vst [vmem:[#allocation3 + $0x80] sm:$0xff] %v3811
        %3844 = vst [vmem:[#allocation3 + $0xc8] sm:$0xff] %v3812
        %3845 = vst [vmem:[#allocation3 + $0x110] sm:$0xff] %v3813
        %3846 = vst [vmem:[#allocation3 + $0x158] sm:$0xff] %v3814
        %3847 = vst [vmem:[#allocation3 + $0x1a0] sm:$0xff] %v3815
        %3848 = vst [vmem:[#allocation3 + $0x1e8] sm:$0xff] %v3816
        %3849 = vst [vmem:[#allocation3 + $0x230] sm:$0xff] %v3817
        %3850 = vst [vmem:[#allocation3 + $0x278] sm:$0xff] %v3818
        %3851 = vst [vmem:[#allocation3 + $0x2c0] sm:$0xff] %v3819
        %3852 = vst [vmem:[#allocation3 + $0x308] sm:$0xff] %v3820
        %3853 = vst [vmem:[#allocation3 + $0x350] sm:$0xff] %v3821
        %3854 = vst [vmem:[#allocation3 + $0x398] sm:$0xff] %v3822
        %3855 = vst [vmem:[#allocation3 + $0x3e0] sm:$0xff] %v3823
        %3856 = vst [vmem:[#allocation3 + $0x428] sm:$0xff] %v3824
        %3857 = vst [vmem:[#allocation3 + $0x470] sm:$0xff] %v3825
        %v3858 = vld [vmem:[%s3201] sm:$0xe]
        %v3859 = vld [vmem:[%s3201 + $0x4] sm:$0xf]
        %v3860 = vld [vmem:[%s3201 + $0x8] sm:$0x1]
        %v3861 = vld [vmem:[%s3201 + $0xc] sm:$0xe]
        %v3862 = vld [vmem:[%s3201 + $0x10] sm:$0xf]
        %v3863 = vld [vmem:[%s3201 + $0x14] sm:$0x1]
        %v3864 = vld [vmem:[%s3201 + $0x18] sm:$0xe]
        %v3865 = vld [vmem:[%s3201 + $0x1c] sm:$0xf]
        %v3866 = vld [vmem:[%s3201 + $0x20] sm:$0x1]
        %v3867 = vld [vmem:[%s3201 + $0x24] sm:$0xe]
        %v3868 = vld [vmem:[%s3201 + $0x28] sm:$0xf]
        %v3869 = vld [vmem:[%s3201 + $0x2c] sm:$0x1]
        %v3870 = vld [vmem:[%s3201 + $0x30] sm:$0xe]
        %v3871 = vld [vmem:[%s3201 + $0x34] sm:$0xf]
        %v3872 = vld [vmem:[%s3201 + $0x38] sm:$0x1]
        %v3873 = vld [vmem:[%s3201 + $0x3c] sm:$0xe]
        %v3874 = vld [vmem:[%s3201 + $0x40] sm:$0xf]
        %v3875 = vld [vmem:[%s3201 + $0x44] sm:$0x1]
        %v3876 = vld [vmem:[%s3201 + $0x48] sm:$0xe]
        %v3877 = vld [vmem:[%s3201 + $0x4c] sm:$0xf]
        %v3878 = vld [vmem:[%s3201 + $0x50] sm:$0x1]
        %v3879 = vld [vmem:[%s3201 + $0x54] sm:$0xe]
        %v3880 = vld [vmem:[%s3201 + $0x58] sm:$0xf]
        %v3881 = vld [vmem:[%s3201 + $0x5c] sm:$0x1]
        %v3882 = vld [vmem:[%s3201 + $0x60] sm:$0xe]
        %v3883 = vld [vmem:[%s3201 + $0x64] sm:$0xf]
        %v3884 = vld [vmem:[%s3201 + $0x68] sm:$0x1]
        %v3885 = vld [vmem:[%s3201 + $0x6c] sm:$0xe]
        %v3886 = vld [vmem:[%s3201 + $0x70] sm:$0xf]
        %v3887 = vld [vmem:[%s3201 + $0x74] sm:$0x1]
        %v3888 = vld [vmem:[%s3201 + $0x78] sm:$0xe]
        %v3889 = vld [vmem:[%s3201 + $0x7c] sm:$0xf]
        %v3890 = vld [vmem:[%s3201 + $0x80] sm:$0x1]
        %v3891 = vld [vmem:[%s3201 + $0x84] sm:$0xe]
        %v3892 = vld [vmem:[%s3201 + $0x88] sm:$0xf]
        %v3893 = vld [vmem:[%s3201 + $0x8c] sm:$0x1]
        %v3894 = vld [vmem:[%s3201 + $0x90] sm:$0xe]
        %v3895 = vld [vmem:[%s3201 + $0x94] sm:$0xf]
        %v3896 = vld [vmem:[%s3201 + $0x98] sm:$0x1]
        %v3897 = vld [vmem:[%s3201 + $0x9c] sm:$0xe]
        %v3898 = vld [vmem:[%s3201 + $0xa0] sm:$0xf]
        %v3899 = vld [vmem:[%s3201 + $0xa4] sm:$0x1]
        %v3900 = vld [vmem:[%s3201 + $0xa8] sm:$0xe]
        %v3901 = vld [vmem:[%s3201 + $0xac] sm:$0xf]
        %v3902 = vld [vmem:[%s3201 + $0xb0] sm:$0x1]
        %v3903 = vld [vmem:[%s3201 + $0xb4] sm:$0xe]
        %v3904 = vld [vmem:[%s3201 + $0xb8] sm:$0xf]
        %v3905 = vld [vmem:[%s3201 + $0xbc] sm:$0x1]
        %v3954 = vrot.slane %v3858, 5
        %v3955 = vrot.slane %v3954, 4
        %v3956 = vrot.slane %v3859, 5
        %v3957 = vsel %vm2064, %v3955, %v3956
        %v3958 = vrot.slane %v3956, 4
        %v3959 = vrot.slane %v3860, 5
        %v3960 = vsel %vm2064, %v3958, %v3959
        %v3961 = vrot.slane %v3861, 5
        %v3962 = vrot.slane %v3961, 4
        %v3963 = vrot.slane %v3862, 5
        %v3964 = vsel %vm2064, %v3962, %v3963
        %v3965 = vrot.slane %v3963, 4
        %v3966 = vrot.slane %v3863, 5
        %v3967 = vsel %vm2064, %v3965, %v3966
        %v3968 = vrot.slane %v3864, 5
        %v3969 = vrot.slane %v3968, 4
        %v3970 = vrot.slane %v3865, 5
        %v3971 = vsel %vm2064, %v3969, %v3970
        %v3972 = vrot.slane %v3970, 4
        %v3973 = vrot.slane %v3866, 5
        %v3974 = vsel %vm2064, %v3972, %v3973
        %v3975 = vrot.slane %v3867, 5
        %v3976 = vrot.slane %v3975, 4
        %v3977 = vrot.slane %v3868, 5
        %v3978 = vsel %vm2064, %v3976, %v3977
        %v3979 = vrot.slane %v3977, 4
        %v3980 = vrot.slane %v3869, 5
        %v3981 = vsel %vm2064, %v3979, %v3980
        %v3982 = vrot.slane %v3870, 5
        %v3983 = vrot.slane %v3982, 4
        %v3984 = vrot.slane %v3871, 5
        %v3985 = vsel %vm2064, %v3983, %v3984
        %v3986 = vrot.slane %v3984, 4
        %v3987 = vrot.slane %v3872, 5
        %v3988 = vsel %vm2064, %v3986, %v3987
        %v3989 = vrot.slane %v3873, 5
        %v3990 = vrot.slane %v3989, 4
        %v3991 = vrot.slane %v3874, 5
        %v3992 = vsel %vm2064, %v3990, %v3991
        %v3993 = vrot.slane %v3991, 4
        %v3994 = vrot.slane %v3875, 5
        %v3995 = vsel %vm2064, %v3993, %v3994
        %v3996 = vrot.slane %v3876, 5
        %v3997 = vrot.slane %v3996, 4
        %v3998 = vrot.slane %v3877, 5
        %v3999 = vsel %vm2064, %v3997, %v3998
        %v4000 = vrot.slane %v3998, 4
        %v4001 = vrot.slane %v3878, 5
        %v4002 = vsel %vm2064, %v4000, %v4001
        %v4003 = vrot.slane %v3879, 5
        %v4004 = vrot.slane %v4003, 4
        %v4005 = vrot.slane %v3880, 5
        %v4006 = vsel %vm2064, %v4004, %v4005
        %v4007 = vrot.slane %v4005, 4
        %v4008 = vrot.slane %v3881, 5
        %v4009 = vsel %vm2064, %v4007, %v4008
        %v4010 = vrot.slane %v3882, 5
        %v4011 = vrot.slane %v4010, 4
        %v4012 = vrot.slane %v3883, 5
        %v4013 = vsel %vm2064, %v4011, %v4012
        %v4014 = vrot.slane %v4012, 4
        %v4015 = vrot.slane %v3884, 5
        %v4016 = vsel %vm2064, %v4014, %v4015
        %v4017 = vrot.slane %v3885, 5
        %v4018 = vrot.slane %v4017, 4
        %v4019 = vrot.slane %v3886, 5
        %v4020 = vsel %vm2064, %v4018, %v4019
        %v4021 = vrot.slane %v4019, 4
        %v4022 = vrot.slane %v3887, 5
        %v4023 = vsel %vm2064, %v4021, %v4022
        %v4024 = vrot.slane %v3888, 5
        %v4025 = vrot.slane %v4024, 4
        %v4026 = vrot.slane %v3889, 5
        %v4027 = vsel %vm2064, %v4025, %v4026
        %v4028 = vrot.slane %v4026, 4
        %v4029 = vrot.slane %v3890, 5
        %v4030 = vsel %vm2064, %v4028, %v4029
        %v4031 = vrot.slane %v3891, 5
        %v4032 = vrot.slane %v4031, 4
        %v4033 = vrot.slane %v3892, 5
        %v4034 = vsel %vm2064, %v4032, %v4033
        %v4035 = vrot.slane %v4033, 4
        %v4036 = vrot.slane %v3893, 5
        %v4037 = vsel %vm2064, %v4035, %v4036
        %v4038 = vrot.slane %v3894, 5
        %v4039 = vrot.slane %v4038, 4
        %v4040 = vrot.slane %v3895, 5
        %v4041 = vsel %vm2064, %v4039, %v4040
        %v4042 = vrot.slane %v4040, 4
        %v4043 = vrot.slane %v3896, 5
        %v4044 = vsel %vm2064, %v4042, %v4043
        %v4045 = vrot.slane %v3897, 5
        %v4046 = vrot.slane %v4045, 4
        %v4047 = vrot.slane %v3898, 5
        %v4048 = vsel %vm2064, %v4046, %v4047
        %v4049 = vrot.slane %v4047, 4
        %v4050 = vrot.slane %v3899, 5
        %v4051 = vsel %vm2064, %v4049, %v4050
        %v4052 = vrot.slane %v3900, 5
        %v4053 = vrot.slane %v4052, 4
        %v4054 = vrot.slane %v3901, 5
        %v4055 = vsel %vm2064, %v4053, %v4054
        %v4056 = vrot.slane %v4054, 4
        %v4057 = vrot.slane %v3902, 5
        %v4058 = vsel %vm2064, %v4056, %v4057
        %v4059 = vrot.slane %v3903, 5
        %v4060 = vrot.slane %v4059, 4
        %v4061 = vrot.slane %v3904, 5
        %v4062 = vsel %vm2064, %v4060, %v4061
        %v4063 = vrot.slane %v4061, 4
        %v4064 = vrot.slane %v3905, 5
        %v4065 = vsel %vm2064, %v4063, %v4064
        %v4066 = vunpack.c.l.b16 %v3957
        %v4067 = vunpack.c.l.b16 %v3960
        %v4068 = vunpack.c.l.b16 %v3964
        %v4069 = vunpack.c.l.b16 %v3967
        %v4070 = vunpack.c.l.b16 %v3971
        %v4071 = vunpack.c.l.b16 %v3974
        %v4072 = vunpack.c.l.b16 %v3978
        %v4073 = vunpack.c.l.b16 %v3981
        %v4074 = vunpack.c.l.b16 %v3985
        %v4075 = vunpack.c.l.b16 %v3988
        %v4076 = vunpack.c.l.b16 %v3992
        %v4077 = vunpack.c.l.b16 %v3995
        %v4078 = vunpack.c.l.b16 %v3999
        %v4079 = vunpack.c.l.b16 %v4002
        %v4080 = vunpack.c.l.b16 %v4006
        %v4081 = vunpack.c.l.b16 %v4009
        %v4082 = vunpack.c.l.b16 %v4013
        %v4083 = vunpack.c.l.b16 %v4016
        %v4084 = vunpack.c.l.b16 %v4020
        %v4085 = vunpack.c.l.b16 %v4023
        %v4086 = vunpack.c.l.b16 %v4027
        %v4087 = vunpack.c.l.b16 %v4030
        %v4088 = vunpack.c.l.b16 %v4034
        %v4089 = vunpack.c.l.b16 %v4037
        %v4090 = vunpack.c.l.b16 %v4041
        %v4091 = vunpack.c.l.b16 %v4044
        %v4092 = vunpack.c.l.b16 %v4048
        %v4093 = vunpack.c.l.b16 %v4051
        %v4094 = vunpack.c.l.b16 %v4055
        %v4095 = vunpack.c.l.b16 %v4058
        %v4096 = vunpack.c.l.b16 %v4062
        %v4097 = vunpack.c.l.b16 %v4065
        %v4098 = vpack.c.b16 %v4067, %v4066
        %v4099 = vpack.c.b16 %v4069, %v4068
        %v4100 = vpack.c.b16 %v4071, %v4070
        %v4101 = vpack.c.b16 %v4073, %v4072
        %v4102 = vpack.c.b16 %v4075, %v4074
        %v4103 = vpack.c.b16 %v4077, %v4076
        %v4104 = vpack.c.b16 %v4079, %v4078
        %v4105 = vpack.c.b16 %v4081, %v4080
        %v4106 = vpack.c.b16 %v4083, %v4082
        %v4107 = vpack.c.b16 %v4085, %v4084
        %v4108 = vpack.c.b16 %v4087, %v4086
        %v4109 = vpack.c.b16 %v4089, %v4088
        %v4110 = vpack.c.b16 %v4091, %v4090
        %v4111 = vpack.c.b16 %v4093, %v4092
        %v4112 = vpack.c.b16 %v4095, %v4094
        %v4113 = vpack.c.b16 %v4097, %v4096
        %4130 = vst [vmem:[#allocation3 + $0x40] sm:$0xff] %v4098
        %4131 = vst [vmem:[#allocation3 + $0x88] sm:$0xff] %v4099
        %4132 = vst [vmem:[#allocation3 + $0xd0] sm:$0xff] %v4100
        %4133 = vst [vmem:[#allocation3 + $0x118] sm:$0xff] %v4101
        %4134 = vst [vmem:[#allocation3 + $0x160] sm:$0xff] %v4102
        %4135 = vst [vmem:[#allocation3 + $0x1a8] sm:$0xff] %v4103
        %4136 = vst [vmem:[#allocation3 + $0x1f0] sm:$0xff] %v4104
        %4137 = vst [vmem:[#allocation3 + $0x238] sm:$0xff] %v4105
        %4138 = vst [vmem:[#allocation3 + $0x280] sm:$0xff] %v4106
        %4139 = vst [vmem:[#allocation3 + $0x2c8] sm:$0xff] %v4107
        %4140 = vst [vmem:[#allocation3 + $0x310] sm:$0xff] %v4108
        %4141 = vst [vmem:[#allocation3 + $0x358] sm:$0xff] %v4109
        %4142 = vst [vmem:[#allocation3 + $0x3a0] sm:$0xff] %v4110
        %4143 = vst [vmem:[#allocation3 + $0x3e8] sm:$0xff] %v4111
        %4144 = vst [vmem:[#allocation3 + $0x430] sm:$0xff] %v4112
        %4145 = vst [vmem:[#allocation3 + $0x478] sm:$0xff] %v4113
        %v4146 = vld [vmem:[#allocation3] sm:$0xff]
        %v4147 = vld [vmem:[#allocation3 + $0x8] sm:$0xff]
        %v4148 = vld [vmem:[#allocation3 + $0x10] sm:$0xff]
        %v4149 = vld [vmem:[#allocation3 + $0x18] sm:$0xff]
        %v4150 = vld [vmem:[#allocation3 + $0x20] sm:$0xff]
        %v4151 = vld [vmem:[#allocation3 + $0x28] sm:$0xff]
        %v4152 = vld [vmem:[#allocation3 + $0x30] sm:$0xff]
        %v4153 = vld [vmem:[#allocation3 + $0x38] sm:$0xff]
        %v4154 = vld [vmem:[#allocation3 + $0x40] sm:$0xff]
        %v4155 = vld [vmem:[#allocation3 + $0x48] sm:$0xff]
        %v4156 = vld [vmem:[#allocation3 + $0x50] sm:$0xff]
        %v4157 = vld [vmem:[#allocation3 + $0x58] sm:$0xff]
        %v4158 = vld [vmem:[#allocation3 + $0x60] sm:$0xff]
        %v4159 = vld [vmem:[#allocation3 + $0x68] sm:$0xff]
        %v4160 = vld [vmem:[#allocation3 + $0x70] sm:$0xff]
        %v4161 = vld [vmem:[#allocation3 + $0x78] sm:$0xff]
        %v4162 = vld [vmem:[#allocation3 + $0x80] sm:$0xff]
        %v4163 = vld [vmem:[#allocation3 + $0x88] sm:$0xff]
        %v4164 = vld [vmem:[#allocation3 + $0x90] sm:$0xff]
        %v4165 = vld [vmem:[#allocation3 + $0x98] sm:$0xff]
        %v4166 = vld [vmem:[#allocation3 + $0xa0] sm:$0xff]
        %v4167 = vld [vmem:[#allocation3 + $0xa8] sm:$0xff]
        %v4168 = vld [vmem:[#allocation3 + $0xb0] sm:$0xff]
        %v4169 = vld [vmem:[#allocation3 + $0xb8] sm:$0xff]
        %v4170 = vld [vmem:[#allocation3 + $0xc0] sm:$0xff]
        %v4171 = vld [vmem:[#allocation3 + $0xc8] sm:$0xff]
        %v4172 = vld [vmem:[#allocation3 + $0xd0] sm:$0xff]
        %v4173 = vld [vmem:[#allocation3 + $0xd8] sm:$0xff]
        %v4174 = vld [vmem:[#allocation3 + $0xe0] sm:$0xff]
        %v4175 = vld [vmem:[#allocation3 + $0xe8] sm:$0xff]
        %v4176 = vld [vmem:[#allocation3 + $0xf0] sm:$0xff]
        %v4177 = vld [vmem:[#allocation3 + $0xf8] sm:$0xff]
        %v4178 = vld [vmem:[#allocation3 + $0x100] sm:$0xff]
        %v4179 = vld [vmem:[#allocation3 + $0x108] sm:$0xff]
        %v4180 = vld [vmem:[#allocation3 + $0x110] sm:$0xff]
        %v4181 = vld [vmem:[#allocation3 + $0x118] sm:$0xff]
        %v4182 = vld [vmem:[#allocation3 + $0x120] sm:$0xff]
        %v4183 = vld [vmem:[#allocation3 + $0x128] sm:$0xff]
        %v4184 = vld [vmem:[#allocation3 + $0x130] sm:$0xff]
        %v4185 = vld [vmem:[#allocation3 + $0x138] sm:$0xff]
        %v4186 = vld [vmem:[#allocation3 + $0x140] sm:$0xff]
        %v4187 = vld [vmem:[#allocation3 + $0x148] sm:$0xff]
        %v4188 = vld [vmem:[#allocation3 + $0x150] sm:$0xff]
        %v4189 = vld [vmem:[#allocation3 + $0x158] sm:$0xff]
        %v4190 = vld [vmem:[#allocation3 + $0x160] sm:$0xff]
        %v4191 = vld [vmem:[#allocation3 + $0x168] sm:$0xff]
        %v4192 = vld [vmem:[#allocation3 + $0x170] sm:$0xff]
        %v4193 = vld [vmem:[#allocation3 + $0x178] sm:$0xff]
        %v4194 = vld [vmem:[#allocation3 + $0x180] sm:$0xff]
        %v4195 = vld [vmem:[#allocation3 + $0x188] sm:$0xff]
        %v4196 = vld [vmem:[#allocation3 + $0x190] sm:$0xff]
        %v4197 = vld [vmem:[#allocation3 + $0x198] sm:$0xff]
        %v4198 = vld [vmem:[#allocation3 + $0x1a0] sm:$0xff]
        %v4199 = vld [vmem:[#allocation3 + $0x1a8] sm:$0xff]
        %v4200 = vld [vmem:[#allocation3 + $0x1b0] sm:$0xff]
        %v4201 = vld [vmem:[#allocation3 + $0x1b8] sm:$0xff]
        %v4202 = vld [vmem:[#allocation3 + $0x1c0] sm:$0xff]
        %v4203 = vld [vmem:[#allocation3 + $0x1c8] sm:$0xff]
        %v4204 = vld [vmem:[#allocation3 + $0x1d0] sm:$0xff]
        %v4205 = vld [vmem:[#allocation3 + $0x1d8] sm:$0xff]
        %v4206 = vld [vmem:[#allocation3 + $0x1e0] sm:$0xff]
        %v4207 = vld [vmem:[#allocation3 + $0x1e8] sm:$0xff]
        %v4208 = vld [vmem:[#allocation3 + $0x1f0] sm:$0xff]
        %v4209 = vld [vmem:[#allocation3 + $0x1f8] sm:$0xff]
        %v4210 = vld [vmem:[#allocation3 + $0x200] sm:$0xff]
        %v4211 = vld [vmem:[#allocation3 + $0x208] sm:$0xff]
        %v4212 = vld [vmem:[#allocation3 + $0x210] sm:$0xff]
        %v4213 = vld [vmem:[#allocation3 + $0x218] sm:$0xff]
        %v4214 = vld [vmem:[#allocation3 + $0x220] sm:$0xff]
        %v4215 = vld [vmem:[#allocation3 + $0x228] sm:$0xff]
        %v4216 = vld [vmem:[#allocation3 + $0x230] sm:$0xff]
        %v4217 = vld [vmem:[#allocation3 + $0x238] sm:$0xff]
        %v4218 = vld [vmem:[#allocation3 + $0x240] sm:$0xff]
        %v4219 = vld [vmem:[#allocation3 + $0x248] sm:$0xff]
        %v4220 = vld [vmem:[#allocation3 + $0x250] sm:$0xff]
        %v4221 = vld [vmem:[#allocation3 + $0x258] sm:$0xff]
        %v4222 = vld [vmem:[#allocation3 + $0x260] sm:$0xff]
        %v4223 = vld [vmem:[#allocation3 + $0x268] sm:$0xff]
        %v4224 = vld [vmem:[#allocation3 + $0x270] sm:$0xff]
        %v4225 = vld [vmem:[#allocation3 + $0x278] sm:$0xff]
        %v4226 = vld [vmem:[#allocation3 + $0x280] sm:$0xff]
        %v4227 = vld [vmem:[#allocation3 + $0x288] sm:$0xff]
        %v4228 = vld [vmem:[#allocation3 + $0x290] sm:$0xff]
        %v4229 = vld [vmem:[#allocation3 + $0x298] sm:$0xff]
        %v4230 = vld [vmem:[#allocation3 + $0x2a0] sm:$0xff]
        %v4231 = vld [vmem:[#allocation3 + $0x2a8] sm:$0xff]
        %v4232 = vld [vmem:[#allocation3 + $0x2b0] sm:$0xff]
        %v4233 = vld [vmem:[#allocation3 + $0x2b8] sm:$0xff]
        %v4234 = vld [vmem:[#allocation3 + $0x2c0] sm:$0xff]
        %v4235 = vld [vmem:[#allocation3 + $0x2c8] sm:$0xff]
        %v4236 = vld [vmem:[#allocation3 + $0x2d0] sm:$0xff]
        %v4237 = vld [vmem:[#allocation3 + $0x2d8] sm:$0xff]
        %v4238 = vld [vmem:[#allocation3 + $0x2e0] sm:$0xff]
        %v4239 = vld [vmem:[#allocation3 + $0x2e8] sm:$0xff]
        %v4240 = vld [vmem:[#allocation3 + $0x2f0] sm:$0xff]
        %v4241 = vld [vmem:[#allocation3 + $0x2f8] sm:$0xff]
        %v4242 = vld [vmem:[#allocation3 + $0x300] sm:$0xff]
        %v4243 = vld [vmem:[#allocation3 + $0x308] sm:$0xff]
        %v4244 = vld [vmem:[#allocation3 + $0x310] sm:$0xff]
        %v4245 = vld [vmem:[#allocation3 + $0x318] sm:$0xff]
        %v4246 = vld [vmem:[#allocation3 + $0x320] sm:$0xff]
        %v4247 = vld [vmem:[#allocation3 + $0x328] sm:$0xff]
        %v4248 = vld [vmem:[#allocation3 + $0x330] sm:$0xff]
        %v4249 = vld [vmem:[#allocation3 + $0x338] sm:$0xff]
        %v4250 = vld [vmem:[#allocation3 + $0x340] sm:$0xff]
        %v4251 = vld [vmem:[#allocation3 + $0x348] sm:$0xff]
        %v4252 = vld [vmem:[#allocation3 + $0x350] sm:$0xff]
        %v4253 = vld [vmem:[#allocation3 + $0x358] sm:$0xff]
        %v4254 = vld [vmem:[#allocation3 + $0x360] sm:$0xff]
        %v4255 = vld [vmem:[#allocation3 + $0x368] sm:$0xff]
        %v4256 = vld [vmem:[#allocation3 + $0x370] sm:$0xff]
        %v4257 = vld [vmem:[#allocation3 + $0x378] sm:$0xff]
        %v4258 = vld [vmem:[#allocation3 + $0x380] sm:$0xff]
        %v4259 = vld [vmem:[#allocation3 + $0x388] sm:$0xff]
        %v4260 = vld [vmem:[#allocation3 + $0x390] sm:$0xff]
        %v4261 = vld [vmem:[#allocation3 + $0x398] sm:$0xff]
        %v4262 = vld [vmem:[#allocation3 + $0x3a0] sm:$0xff]
        %v4263 = vld [vmem:[#allocation3 + $0x3a8] sm:$0xff]
        %v4264 = vld [vmem:[#allocation3 + $0x3b0] sm:$0xff]
        %v4265 = vld [vmem:[#allocation3 + $0x3b8] sm:$0xff]
        %v4266 = vld [vmem:[#allocation3 + $0x3c0] sm:$0xff]
        %v4267 = vld [vmem:[#allocation3 + $0x3c8] sm:$0xff]
        %v4268 = vld [vmem:[#allocation3 + $0x3d0] sm:$0xff]
        %v4269 = vld [vmem:[#allocation3 + $0x3d8] sm:$0xff]
        %v4270 = vld [vmem:[#allocation3 + $0x3e0] sm:$0xff]
        %v4271 = vld [vmem:[#allocation3 + $0x3e8] sm:$0xff]
        %v4272 = vld [vmem:[#allocation3 + $0x3f0] sm:$0xff]
        %v4273 = vld [vmem:[#allocation3 + $0x3f8] sm:$0xff]
        %v4274 = vld [vmem:[#allocation3 + $0x400] sm:$0xff]
        %v4275 = vld [vmem:[#allocation3 + $0x408] sm:$0xff]
        %v4276 = vld [vmem:[#allocation3 + $0x410] sm:$0xff]
        %v4277 = vld [vmem:[#allocation3 + $0x418] sm:$0xff]
        %v4278 = vld [vmem:[#allocation3 + $0x420] sm:$0xff]
        %v4279 = vld [vmem:[#allocation3 + $0x428] sm:$0xff]
        %v4280 = vld [vmem:[#allocation3 + $0x430] sm:$0xff]
        %v4281 = vld [vmem:[#allocation3 + $0x438] sm:$0xff]
        %v4282 = vld [vmem:[#allocation3 + $0x440] sm:$0xff]
        %v4283 = vld [vmem:[#allocation3 + $0x448] sm:$0xff]
        %v4284 = vld [vmem:[#allocation3 + $0x450] sm:$0xff]
        %v4285 = vld [vmem:[#allocation3 + $0x458] sm:$0xff]
        %v4286 = vld [vmem:[#allocation3 + $0x460] sm:$0xff]
        %v4287 = vld [vmem:[#allocation3 + $0x468] sm:$0xff]
        %v4288 = vld [vmem:[#allocation3 + $0x470] sm:$0xff]
        %v4289 = vld [vmem:[#allocation3 + $0x478] sm:$0xff]
        %v4290 = vld [vmem:[#allocation9] sm:$0xf]
        %v4291 = vld [vmem:[#allocation9 + $0x4] sm:$0xf]
        %v4292 = vld [vmem:[#allocation9 + $0x8] sm:$0xf]
        %v4293 = vld [vmem:[#allocation9 + $0xc] sm:$0xf]
        %v4294 = vld [vmem:[#allocation9 + $0x10] sm:$0xf]
        %v4295 = vld [vmem:[#allocation9 + $0x14] sm:$0xf]
        %v4296 = vld [vmem:[#allocation9 + $0x18] sm:$0xf]
        %v4297 = vld [vmem:[#allocation9 + $0x1c] sm:$0xf]
        %v4298 = vld [vmem:[#allocation9 + $0x20] sm:$0xf]
        %v4299 = vld [vmem:[#allocation9 + $0x24] sm:$0xf]
        %v4300 = vld [vmem:[#allocation9 + $0x28] sm:$0xf]
        %v4301 = vld [vmem:[#allocation9 + $0x2c] sm:$0xf]
        %v4302 = vld [vmem:[#allocation9 + $0x30] sm:$0xf]
        %v4303 = vld [vmem:[#allocation9 + $0x34] sm:$0xf]
        %v4304 = vld [vmem:[#allocation9 + $0x38] sm:$0xf]
        %v4305 = vld [vmem:[#allocation9 + $0x3c] sm:$0xf]
        %v4306 = vld [vmem:[#allocation9 + $0x40] sm:$0xf]
        %v4307 = vld [vmem:[#allocation9 + $0x44] sm:$0xf]
        %v4308 = vld [vmem:[#allocation9 + $0x48] sm:$0xf]
        %v4309 = vld [vmem:[#allocation9 + $0x4c] sm:$0xf]
        %v4310 = vld [vmem:[#allocation9 + $0x50] sm:$0xf]
        %v4311 = vld [vmem:[#allocation9 + $0x54] sm:$0xf]
        %v4312 = vld [vmem:[#allocation9 + $0x58] sm:$0xf]
        %v4313 = vld [vmem:[#allocation9 + $0x5c] sm:$0xf]
        %v4314 = vld [vmem:[#allocation9 + $0x60] sm:$0xf]
        %v4315 = vld [vmem:[#allocation9 + $0x64] sm:$0xf]
        %v4316 = vld [vmem:[#allocation9 + $0x68] sm:$0xf]
        %v4317 = vld [vmem:[#allocation9 + $0x6c] sm:$0xf]
        %v4318 = vld [vmem:[#allocation9 + $0x70] sm:$0xf]
        %v4319 = vld [vmem:[#allocation9 + $0x74] sm:$0xf]
        %v4320 = vld [vmem:[#allocation9 + $0x78] sm:$0xf]
        %v4321 = vld [vmem:[#allocation9 + $0x7c] sm:$0xf]
        %v4322 = vld [vmem:[#allocation9 + $0x80] sm:$0xf]
        %v4323 = vld [vmem:[#allocation9 + $0x84] sm:$0xf]
        %v4324 = vld [vmem:[#allocation9 + $0x88] sm:$0xf]
        %v4325 = vld [vmem:[#allocation9 + $0x8c] sm:$0xf]
        %v4326 = vld [vmem:[#allocation9 + $0x90] sm:$0xf]
        %v4327 = vld [vmem:[#allocation9 + $0x94] sm:$0xf]
        %v4328 = vld [vmem:[#allocation9 + $0x98] sm:$0xf]
        %v4329 = vld [vmem:[#allocation9 + $0x9c] sm:$0xf]
        %v4330 = vld [vmem:[#allocation9 + $0xa0] sm:$0xf]
        %v4331 = vld [vmem:[#allocation9 + $0xa4] sm:$0xf]
        %v4332 = vld [vmem:[#allocation9 + $0xa8] sm:$0xf]
        %v4333 = vld [vmem:[#allocation9 + $0xac] sm:$0xf]
        %v4334 = vld [vmem:[#allocation9 + $0xb0] sm:$0xf]
        %v4335 = vld [vmem:[#allocation9 + $0xb4] sm:$0xf]
        %v4336 = vld [vmem:[#allocation9 + $0xb8] sm:$0xf]
        %v4337 = vld [vmem:[#allocation9 + $0xbc] sm:$0xf]
        %v4338 = vld [vmem:[#allocation9 + $0xc0] sm:$0xf]
        %v4339 = vld [vmem:[#allocation9 + $0xc4] sm:$0xf]
        %v4340 = vld [vmem:[#allocation9 + $0xc8] sm:$0xf]
        %v4341 = vld [vmem:[#allocation9 + $0xcc] sm:$0xf]
        %v4342 = vld [vmem:[#allocation9 + $0xd0] sm:$0xf]
        %v4343 = vld [vmem:[#allocation9 + $0xd4] sm:$0xf]
        %v4344 = vld [vmem:[#allocation9 + $0xd8] sm:$0xf]
        %v4345 = vld [vmem:[#allocation9 + $0xdc] sm:$0xf]
        %v4346 = vld [vmem:[#allocation9 + $0xe0] sm:$0xf]
        %v4347 = vld [vmem:[#allocation9 + $0xe4] sm:$0xf]
        %v4348 = vld [vmem:[#allocation9 + $0xe8] sm:$0xf]
        %v4349 = vld [vmem:[#allocation9 + $0xec] sm:$0xf]
        %v4350 = vld [vmem:[#allocation9 + $0xf0] sm:$0xf]
        %v4351 = vld [vmem:[#allocation9 + $0xf4] sm:$0xf]
        %v4352 = vld [vmem:[#allocation9 + $0xf8] sm:$0xf]
        %v4353 = vld [vmem:[#allocation9 + $0xfc] sm:$0xf]
        %v4354 = vld [vmem:[#allocation9 + $0x100] sm:$0xf]
        %v4355 = vld [vmem:[#allocation9 + $0x104] sm:$0xf]
        %v4356 = vld [vmem:[#allocation9 + $0x108] sm:$0xf]
        %v4357 = vld [vmem:[#allocation9 + $0x10c] sm:$0xf]
        %v4358 = vld [vmem:[#allocation9 + $0x110] sm:$0xf]
        %v4359 = vld [vmem:[#allocation9 + $0x114] sm:$0xf]
        %v4360 = vld [vmem:[#allocation9 + $0x118] sm:$0xf]
        %v4361 = vld [vmem:[#allocation9 + $0x11c] sm:$0xf]
        %v4362 = vld [vmem:[#allocation9 + $0x120] sm:$0xf]
        %v4363 = vld [vmem:[#allocation9 + $0x124] sm:$0xf]
        %v4364 = vld [vmem:[#allocation9 + $0x128] sm:$0xf]
        %v4365 = vld [vmem:[#allocation9 + $0x12c] sm:$0xf]
        %v4366 = vld [vmem:[#allocation9 + $0x130] sm:$0xf]
        %v4367 = vld [vmem:[#allocation9 + $0x134] sm:$0xf]
        %v4368 = vld [vmem:[#allocation9 + $0x138] sm:$0xf]
        %v4369 = vld [vmem:[#allocation9 + $0x13c] sm:$0xf]
        %v4370 = vld [vmem:[#allocation9 + $0x140] sm:$0xf]
        %v4371 = vld [vmem:[#allocation9 + $0x144] sm:$0xf]
        %v4372 = vld [vmem:[#allocation9 + $0x148] sm:$0xf]
        %v4373 = vld [vmem:[#allocation9 + $0x14c] sm:$0xf]
        %v4374 = vld [vmem:[#allocation9 + $0x150] sm:$0xf]
        %v4375 = vld [vmem:[#allocation9 + $0x154] sm:$0xf]
        %v4376 = vld [vmem:[#allocation9 + $0x158] sm:$0xf]
        %v4377 = vld [vmem:[#allocation9 + $0x15c] sm:$0xf]
        %v4378 = vld [vmem:[#allocation9 + $0x160] sm:$0xf]
        %v4379 = vld [vmem:[#allocation9 + $0x164] sm:$0xf]
        %v4380 = vld [vmem:[#allocation9 + $0x168] sm:$0xf]
        %v4381 = vld [vmem:[#allocation9 + $0x16c] sm:$0xf]
        %v4382 = vld [vmem:[#allocation9 + $0x170] sm:$0xf]
        %v4383 = vld [vmem:[#allocation9 + $0x174] sm:$0xf]
        %v4384 = vld [vmem:[#allocation9 + $0x178] sm:$0xf]
        %v4385 = vld [vmem:[#allocation9 + $0x17c] sm:$0xf]
        %v4386 = vld [vmem:[#allocation9 + $0x180] sm:$0xf]
        %v4387 = vld [vmem:[#allocation9 + $0x184] sm:$0xf]
        %v4388 = vld [vmem:[#allocation9 + $0x188] sm:$0xf]
        %v4389 = vld [vmem:[#allocation9 + $0x18c] sm:$0xf]
        %v4390 = vld [vmem:[#allocation9 + $0x190] sm:$0xf]
        %v4391 = vld [vmem:[#allocation9 + $0x194] sm:$0xf]
        %v4392 = vld [vmem:[#allocation9 + $0x198] sm:$0xf]
        %v4393 = vld [vmem:[#allocation9 + $0x19c] sm:$0xf]
        %v4394 = vld [vmem:[#allocation9 + $0x1a0] sm:$0xf]
        %v4395 = vld [vmem:[#allocation9 + $0x1a4] sm:$0xf]
        %v4396 = vld [vmem:[#allocation9 + $0x1a8] sm:$0xf]
        %v4397 = vld [vmem:[#allocation9 + $0x1ac] sm:$0xf]
        %v4398 = vld [vmem:[#allocation9 + $0x1b0] sm:$0xf]
        %v4399 = vld [vmem:[#allocation9 + $0x1b4] sm:$0xf]
        %v4400 = vld [vmem:[#allocation9 + $0x1b8] sm:$0xf]
        %v4401 = vld [vmem:[#allocation9 + $0x1bc] sm:$0xf]
        %v4402 = vld [vmem:[#allocation9 + $0x1c0] sm:$0xf]
        %v4403 = vld [vmem:[#allocation9 + $0x1c4] sm:$0xf]
        %v4404 = vld [vmem:[#allocation9 + $0x1c8] sm:$0xf]
        %v4405 = vld [vmem:[#allocation9 + $0x1cc] sm:$0xf]
        %v4406 = vld [vmem:[#allocation9 + $0x1d0] sm:$0xf]
        %v4407 = vld [vmem:[#allocation9 + $0x1d4] sm:$0xf]
        %v4408 = vld [vmem:[#allocation9 + $0x1d8] sm:$0xf]
        %v4409 = vld [vmem:[#allocation9 + $0x1dc] sm:$0xf]
        %v4410 = vld [vmem:[#allocation9 + $0x1e0] sm:$0xf]
        %v4411 = vld [vmem:[#allocation9 + $0x1e4] sm:$0xf]
        %v4412 = vld [vmem:[#allocation9 + $0x1e8] sm:$0xf]
        %v4413 = vld [vmem:[#allocation9 + $0x1ec] sm:$0xf]
        %v4414 = vld [vmem:[#allocation9 + $0x1f0] sm:$0xf]
        %v4415 = vld [vmem:[#allocation9 + $0x1f4] sm:$0xf]
        %v4416 = vld [vmem:[#allocation9 + $0x1f8] sm:$0xf]
        %v4417 = vld [vmem:[#allocation9 + $0x1fc] sm:$0xf]
        %v4418 = vld [vmem:[#allocation9 + $0x200] sm:$0xf]
        %v4419 = vld [vmem:[#allocation9 + $0x204] sm:$0xf]
        %v4420 = vld [vmem:[#allocation9 + $0x208] sm:$0xf]
        %v4421 = vld [vmem:[#allocation9 + $0x20c] sm:$0xf]
        %v4422 = vld [vmem:[#allocation9 + $0x210] sm:$0xf]
        %v4423 = vld [vmem:[#allocation9 + $0x214] sm:$0xf]
        %v4424 = vld [vmem:[#allocation9 + $0x218] sm:$0xf]
        %v4425 = vld [vmem:[#allocation9 + $0x21c] sm:$0xf]
        %v4426 = vld [vmem:[#allocation9 + $0x220] sm:$0xf]
        %v4427 = vld [vmem:[#allocation9 + $0x224] sm:$0xf]
        %v4428 = vld [vmem:[#allocation9 + $0x228] sm:$0xf]
        %v4429 = vld [vmem:[#allocation9 + $0x22c] sm:$0xf]
        %v4430 = vld [vmem:[#allocation9 + $0x230] sm:$0xf]
        %v4431 = vld [vmem:[#allocation9 + $0x234] sm:$0xf]
        %v4432 = vld [vmem:[#allocation9 + $0x238] sm:$0xf]
        %v4433 = vld [vmem:[#allocation9 + $0x23c] sm:$0xf]
        %v4434 = vld [vmem:[%s4] sm:$0x1]
        %v4436 = vlaneseq
        %v4437 = vshrl.u32 %v4436, 7
        %v4438 = vsub.s32 0, %v4437
        %v4439 = vrot.slane %v4434, %v4438
        %v4585 = vunpack.c.l.b16 %v4290
        %v4586 = vunpack.c.l.b16 %v4291
        %v4587 = vunpack.c.l.b16 %v4292
        %v4588 = vunpack.c.l.b16 %v4293
        %v4589 = vunpack.c.l.b16 %v4294
        %v4590 = vunpack.c.l.b16 %v4295
        %v4591 = vunpack.c.l.b16 %v4296
        %v4592 = vunpack.c.l.b16 %v4297
        %v4593 = vunpack.c.l.b16 %v4298
        %v4594 = vunpack.c.l.b16 %v4299
        %v4595 = vunpack.c.l.b16 %v4300
        %v4596 = vunpack.c.l.b16 %v4301
        %v4597 = vunpack.c.l.b16 %v4302
        %v4598 = vunpack.c.l.b16 %v4303
        %v4599 = vunpack.c.l.b16 %v4304
        %v4600 = vunpack.c.l.b16 %v4305
        %v4601 = vunpack.c.l.b16 %v4306
        %v4602 = vunpack.c.l.b16 %v4307
        %v4603 = vunpack.c.l.b16 %v4308
        %v4604 = vunpack.c.l.b16 %v4309
        %v4605 = vunpack.c.l.b16 %v4310
        %v4606 = vunpack.c.l.b16 %v4311
        %v4607 = vunpack.c.l.b16 %v4312
        %v4608 = vunpack.c.l.b16 %v4313
        %v4609 = vunpack.c.l.b16 %v4314
        %v4610 = vunpack.c.l.b16 %v4315
        %v4611 = vunpack.c.l.b16 %v4316
        %v4612 = vunpack.c.l.b16 %v4317
        %v4613 = vunpack.c.l.b16 %v4318
        %v4614 = vunpack.c.l.b16 %v4319
        %v4615 = vunpack.c.l.b16 %v4320
        %v4616 = vunpack.c.l.b16 %v4321
        %v4617 = vunpack.c.l.b16 %v4322
        %v4618 = vunpack.c.l.b16 %v4323
        %v4619 = vunpack.c.l.b16 %v4324
        %v4620 = vunpack.c.l.b16 %v4325
        %v4621 = vunpack.c.l.b16 %v4326
        %v4622 = vunpack.c.l.b16 %v4327
        %v4623 = vunpack.c.l.b16 %v4328
        %v4624 = vunpack.c.l.b16 %v4329
        %v4625 = vunpack.c.l.b16 %v4330
        %v4626 = vunpack.c.l.b16 %v4331
        %v4627 = vunpack.c.l.b16 %v4332
        %v4628 = vunpack.c.l.b16 %v4333
        %v4629 = vunpack.c.l.b16 %v4334
        %v4630 = vunpack.c.l.b16 %v4335
        %v4631 = vunpack.c.l.b16 %v4336
        %v4632 = vunpack.c.l.b16 %v4337
        %v4633 = vunpack.c.l.b16 %v4338
        %v4634 = vunpack.c.l.b16 %v4339
        %v4635 = vunpack.c.l.b16 %v4340
        %v4636 = vunpack.c.l.b16 %v4341
        %v4637 = vunpack.c.l.b16 %v4342
        %v4638 = vunpack.c.l.b16 %v4343
        %v4639 = vunpack.c.l.b16 %v4344
        %v4640 = vunpack.c.l.b16 %v4345
        %v4641 = vunpack.c.l.b16 %v4346
        %v4642 = vunpack.c.l.b16 %v4347
        %v4643 = vunpack.c.l.b16 %v4348
        %v4644 = vunpack.c.l.b16 %v4349
        %v4645 = vunpack.c.l.b16 %v4350
        %v4646 = vunpack.c.l.b16 %v4351
        %v4647 = vunpack.c.l.b16 %v4352
        %v4648 = vunpack.c.l.b16 %v4353
        %v4649 = vunpack.c.l.b16 %v4354
        %v4650 = vunpack.c.l.b16 %v4355
        %v4651 = vunpack.c.l.b16 %v4356
        %v4652 = vunpack.c.l.b16 %v4357
        %v4653 = vunpack.c.l.b16 %v4358
        %v4654 = vunpack.c.l.b16 %v4359
        %v4655 = vunpack.c.l.b16 %v4360
        %v4656 = vunpack.c.l.b16 %v4361
        %v4657 = vunpack.c.l.b16 %v4362
        %v4658 = vunpack.c.l.b16 %v4363
        %v4659 = vunpack.c.l.b16 %v4364
        %v4660 = vunpack.c.l.b16 %v4365
        %v4661 = vunpack.c.l.b16 %v4366
        %v4662 = vunpack.c.l.b16 %v4367
        %v4663 = vunpack.c.l.b16 %v4368
        %v4664 = vunpack.c.l.b16 %v4369
        %v4665 = vunpack.c.l.b16 %v4370
        %v4666 = vunpack.c.l.b16 %v4371
        %v4667 = vunpack.c.l.b16 %v4372
        %v4668 = vunpack.c.l.b16 %v4373
        %v4669 = vunpack.c.l.b16 %v4374
        %v4670 = vunpack.c.l.b16 %v4375
        %v4671 = vunpack.c.l.b16 %v4376
        %v4672 = vunpack.c.l.b16 %v4377
        %v4673 = vunpack.c.l.b16 %v4378
        %v4674 = vunpack.c.l.b16 %v4379
        %v4675 = vunpack.c.l.b16 %v4380
        %v4676 = vunpack.c.l.b16 %v4381
        %v4677 = vunpack.c.l.b16 %v4382
        %v4678 = vunpack.c.l.b16 %v4383
        %v4679 = vunpack.c.l.b16 %v4384
        %v4680 = vunpack.c.l.b16 %v4385
        %v4681 = vunpack.c.l.b16 %v4386
        %v4682 = vunpack.c.l.b16 %v4387
        %v4683 = vunpack.c.l.b16 %v4388
        %v4684 = vunpack.c.l.b16 %v4389
        %v4685 = vunpack.c.l.b16 %v4390
        %v4686 = vunpack.c.l.b16 %v4391
        %v4687 = vunpack.c.l.b16 %v4392
        %v4688 = vunpack.c.l.b16 %v4393
        %v4689 = vunpack.c.l.b16 %v4394
        %v4690 = vunpack.c.l.b16 %v4395
        %v4691 = vunpack.c.l.b16 %v4396
        %v4692 = vunpack.c.l.b16 %v4397
        %v4693 = vunpack.c.l.b16 %v4398
        %v4694 = vunpack.c.l.b16 %v4399
        %v4695 = vunpack.c.l.b16 %v4400
        %v4696 = vunpack.c.l.b16 %v4401
        %v4697 = vunpack.c.l.b16 %v4402
        %v4698 = vunpack.c.l.b16 %v4403
        %v4699 = vunpack.c.l.b16 %v4404
        %v4700 = vunpack.c.l.b16 %v4405
        %v4701 = vunpack.c.l.b16 %v4406
        %v4702 = vunpack.c.l.b16 %v4407
        %v4703 = vunpack.c.l.b16 %v4408
        %v4704 = vunpack.c.l.b16 %v4409
        %v4705 = vunpack.c.l.b16 %v4410
        %v4706 = vunpack.c.l.b16 %v4411
        %v4707 = vunpack.c.l.b16 %v4412
        %v4708 = vunpack.c.l.b16 %v4413
        %v4709 = vunpack.c.l.b16 %v4414
        %v4710 = vunpack.c.l.b16 %v4415
        %v4711 = vunpack.c.l.b16 %v4416
        %v4712 = vunpack.c.l.b16 %v4417
        %v4713 = vunpack.c.l.b16 %v4418
        %v4714 = vunpack.c.l.b16 %v4419
        %v4715 = vunpack.c.l.b16 %v4420
        %v4716 = vunpack.c.l.b16 %v4421
        %v4717 = vunpack.c.l.b16 %v4422
        %v4718 = vunpack.c.l.b16 %v4423
        %v4719 = vunpack.c.l.b16 %v4424
        %v4720 = vunpack.c.l.b16 %v4425
        %v4721 = vunpack.c.l.b16 %v4426
        %v4722 = vunpack.c.l.b16 %v4427
        %v4723 = vunpack.c.l.b16 %v4428
        %v4724 = vunpack.c.l.b16 %v4429
        %v4725 = vunpack.c.l.b16 %v4430
        %v4726 = vunpack.c.l.b16 %v4431
        %v4727 = vunpack.c.l.b16 %v4432
        %v4728 = vunpack.c.l.b16 %v4433
        %v4729 = vpack.c.b16 %v4586, %v4585
        %v4730 = vpack.c.b16 %v4588, %v4587
        %v4731 = vpack.c.b16 %v4590, %v4589
        %v4732 = vpack.c.b16 %v4592, %v4591
        %v4733 = vpack.c.b16 %v4594, %v4593
        %v4734 = vpack.c.b16 %v4596, %v4595
        %v4735 = vpack.c.b16 %v4598, %v4597
        %v4736 = vpack.c.b16 %v4600, %v4599
        %v4737 = vpack.c.b16 %v4602, %v4601
        %v4738 = vpack.c.b16 %v4604, %v4603
        %v4739 = vpack.c.b16 %v4606, %v4605
        %v4740 = vpack.c.b16 %v4608, %v4607
        %v4741 = vpack.c.b16 %v4610, %v4609
        %v4742 = vpack.c.b16 %v4612, %v4611
        %v4743 = vpack.c.b16 %v4614, %v4613
        %v4744 = vpack.c.b16 %v4616, %v4615
        %v4745 = vpack.c.b16 %v4618, %v4617
        %v4746 = vpack.c.b16 %v4620, %v4619
        %v4747 = vpack.c.b16 %v4622, %v4621
        %v4748 = vpack.c.b16 %v4624, %v4623
        %v4749 = vpack.c.b16 %v4626, %v4625
        %v4750 = vpack.c.b16 %v4628, %v4627
        %v4751 = vpack.c.b16 %v4630, %v4629
        %v4752 = vpack.c.b16 %v4632, %v4631
        %v4753 = vpack.c.b16 %v4634, %v4633
        %v4754 = vpack.c.b16 %v4636, %v4635
        %v4755 = vpack.c.b16 %v4638, %v4637
        %v4756 = vpack.c.b16 %v4640, %v4639
        %v4757 = vpack.c.b16 %v4642, %v4641
        %v4758 = vpack.c.b16 %v4644, %v4643
        %v4759 = vpack.c.b16 %v4646, %v4645
        %v4760 = vpack.c.b16 %v4648, %v4647
        %v4761 = vpack.c.b16 %v4650, %v4649
        %v4762 = vpack.c.b16 %v4652, %v4651
        %v4763 = vpack.c.b16 %v4654, %v4653
        %v4764 = vpack.c.b16 %v4656, %v4655
        %v4765 = vpack.c.b16 %v4658, %v4657
        %v4766 = vpack.c.b16 %v4660, %v4659
        %v4767 = vpack.c.b16 %v4662, %v4661
        %v4768 = vpack.c.b16 %v4664, %v4663
        %v4769 = vpack.c.b16 %v4666, %v4665
        %v4770 = vpack.c.b16 %v4668, %v4667
        %v4771 = vpack.c.b16 %v4670, %v4669
        %v4772 = vpack.c.b16 %v4672, %v4671
        %v4773 = vpack.c.b16 %v4674, %v4673
        %v4774 = vpack.c.b16 %v4676, %v4675
        %v4775 = vpack.c.b16 %v4678, %v4677
        %v4776 = vpack.c.b16 %v4680, %v4679
        %v4777 = vpack.c.b16 %v4682, %v4681
        %v4778 = vpack.c.b16 %v4684, %v4683
        %v4779 = vpack.c.b16 %v4686, %v4685
        %v4780 = vpack.c.b16 %v4688, %v4687
        %v4781 = vpack.c.b16 %v4690, %v4689
        %v4782 = vpack.c.b16 %v4692, %v4691
        %v4783 = vpack.c.b16 %v4694, %v4693
        %v4784 = vpack.c.b16 %v4696, %v4695
        %v4785 = vpack.c.b16 %v4698, %v4697
        %v4786 = vpack.c.b16 %v4700, %v4699
        %v4787 = vpack.c.b16 %v4702, %v4701
        %v4788 = vpack.c.b16 %v4704, %v4703
        %v4789 = vpack.c.b16 %v4706, %v4705
        %v4790 = vpack.c.b16 %v4708, %v4707
        %v4791 = vpack.c.b16 %v4710, %v4709
        %v4792 = vpack.c.b16 %v4712, %v4711
        %v4793 = vpack.c.b16 %v4714, %v4713
        %v4794 = vpack.c.b16 %v4716, %v4715
        %v4795 = vpack.c.b16 %v4718, %v4717
        %v4796 = vpack.c.b16 %v4720, %v4719
        %v4797 = vpack.c.b16 %v4722, %v4721
        %v4798 = vpack.c.b16 %v4724, %v4723
        %v4799 = vpack.c.b16 %v4726, %v4725
        %v4800 = vpack.c.b16 %v4728, %v4727
        %4873 = vmatprep.subr.bf16.mxu0 0
        %4874 = vmatpush1.bf16.msra.mxu0 %v4729
        %4875 = vmatprep.subr.bf16.mxu0 0
        %4876 = vmatpush1.bf16.msra.mxu0 %v4730
        %4877 = vmatprep.subr.bf16.mxu0 0
        %4878 = vmatpush1.bf16.msra.mxu0 %v4731
        %4879 = vmatprep.subr.bf16.mxu0 0
        %4880 = vmatpush1.bf16.msra.mxu0 %v4732
        %4881 = vmatprep.subr.bf16.mxu0 0
        %4882 = vmatpush1.bf16.msra.mxu0 %v4733
        %4883 = vmatprep.subr.bf16.mxu0 0
        %4884 = vmatpush1.bf16.msra.mxu0 %v4734
        %4885 = vmatprep.subr.bf16.mxu0 0
        %4886 = vmatpush1.bf16.msra.mxu0 %v4735
        %4887 = vmatprep.subr.bf16.mxu0 0
        %4888 = vmatpush1.bf16.msra.mxu0 %v4736
        %4889 = vmatprep.subr.bf16.mxu0 0
        %4890 = vmatpush1.bf16.msra.mxu0 %v4737
        %4891 = vmatprep.subr.bf16.mxu0 0
        %4892 = vmatpush1.bf16.msra.mxu0 %v4738
        %4893 = vmatprep.subr.bf16.mxu0 0
        %4894 = vmatpush1.bf16.msra.mxu0 %v4739
        %4895 = vmatprep.subr.bf16.mxu0 0
        %4896 = vmatpush1.bf16.msra.mxu0 %v4740
        %4897 = vmatprep.subr.bf16.mxu0 0
        %4898 = vmatpush1.bf16.msra.mxu0 %v4741
        %4899 = vmatprep.subr.bf16.mxu0 0
        %4900 = vmatpush1.bf16.msra.mxu0 %v4742
        %4901 = vmatprep.subr.bf16.mxu0 0
        %4902 = vmatpush1.bf16.msra.mxu0 %v4743
        %4903 = vmatprep.subr.bf16.mxu0 0
        %4904 = vmatpush1.bf16.msra.mxu0 %v4744
        %4905 = vmatprep.mubr.bf16.mxu0 %v4147
        %4906 = vmatmul.mubr.bf16.gmra.mrb[0].mxu0 %v4146
        %v4907 = vpop.f32.mrb[0].mxu0
        %v4908 = vadd.f32 %v4439, %v4907
        %v4909 = vpop.f32.mrb[0].mxu0
        %v4910 = vpop.f32.mrb[0].mxu0
        %v4911 = vadd.f32 %v4439, %v4910
        %v4912 = vpop.f32.mrb[0].mxu0
        %4913 = vmatprep.mubr.bf16.mxu0 %v4156
        %4914 = vmatmul.mubr.bf16.gmra.mrb[0].mxu0 %v4155
        %v4915 = vpop.f32.mrb[0].mxu0
        %v4916 = vadd.f32 %v4439, %v4915
        %v4917 = vpop.f32.mrb[0].mxu0
        %v4918 = vpop.f32.mrb[0].mxu0
        %v4919 = vadd.f32 %v4439, %v4918
        %v4920 = vpop.f32.mrb[0].mxu0
        %4921 = vmatprep.mubr.bf16.mxu0 %v4165
        %4922 = vmatmul.mubr.bf16.gmra.mrb[0].mxu0 %v4164
        %v4923 = vpop.f32.mrb[0].mxu0
        %v4924 = vadd.f32 %v4439, %v4923
        %v4925 = vpop.f32.mrb[0].mxu0
        %v4926 = vpop.f32.mrb[0].mxu0
        %v4927 = vadd.f32 %v4439, %v4926
        %v4928 = vpop.f32.mrb[0].mxu0
        %4929 = vmatprep.mubr.bf16.mxu0 %v4174
        %4930 = vmatmul.mubr.bf16.gmra.mrb[0].mxu0 %v4173
        %v4931 = vpop.f32.mrb[0].mxu0
        %v4932 = vadd.f32 %v4439, %v4931
        %v4933 = vpop.f32.mrb[0].mxu0
        %v4934 = vpop.f32.mrb[0].mxu0
        %v4935 = vadd.f32 %v4439, %v4934
        %v4936 = vpop.f32.mrb[0].mxu0
        %4937 = vmatprep.mubr.bf16.mxu0 %v4183
        %4938 = vmatmul.mubr.bf16.gmra.mrb[0].mxu0 %v4182
        %v4939 = vpop.f32.mrb[0].mxu0
        %v4940 = vadd.f32 %v4439, %v4939
        %v4941 = vpop.f32.mrb[0].mxu0
        %v4942 = vpop.f32.mrb[0].mxu0
        %v4943 = vadd.f32 %v4439, %v4942
        %v4944 = vpop.f32.mrb[0].mxu0
        %4945 = vmatprep.mubr.bf16.mxu0 %v4192
        %4946 = vmatmul.mubr.bf16.gmra.mrb[0].mxu0 %v4191
        %v4947 = vpop.f32.mrb[0].mxu0
        %v4948 = vadd.f32 %v4439, %v4947
        %v4949 = vpop.f32.mrb[0].mxu0
        %v4950 = vpop.f32.mrb[0].mxu0
        %v4951 = vadd.f32 %v4439, %v4950
        %v4952 = vpop.f32.mrb[0].mxu0
        %4953 = vmatprep.mubr.bf16.mxu0 %v4201
        %4954 = vmatmul.mubr.bf16.gmra.mrb[0].mxu0 %v4200
        %v4955 = vpop.f32.mrb[0].mxu0
        %v4956 = vadd.f32 %v4439, %v4955
        %v4957 = vpop.f32.mrb[0].mxu0
        %v4958 = vpop.f32.mrb[0].mxu0
        %v4959 = vadd.f32 %v4439, %v4958
        %v4960 = vpop.f32.mrb[0].mxu0
        %4961 = vmatprep.mubr.bf16.mxu0 %v4210
        %4962 = vmatmul.mubr.bf16.gmra.mrb[0].mxu0 %v4209
        %v4963 = vpop.f32.mrb[0].mxu0
        %v4964 = vadd.f32 %v4439, %v4963
        %v4965 = vpop.f32.mrb[0].mxu0
        %v4966 = vpop.f32.mrb[0].mxu0
        %v4967 = vadd.f32 %v4439, %v4966
        %v4968 = vpop.f32.mrb[0].mxu0
        %4969 = vmatprep.mubr.bf16.mxu0 %v4219
        %4970 = vmatmul.mubr.bf16.gmra.mrb[0].mxu0 %v4218
        %v4971 = vpop.f32.mrb[0].mxu0
        %v4972 = vadd.f32 %v4439, %v4971
        %v4973 = vpop.f32.mrb[0].mxu0
        %v4974 = vpop.f32.mrb[0].mxu0
        %v4975 = vadd.f32 %v4439, %v4974
        %v4976 = vpop.f32.mrb[0].mxu0
        %4977 = vmatprep.mubr.bf16.mxu0 %v4228
        %4978 = vmatmul.mubr.bf16.gmra.mrb[0].mxu0 %v4227
        %v4979 = vpop.f32.mrb[0].mxu0
        %v4980 = vadd.f32 %v4439, %v4979
        %v4981 = vpop.f32.mrb[0].mxu0
        %v4982 = vpop.f32.mrb[0].mxu0
        %v4983 = vadd.f32 %v4439, %v4982
        %v4984 = vpop.f32.mrb[0].mxu0
        %4985 = vmatprep.mubr.bf16.mxu0 %v4237
        %4986 = vmatmul.mubr.bf16.gmra.mrb[0].mxu0 %v4236
        %v4987 = vpop.f32.mrb[0].mxu0
        %v4988 = vadd.f32 %v4439, %v4987
        %v4989 = vpop.f32.mrb[0].mxu0
        %v4990 = vpop.f32.mrb[0].mxu0
        %v4991 = vadd.f32 %v4439, %v4990
        %v4992 = vpop.f32.mrb[0].mxu0
        %4993 = vmatprep.mubr.bf16.mxu0 %v4246
        %4994 = vmatmul.mubr.bf16.gmra.mrb[0].mxu0 %v4245
        %v4995 = vpop.f32.mrb[0].mxu0
        %v4996 = vadd.f32 %v4439, %v4995
        %v4997 = vpop.f32.mrb[0].mxu0
        %v4998 = vpop.f32.mrb[0].mxu0
        %v4999 = vadd.f32 %v4439, %v4998
        %v5000 = vpop.f32.mrb[0].mxu0
        %5001 = vmatprep.mubr.bf16.mxu0 %v4255
        %5002 = vmatmul.mubr.bf16.gmra.mrb[0].mxu0 %v4254
        %v5003 = vpop.f32.mrb[0].mxu0
        %v5004 = vadd.f32 %v4439, %v5003
        %v5005 = vpop.f32.mrb[0].mxu0
        %v5006 = vpop.f32.mrb[0].mxu0
        %v5007 = vadd.f32 %v4439, %v5006
        %v5008 = vpop.f32.mrb[0].mxu0
        %5009 = vmatprep.mubr.bf16.mxu0 %v4264
        %5010 = vmatmul.mubr.bf16.gmra.mrb[0].mxu0 %v4263
        %v5011 = vpop.f32.mrb[0].mxu0
        %v5012 = vadd.f32 %v4439, %v5011
        %v5013 = vpop.f32.mrb[0].mxu0
        %v5014 = vpop.f32.mrb[0].mxu0
        %v5015 = vadd.f32 %v4439, %v5014
        %v5016 = vpop.f32.mrb[0].mxu0
        %5017 = vmatprep.mubr.bf16.mxu0 %v4273
        %5018 = vmatmul.mubr.bf16.gmra.mrb[0].mxu0 %v4272
        %v5019 = vpop.f32.mrb[0].mxu0
        %v5020 = vadd.f32 %v4439, %v5019
        %v5021 = vpop.f32.mrb[0].mxu0
        %v5022 = vpop.f32.mrb[0].mxu0
        %v5023 = vadd.f32 %v4439, %v5022
        %v5024 = vpop.f32.mrb[0].mxu0
        %5025 = vmatprep.mubr.bf16.mxu0 %v4282
        %5026 = vmatmul.mubr.bf16.gmra.mrb[0].mxu0 %v4281
        %v5027 = vpop.f32.mrb[0].mxu0
        %v5028 = vadd.f32 %v4439, %v5027
        %v5029 = vpop.f32.mrb[0].mxu0
        %v5030 = vpop.f32.mrb[0].mxu0
        %v5031 = vadd.f32 %v4439, %v5030
        %v5032 = vpop.f32.mrb[0].mxu0
        %5033 = vdwg.mxu0
        %5034 = vmatprep.subr.bf16.mxu0 0
        %5035 = vmatpush1.bf16.msra.mxu0 %v4745
        %5036 = vmatprep.subr.bf16.mxu0 0
        %5037 = vmatpush1.bf16.msra.mxu0 %v4746
        %5038 = vmatprep.subr.bf16.mxu0 0
        %5039 = vmatpush1.bf16.msra.mxu0 %v4747
        %5040 = vmatprep.subr.bf16.mxu0 0
        %5041 = vmatpush1.bf16.msra.mxu0 %v4748
        %5042 = vmatprep.subr.bf16.mxu0 0
        %5043 = vmatpush1.bf16.msra.mxu0 %v4749
        %5044 = vmatprep.subr.bf16.mxu0 0
        %5045 = vmatpush1.bf16.msra.mxu0 %v4750
        %5046 = vmatprep.subr.bf16.mxu0 0
        %5047 = vmatpush1.bf16.msra.mxu0 %v4751
        %5048 = vmatprep.subr.bf16.mxu0 0
        %5049 = vmatpush1.bf16.msra.mxu0 %v4752
        %5050 = vmatprep.subr.bf16.mxu0 0
        %5051 = vmatpush1.bf16.msra.mxu0 %v4753
        %5052 = vmatprep.subr.bf16.mxu0 0
        %5053 = vmatpush1.bf16.msra.mxu0 %v4754
        %5054 = vmatprep.subr.bf16.mxu0 0
        %5055 = vmatpush1.bf16.msra.mxu0 %v4755
        %5056 = vmatprep.subr.bf16.mxu0 0
        %5057 = vmatpush1.bf16.msra.mxu0 %v4756
        %5058 = vmatprep.subr.bf16.mxu0 0
        %5059 = vmatpush1.bf16.msra.mxu0 %v4757
        %5060 = vmatprep.subr.bf16.mxu0 0
        %5061 = vmatpush1.bf16.msra.mxu0 %v4758
        %5062 = vmatprep.subr.bf16.mxu0 0
        %5063 = vmatpush1.bf16.msra.mxu0 %v4759
        %5064 = vmatprep.subr.bf16.mxu0 0
        %5065 = vmatpush1.bf16.msra.mxu0 %v4760
        %5066 = vmatprep.mubr.bf16.mxu0 %v4149
        %5067 = vmatmul.mubr.bf16.gmra.mrb[0].mxu0 %v4148
        %v5068 = vpop.f32.mrb[0].mxu0
        %v5069 = vadd.f32 %v4908, %v5068
        %v5070 = vpop.f32.mrb[0].mxu0
        %v5071 = vpop.f32.mrb[0].mxu0
        %v5072 = vadd.f32 %v4911, %v5071
        %v5073 = vpop.f32.mrb[0].mxu0
        %5074 = vmatprep.mubr.bf16.mxu0 %v4158
        %5075 = vmatmul.mubr.bf16.gmra.mrb[0].mxu0 %v4157
        %v5076 = vpop.f32.mrb[0].mxu0
        %v5077 = vadd.f32 %v4916, %v5076
        %v5078 = vpop.f32.mrb[0].mxu0
        %v5079 = vpop.f32.mrb[0].mxu0
        %v5080 = vadd.f32 %v4919, %v5079
        %v5081 = vpop.f32.mrb[0].mxu0
        %5082 = vmatprep.mubr.bf16.mxu0 %v4167
        %5083 = vmatmul.mubr.bf16.gmra.mrb[0].mxu0 %v4166
        %v5084 = vpop.f32.mrb[0].mxu0
        %v5085 = vadd.f32 %v4924, %v5084
        %v5086 = vpop.f32.mrb[0].mxu0
        %v5087 = vpop.f32.mrb[0].mxu0
        %v5088 = vadd.f32 %v4927, %v5087
        %v5089 = vpop.f32.mrb[0].mxu0
        %5090 = vmatprep.mubr.bf16.mxu0 %v4176
        %5091 = vmatmul.mubr.bf16.gmra.mrb[0].mxu0 %v4175
        %v5092 = vpop.f32.mrb[0].mxu0
        %v5093 = vadd.f32 %v4932, %v5092
        %v5094 = vpop.f32.mrb[0].mxu0
        %v5095 = vpop.f32.mrb[0].mxu0
        %v5096 = vadd.f32 %v4935, %v5095
        %v5097 = vpop.f32.mrb[0].mxu0
        %5098 = vmatprep.mubr.bf16.mxu0 %v4185
        %5099 = vmatmul.mubr.bf16.gmra.mrb[0].mxu0 %v4184
        %v5100 = vpop.f32.mrb[0].mxu0
        %v5101 = vadd.f32 %v4940, %v5100
        %v5102 = vpop.f32.mrb[0].mxu0
        %v5103 = vpop.f32.mrb[0].mxu0
        %v5104 = vadd.f32 %v4943, %v5103
        %v5105 = vpop.f32.mrb[0].mxu0
        %5106 = vmatprep.mubr.bf16.mxu0 %v4194
        %5107 = vmatmul.mubr.bf16.gmra.mrb[0].mxu0 %v4193
        %v5108 = vpop.f32.mrb[0].mxu0
        %v5109 = vadd.f32 %v4948, %v5108
        %v5110 = vpop.f32.mrb[0].mxu0
        %v5111 = vpop.f32.mrb[0].mxu0
        %v5112 = vadd.f32 %v4951, %v5111
        %v5113 = vpop.f32.mrb[0].mxu0
        %5114 = vmatprep.mubr.bf16.mxu0 %v4203
        %5115 = vmatmul.mubr.bf16.gmra.mrb[0].mxu0 %v4202
        %v5116 = vpop.f32.mrb[0].mxu0
        %v5117 = vadd.f32 %v4956, %v5116
        %v5118 = vpop.f32.mrb[0].mxu0
        %v5119 = vpop.f32.mrb[0].mxu0
        %v5120 = vadd.f32 %v4959, %v5119
        %v5121 = vpop.f32.mrb[0].mxu0
        %5122 = vmatprep.mubr.bf16.mxu0 %v4212
        %5123 = vmatmul.mubr.bf16.gmra.mrb[0].mxu0 %v4211
        %v5124 = vpop.f32.mrb[0].mxu0
        %v5125 = vadd.f32 %v4964, %v5124
        %v5126 = vpop.f32.mrb[0].mxu0
        %v5127 = vpop.f32.mrb[0].mxu0
        %v5128 = vadd.f32 %v4967, %v5127
        %v5129 = vpop.f32.mrb[0].mxu0
        %5130 = vmatprep.mubr.bf16.mxu0 %v4221
        %5131 = vmatmul.mubr.bf16.gmra.mrb[0].mxu0 %v4220
        %v5132 = vpop.f32.mrb[0].mxu0
        %v5133 = vadd.f32 %v4972, %v5132
        %v5134 = vpop.f32.mrb[0].mxu0
        %v5135 = vpop.f32.mrb[0].mxu0
        %v5136 = vadd.f32 %v4975, %v5135
        %v5137 = vpop.f32.mrb[0].mxu0
        %5138 = vmatprep.mubr.bf16.mxu0 %v4230
        %5139 = vmatmul.mubr.bf16.gmra.mrb[0].mxu0 %v4229
        %v5140 = vpop.f32.mrb[0].mxu0
        %v5141 = vadd.f32 %v4980, %v5140
        %v5142 = vpop.f32.mrb[0].mxu0
        %v5143 = vpop.f32.mrb[0].mxu0
        %v5144 = vadd.f32 %v4983, %v5143
        %v5145 = vpop.f32.mrb[0].mxu0
        %5146 = vmatprep.mubr.bf16.mxu0 %v4239
        %5147 = vmatmul.mubr.bf16.gmra.mrb[0].mxu0 %v4238
        %v5148 = vpop.f32.mrb[0].mxu0
        %v5149 = vadd.f32 %v4988, %v5148
        %v5150 = vpop.f32.mrb[0].mxu0
        %v5151 = vpop.f32.mrb[0].mxu0
        %v5152 = vadd.f32 %v4991, %v5151
        %v5153 = vpop.f32.mrb[0].mxu0
        %5154 = vmatprep.mubr.bf16.mxu0 %v4248
        %5155 = vmatmul.mubr.bf16.gmra.mrb[0].mxu0 %v4247
        %v5156 = vpop.f32.mrb[0].mxu0
        %v5157 = vadd.f32 %v4996, %v5156
        %v5158 = vpop.f32.mrb[0].mxu0
        %v5159 = vpop.f32.mrb[0].mxu0
        %v5160 = vadd.f32 %v4999, %v5159
        %v5161 = vpop.f32.mrb[0].mxu0
        %5162 = vmatprep.mubr.bf16.mxu0 %v4257
        %5163 = vmatmul.mubr.bf16.gmra.mrb[0].mxu0 %v4256
        %v5164 = vpop.f32.mrb[0].mxu0
        %v5165 = vadd.f32 %v5004, %v5164
        %v5166 = vpop.f32.mrb[0].mxu0
        %v5167 = vpop.f32.mrb[0].mxu0
        %v5168 = vadd.f32 %v5007, %v5167
        %v5169 = vpop.f32.mrb[0].mxu0
        %5170 = vmatprep.mubr.bf16.mxu0 %v4266
        %5171 = vmatmul.mubr.bf16.gmra.mrb[0].mxu0 %v4265
        %v5172 = vpop.f32.mrb[0].mxu0
        %v5173 = vadd.f32 %v5012, %v5172
        %v5174 = vpop.f32.mrb[0].mxu0
        %v5175 = vpop.f32.mrb[0].mxu0
        %v5176 = vadd.f32 %v5015, %v5175
        %v5177 = vpop.f32.mrb[0].mxu0
        %5178 = vmatprep.mubr.bf16.mxu0 %v4275
        %5179 = vmatmul.mubr.bf16.gmra.mrb[0].mxu0 %v4274
        %v5180 = vpop.f32.mrb[0].mxu0
        %v5181 = vadd.f32 %v5020, %v5180
        %v5182 = vpop.f32.mrb[0].mxu0
        %v5183 = vpop.f32.mrb[0].mxu0
        %v5184 = vadd.f32 %v5023, %v5183
        %v5185 = vpop.f32.mrb[0].mxu0
        %5186 = vmatprep.mubr.bf16.mxu0 %v4284
        %5187 = vmatmul.mubr.bf16.gmra.mrb[0].mxu0 %v4283
        %v5188 = vpop.f32.mrb[0].mxu0
        %v5189 = vadd.f32 %v5028, %v5188
        %v5190 = vpop.f32.mrb[0].mxu0
        %v5191 = vpop.f32.mrb[0].mxu0
        %v5192 = vadd.f32 %v5031, %v5191
        %v5193 = vpop.f32.mrb[0].mxu0
        %5194 = vdwg.mxu0
        %5195 = vmatprep.subr.bf16.mxu0 0
        %5196 = vmatpush1.bf16.msra.mxu0 %v4761
        %5197 = vmatprep.subr.bf16.mxu0 0
        %5198 = vmatpush1.bf16.msra.mxu0 %v4762
        %5199 = vmatprep.subr.bf16.mxu0 0
        %5200 = vmatpush1.bf16.msra.mxu0 %v4763
        %5201 = vmatprep.subr.bf16.mxu0 0
        %5202 = vmatpush1.bf16.msra.mxu0 %v4764
        %5203 = vmatprep.subr.bf16.mxu0 0
        %5204 = vmatpush1.bf16.msra.mxu0 %v4765
        %5205 = vmatprep.subr.bf16.mxu0 0
        %5206 = vmatpush1.bf16.msra.mxu0 %v4766
        %5207 = vmatprep.subr.bf16.mxu0 0
        %5208 = vmatpush1.bf16.msra.mxu0 %v4767
        %5209 = vmatprep.subr.bf16.mxu0 0
        %5210 = vmatpush1.bf16.msra.mxu0 %v4768
        %5211 = vmatprep.subr.bf16.mxu0 0
        %5212 = vmatpush1.bf16.msra.mxu0 %v4769
        %5213 = vmatprep.subr.bf16.mxu0 0
        %5214 = vmatpush1.bf16.msra.mxu0 %v4770
        %5215 = vmatprep.subr.bf16.mxu0 0
        %5216 = vmatpush1.bf16.msra.mxu0 %v4771
        %5217 = vmatprep.subr.bf16.mxu0 0
        %5218 = vmatpush1.bf16.msra.mxu0 %v4772
        %5219 = vmatprep.subr.bf16.mxu0 0
        %5220 = vmatpush1.bf16.msra.mxu0 %v4773
        %5221 = vmatprep.subr.bf16.mxu0 0
        %5222 = vmatpush1.bf16.msra.mxu0 %v4774
        %5223 = vmatprep.subr.bf16.mxu0 0
        %5224 = vmatpush1.bf16.msra.mxu0 %v4775
        %5225 = vmatprep.subr.bf16.mxu0 0
        %5226 = vmatpush1.bf16.msra.mxu0 %v4776
        %5227 = vmatprep.mubr.bf16.mxu0 %v4151
        %5228 = vmatmul.mubr.bf16.gmra.mrb[0].mxu0 %v4150
        %v5229 = vpop.f32.mrb[0].mxu0
        %v5230 = vadd.f32 %v5069, %v5229
        %v5231 = vpop.f32.mrb[0].mxu0
        %v5232 = vpop.f32.mrb[0].mxu0
        %v5233 = vadd.f32 %v5072, %v5232
        %v5234 = vpop.f32.mrb[0].mxu0
        %5235 = vmatprep.mubr.bf16.mxu0 %v4160
        %5236 = vmatmul.mubr.bf16.gmra.mrb[0].mxu0 %v4159
        %v5237 = vpop.f32.mrb[0].mxu0
        %v5238 = vadd.f32 %v5077, %v5237
        %v5239 = vpop.f32.mrb[0].mxu0
        %v5240 = vpop.f32.mrb[0].mxu0
        %v5241 = vadd.f32 %v5080, %v5240
        %v5242 = vpop.f32.mrb[0].mxu0
        %5243 = vmatprep.mubr.bf16.mxu0 %v4169
        %5244 = vmatmul.mubr.bf16.gmra.mrb[0].mxu0 %v4168
        %v5245 = vpop.f32.mrb[0].mxu0
        %v5246 = vadd.f32 %v5085, %v5245
        %v5247 = vpop.f32.mrb[0].mxu0
        %v5248 = vpop.f32.mrb[0].mxu0
        %v5249 = vadd.f32 %v5088, %v5248
        %v5250 = vpop.f32.mrb[0].mxu0
        %5251 = vmatprep.mubr.bf16.mxu0 %v4178
        %5252 = vmatmul.mubr.bf16.gmra.mrb[0].mxu0 %v4177
        %v5253 = vpop.f32.mrb[0].mxu0
        %v5254 = vadd.f32 %v5093, %v5253
        %v5255 = vpop.f32.mrb[0].mxu0
        %v5256 = vpop.f32.mrb[0].mxu0
        %v5257 = vadd.f32 %v5096, %v5256
        %v5258 = vpop.f32.mrb[0].mxu0
        %5259 = vmatprep.mubr.bf16.mxu0 %v4187
        %5260 = vmatmul.mubr.bf16.gmra.mrb[0].mxu0 %v4186
        %v5261 = vpop.f32.mrb[0].mxu0
        %v5262 = vadd.f32 %v5101, %v5261
        %v5263 = vpop.f32.mrb[0].mxu0
        %v5264 = vpop.f32.mrb[0].mxu0
        %v5265 = vadd.f32 %v5104, %v5264
        %v5266 = vpop.f32.mrb[0].mxu0
        %5267 = vmatprep.mubr.bf16.mxu0 %v4196
        %5268 = vmatmul.mubr.bf16.gmra.mrb[0].mxu0 %v4195
        %v5269 = vpop.f32.mrb[0].mxu0
        %v5270 = vadd.f32 %v5109, %v5269
        %v5271 = vpop.f32.mrb[0].mxu0
        %v5272 = vpop.f32.mrb[0].mxu0
        %v5273 = vadd.f32 %v5112, %v5272
        %v5274 = vpop.f32.mrb[0].mxu0
        %5275 = vmatprep.mubr.bf16.mxu0 %v4205
        %5276 = vmatmul.mubr.bf16.gmra.mrb[0].mxu0 %v4204
        %v5277 = vpop.f32.mrb[0].mxu0
        %v5278 = vadd.f32 %v5117, %v5277
        %v5279 = vpop.f32.mrb[0].mxu0
        %v5280 = vpop.f32.mrb[0].mxu0
        %v5281 = vadd.f32 %v5120, %v5280
        %v5282 = vpop.f32.mrb[0].mxu0
        %5283 = vmatprep.mubr.bf16.mxu0 %v4214
        %5284 = vmatmul.mubr.bf16.gmra.mrb[0].mxu0 %v4213
        %v5285 = vpop.f32.mrb[0].mxu0
        %v5286 = vadd.f32 %v5125, %v5285
        %v5287 = vpop.f32.mrb[0].mxu0
        %v5288 = vpop.f32.mrb[0].mxu0
        %v5289 = vadd.f32 %v5128, %v5288
        %v5290 = vpop.f32.mrb[0].mxu0
        %5291 = vmatprep.mubr.bf16.mxu0 %v4223
        %5292 = vmatmul.mubr.bf16.gmra.mrb[0].mxu0 %v4222
        %v5293 = vpop.f32.mrb[0].mxu0
        %v5294 = vadd.f32 %v5133, %v5293
        %v5295 = vpop.f32.mrb[0].mxu0
        %v5296 = vpop.f32.mrb[0].mxu0
        %v5297 = vadd.f32 %v5136, %v5296
        %v5298 = vpop.f32.mrb[0].mxu0
        %5299 = vmatprep.mubr.bf16.mxu0 %v4232
        %5300 = vmatmul.mubr.bf16.gmra.mrb[0].mxu0 %v4231
        %v5301 = vpop.f32.mrb[0].mxu0
        %v5302 = vadd.f32 %v5141, %v5301
        %v5303 = vpop.f32.mrb[0].mxu0
        %v5304 = vpop.f32.mrb[0].mxu0
        %v5305 = vadd.f32 %v5144, %v5304
        %v5306 = vpop.f32.mrb[0].mxu0
        %5307 = vmatprep.mubr.bf16.mxu0 %v4241
        %5308 = vmatmul.mubr.bf16.gmra.mrb[0].mxu0 %v4240
        %v5309 = vpop.f32.mrb[0].mxu0
        %v5310 = vadd.f32 %v5149, %v5309
        %v5311 = vpop.f32.mrb[0].mxu0
        %v5312 = vpop.f32.mrb[0].mxu0
        %v5313 = vadd.f32 %v5152, %v5312
        %v5314 = vpop.f32.mrb[0].mxu0
        %5315 = vmatprep.mubr.bf16.mxu0 %v4250
        %5316 = vmatmul.mubr.bf16.gmra.mrb[0].mxu0 %v4249
        %v5317 = vpop.f32.mrb[0].mxu0
        %v5318 = vadd.f32 %v5157, %v5317
        %v5319 = vpop.f32.mrb[0].mxu0
        %v5320 = vpop.f32.mrb[0].mxu0
        %v5321 = vadd.f32 %v5160, %v5320
        %v5322 = vpop.f32.mrb[0].mxu0
        %5323 = vmatprep.mubr.bf16.mxu0 %v4259
        %5324 = vmatmul.mubr.bf16.gmra.mrb[0].mxu0 %v4258
        %v5325 = vpop.f32.mrb[0].mxu0
        %v5326 = vadd.f32 %v5165, %v5325
        %v5327 = vpop.f32.mrb[0].mxu0
        %v5328 = vpop.f32.mrb[0].mxu0
        %v5329 = vadd.f32 %v5168, %v5328
        %v5330 = vpop.f32.mrb[0].mxu0
        %5331 = vmatprep.mubr.bf16.mxu0 %v4268
        %5332 = vmatmul.mubr.bf16.gmra.mrb[0].mxu0 %v4267
        %v5333 = vpop.f32.mrb[0].mxu0
        %v5334 = vadd.f32 %v5173, %v5333
        %v5335 = vpop.f32.mrb[0].mxu0
        %v5336 = vpop.f32.mrb[0].mxu0
        %v5337 = vadd.f32 %v5176, %v5336
        %v5338 = vpop.f32.mrb[0].mxu0
        %5339 = vmatprep.mubr.bf16.mxu0 %v4277
        %5340 = vmatmul.mubr.bf16.gmra.mrb[0].mxu0 %v4276
        %v5341 = vpop.f32.mrb[0].mxu0
        %v5342 = vadd.f32 %v5181, %v5341
        %v5343 = vpop.f32.mrb[0].mxu0
        %v5344 = vpop.f32.mrb[0].mxu0
        %v5345 = vadd.f32 %v5184, %v5344
        %v5346 = vpop.f32.mrb[0].mxu0
        %5347 = vmatprep.mubr.bf16.mxu0 %v4286
        %5348 = vmatmul.mubr.bf16.gmra.mrb[0].mxu0 %v4285
        %v5349 = vpop.f32.mrb[0].mxu0
        %v5350 = vadd.f32 %v5189, %v5349
        %v5351 = vpop.f32.mrb[0].mxu0
        %v5352 = vpop.f32.mrb[0].mxu0
        %v5353 = vadd.f32 %v5192, %v5352
        %v5354 = vpop.f32.mrb[0].mxu0
        %5355 = vdwg.mxu0
        %5356 = vmatprep.subr.bf16.mxu0 0
        %5357 = vmatpush1.bf16.msra.mxu0 %v4777
        %5358 = vmatprep.subr.bf16.mxu0 0
        %5359 = vmatpush1.bf16.msra.mxu0 %v4778
        %5360 = vmatprep.subr.bf16.mxu0 0
        %5361 = vmatpush1.bf16.msra.mxu0 %v4779
        %5362 = vmatprep.subr.bf16.mxu0 0
        %5363 = vmatpush1.bf16.msra.mxu0 %v4780
        %5364 = vmatprep.subr.bf16.mxu0 0
        %5365 = vmatpush1.bf16.msra.mxu0 %v4781
        %5366 = vmatprep.subr.bf16.mxu0 0
        %5367 = vmatpush1.bf16.msra.mxu0 %v4782
        %5368 = vmatprep.subr.bf16.mxu0 0
        %5369 = vmatpush1.bf16.msra.mxu0 %v4783
        %5370 = vmatprep.subr.bf16.mxu0 0
        %5371 = vmatpush1.bf16.msra.mxu0 %v4784
        %5372 = vmatprep.subr.bf16.mxu0 0
        %5373 = vmatpush1.bf16.msra.mxu0 %v4785
        %5374 = vmatprep.subr.bf16.mxu0 0
        %5375 = vmatpush1.bf16.msra.mxu0 %v4786
        %5376 = vmatprep.subr.bf16.mxu0 0
        %5377 = vmatpush1.bf16.msra.mxu0 %v4787
        %5378 = vmatprep.subr.bf16.mxu0 0
        %5379 = vmatpush1.bf16.msra.mxu0 %v4788
        %5380 = vmatprep.subr.bf16.mxu0 0
        %5381 = vmatpush1.bf16.msra.mxu0 %v4789
        %5382 = vmatprep.subr.bf16.mxu0 0
        %5383 = vmatpush1.bf16.msra.mxu0 %v4790
        %5384 = vmatprep.subr.bf16.mxu0 0
        %5385 = vmatpush1.bf16.msra.mxu0 %v4791
        %5386 = vmatprep.subr.bf16.mxu0 0
        %5387 = vmatpush1.bf16.msra.mxu0 %v4792
        %5388 = vmatprep.mubr.bf16.mxu0 %v4153
        %5389 = vmatmul.mubr.bf16.gmra.mrb[0].mxu0 %v4152
        %v5390 = vpop.f32.mrb[0].mxu0
        %v5391 = vadd.f32 %v5230, %v5390
        %v5392 = vpop.f32.mrb[0].mxu0
        %v5393 = vpop.f32.mrb[0].mxu0
        %v5394 = vadd.f32 %v5233, %v5393
        %v5395 = vpop.f32.mrb[0].mxu0
        %5396 = vmatprep.mubr.bf16.mxu0 %v4162
        %5397 = vmatmul.mubr.bf16.gmra.mrb[0].mxu0 %v4161
        %v5398 = vpop.f32.mrb[0].mxu0
        %v5399 = vadd.f32 %v5238, %v5398
        %v5400 = vpop.f32.mrb[0].mxu0
        %v5401 = vpop.f32.mrb[0].mxu0
        %v5402 = vadd.f32 %v5241, %v5401
        %v5403 = vpop.f32.mrb[0].mxu0
        %5404 = vmatprep.mubr.bf16.mxu0 %v4171
        %5405 = vmatmul.mubr.bf16.gmra.mrb[0].mxu0 %v4170
        %v5406 = vpop.f32.mrb[0].mxu0
        %v5407 = vadd.f32 %v5246, %v5406
        %v5408 = vpop.f32.mrb[0].mxu0
        %v5409 = vpop.f32.mrb[0].mxu0
        %v5410 = vadd.f32 %v5249, %v5409
        %v5411 = vpop.f32.mrb[0].mxu0
        %5412 = vmatprep.mubr.bf16.mxu0 %v4180
        %5413 = vmatmul.mubr.bf16.gmra.mrb[0].mxu0 %v4179
        %v5414 = vpop.f32.mrb[0].mxu0
        %v5415 = vadd.f32 %v5254, %v5414
        %v5416 = vpop.f32.mrb[0].mxu0
        %v5417 = vpop.f32.mrb[0].mxu0
        %v5418 = vadd.f32 %v5257, %v5417
        %v5419 = vpop.f32.mrb[0].mxu0
        %5420 = vmatprep.mubr.bf16.mxu0 %v4189
        %5421 = vmatmul.mubr.bf16.gmra.mrb[0].mxu0 %v4188
        %v5422 = vpop.f32.mrb[0].mxu0
        %v5423 = vadd.f32 %v5262, %v5422
        %v5424 = vpop.f32.mrb[0].mxu0
        %v5425 = vpop.f32.mrb[0].mxu0
        %v5426 = vadd.f32 %v5265, %v5425
        %v5427 = vpop.f32.mrb[0].mxu0
        %5428 = vmatprep.mubr.bf16.mxu0 %v4198
        %5429 = vmatmul.mubr.bf16.gmra.mrb[0].mxu0 %v4197
        %v5430 = vpop.f32.mrb[0].mxu0
        %v5431 = vadd.f32 %v5270, %v5430
        %v5432 = vpop.f32.mrb[0].mxu0
        %v5433 = vpop.f32.mrb[0].mxu0
        %v5434 = vadd.f32 %v5273, %v5433
        %v5435 = vpop.f32.mrb[0].mxu0
        %5436 = vmatprep.mubr.bf16.mxu0 %v4207
        %5437 = vmatmul.mubr.bf16.gmra.mrb[0].mxu0 %v4206
        %v5438 = vpop.f32.mrb[0].mxu0
        %v5439 = vadd.f32 %v5278, %v5438
        %v5440 = vpop.f32.mrb[0].mxu0
        %v5441 = vpop.f32.mrb[0].mxu0
        %v5442 = vadd.f32 %v5281, %v5441
        %v5443 = vpop.f32.mrb[0].mxu0
        %5444 = vmatprep.mubr.bf16.mxu0 %v4216
        %5445 = vmatmul.mubr.bf16.gmra.mrb[0].mxu0 %v4215
        %v5446 = vpop.f32.mrb[0].mxu0
        %v5447 = vadd.f32 %v5286, %v5446
        %v5448 = vpop.f32.mrb[0].mxu0
        %v5449 = vpop.f32.mrb[0].mxu0
        %v5450 = vadd.f32 %v5289, %v5449
        %v5451 = vpop.f32.mrb[0].mxu0
        %5452 = vmatprep.mubr.bf16.mxu0 %v4225
        %5453 = vmatmul.mubr.bf16.gmra.mrb[0].mxu0 %v4224
        %v5454 = vpop.f32.mrb[0].mxu0
        %v5455 = vadd.f32 %v5294, %v5454
        %v5456 = vpop.f32.mrb[0].mxu0
        %v5457 = vpop.f32.mrb[0].mxu0
        %v5458 = vadd.f32 %v5297, %v5457
        %v5459 = vpop.f32.mrb[0].mxu0
        %5460 = vmatprep.mubr.bf16.mxu0 %v4234
        %5461 = vmatmul.mubr.bf16.gmra.mrb[0].mxu0 %v4233
        %v5462 = vpop.f32.mrb[0].mxu0
        %v5463 = vadd.f32 %v5302, %v5462
        %v5464 = vpop.f32.mrb[0].mxu0
        %v5465 = vpop.f32.mrb[0].mxu0
        %v5466 = vadd.f32 %v5305, %v5465
        %v5467 = vpop.f32.mrb[0].mxu0
        %5468 = vmatprep.mubr.bf16.mxu0 %v4243
        %5469 = vmatmul.mubr.bf16.gmra.mrb[0].mxu0 %v4242
        %v5470 = vpop.f32.mrb[0].mxu0
        %v5471 = vadd.f32 %v5310, %v5470
        %v5472 = vpop.f32.mrb[0].mxu0
        %v5473 = vpop.f32.mrb[0].mxu0
        %v5474 = vadd.f32 %v5313, %v5473
        %v5475 = vpop.f32.mrb[0].mxu0
        %5476 = vmatprep.mubr.bf16.mxu0 %v4252
        %5477 = vmatmul.mubr.bf16.gmra.mrb[0].mxu0 %v4251
        %v5478 = vpop.f32.mrb[0].mxu0
        %v5479 = vadd.f32 %v5318, %v5478
        %v5480 = vpop.f32.mrb[0].mxu0
        %v5481 = vpop.f32.mrb[0].mxu0
        %v5482 = vadd.f32 %v5321, %v5481
        %v5483 = vpop.f32.mrb[0].mxu0
        %5484 = vmatprep.mubr.bf16.mxu0 %v4261
        %5485 = vmatmul.mubr.bf16.gmra.mrb[0].mxu0 %v4260
        %v5486 = vpop.f32.mrb[0].mxu0
        %v5487 = vadd.f32 %v5326, %v5486
        %v5488 = vpop.f32.mrb[0].mxu0
        %v5489 = vpop.f32.mrb[0].mxu0
        %v5490 = vadd.f32 %v5329, %v5489
        %v5491 = vpop.f32.mrb[0].mxu0
        %5492 = vmatprep.mubr.bf16.mxu0 %v4270
        %5493 = vmatmul.mubr.bf16.gmra.mrb[0].mxu0 %v4269
        %v5494 = vpop.f32.mrb[0].mxu0
        %v5495 = vadd.f32 %v5334, %v5494
        %v5496 = vpop.f32.mrb[0].mxu0
        %v5497 = vpop.f32.mrb[0].mxu0
        %v5498 = vadd.f32 %v5337, %v5497
        %v5499 = vpop.f32.mrb[0].mxu0
        %5500 = vmatprep.mubr.bf16.mxu0 %v4279
        %5501 = vmatmul.mubr.bf16.gmra.mrb[0].mxu0 %v4278
        %v5502 = vpop.f32.mrb[0].mxu0
        %v5503 = vadd.f32 %v5342, %v5502
        %v5504 = vpop.f32.mrb[0].mxu0
        %v5505 = vpop.f32.mrb[0].mxu0
        %v5506 = vadd.f32 %v5345, %v5505
        %v5507 = vpop.f32.mrb[0].mxu0
        %5508 = vmatprep.mubr.bf16.mxu0 %v4288
        %5509 = vmatmul.mubr.bf16.gmra.mrb[0].mxu0 %v4287
        %v5510 = vpop.f32.mrb[0].mxu0
        %v5511 = vadd.f32 %v5350, %v5510
        %v5512 = vpop.f32.mrb[0].mxu0
        %v5513 = vpop.f32.mrb[0].mxu0
        %v5514 = vadd.f32 %v5353, %v5513
        %v5515 = vpop.f32.mrb[0].mxu0
        %5516 = vdwg.mxu0
        %5517 = vmatprep.subr.bf16.mxu0 0
        %5518 = vmatpush1.bf16.msra.mxu0 %v4793
        %5519 = vmatprep.subr.bf16.mxu0 0
        %5520 = vmatpush1.bf16.msra.mxu0 %v4794
        %5521 = vmatprep.subr.bf16.mxu0 0
        %5522 = vmatpush1.bf16.msra.mxu0 %v4795
        %5523 = vmatprep.subr.bf16.mxu0 0
        %5524 = vmatpush1.bf16.msra.mxu0 %v4796
        %5525 = vmatprep.subr.bf16.mxu0 0
        %5526 = vmatpush1.bf16.msra.mxu0 %v4797
        %5527 = vmatprep.subr.bf16.mxu0 0
        %5528 = vmatpush1.bf16.msra.mxu0 %v4798
        %5529 = vmatprep.subr.bf16.mxu0 0
        %5530 = vmatpush1.bf16.msra.mxu0 %v4799
        %5531 = vmatprep.subr.bf16.mxu0 0
        %5532 = vmatpush1.bf16.msra.mxu0 %v4800
        %5533 = vmatprep.subr.bf16.mxu0 0
        %5534 = vmatpush1.bf16.msra.mxu0 0
        %5535 = vmatprep.subr.bf16.mxu0 0
        %5536 = vmatpush1.bf16.msra.mxu0 0
        %5537 = vmatprep.subr.bf16.mxu0 0
        %5538 = vmatpush1.bf16.msra.mxu0 0
        %5539 = vmatprep.subr.bf16.mxu0 0
        %5540 = vmatpush1.bf16.msra.mxu0 0
        %5541 = vmatprep.subr.bf16.mxu0 0
        %5542 = vmatpush1.bf16.msra.mxu0 0
        %5543 = vmatprep.subr.bf16.mxu0 0
        %5544 = vmatpush1.bf16.msra.mxu0 0
        %5545 = vmatprep.subr.bf16.mxu0 0
        %5546 = vmatpush1.bf16.msra.mxu0 0
        %5547 = vmatprep.subr.bf16.mxu0 0
        %5548 = vmatpush1.bf16.msra.mxu0 0
        %5549 = vmatprep.mubr.bf16.mxu0 0
        %5550 = vmatmul.mubr.bf16.gmra.mrb[0].mxu0 %v4154
        %v5551 = vpop.f32.mrb[0].mxu0
        %v5552 = vadd.f32 %v5391, %v5551
        %v5553 = vpop.f32.mrb[0].mxu0
        %v5554 = vpop.f32.mrb[0].mxu0
        %v5555 = vadd.f32 %v5394, %v5554
        %v5556 = vpop.f32.mrb[0].mxu0
        %5557 = vmatprep.mubr.bf16.mxu0 0
        %5558 = vmatmul.mubr.bf16.gmra.mrb[0].mxu0 %v4163
        %v5559 = vpop.f32.mrb[0].mxu0
        %v5560 = vadd.f32 %v5399, %v5559
        %v5561 = vpop.f32.mrb[0].mxu0
        %v5562 = vpop.f32.mrb[0].mxu0
        %v5563 = vadd.f32 %v5402, %v5562
        %v5564 = vpop.f32.mrb[0].mxu0
        %5565 = vmatprep.mubr.bf16.mxu0 0
        %5566 = vmatmul.mubr.bf16.gmra.mrb[0].mxu0 %v4172
        %v5567 = vpop.f32.mrb[0].mxu0
        %v5568 = vadd.f32 %v5407, %v5567
        %v5569 = vpop.f32.mrb[0].mxu0
        %v5570 = vpop.f32.mrb[0].mxu0
        %v5571 = vadd.f32 %v5410, %v5570
        %v5572 = vpop.f32.mrb[0].mxu0
        %5573 = vmatprep.mubr.bf16.mxu0 0
        %5574 = vmatmul.mubr.bf16.gmra.mrb[0].mxu0 %v4181
        %v5575 = vpop.f32.mrb[0].mxu0
        %v5576 = vadd.f32 %v5415, %v5575
        %v5577 = vpop.f32.mrb[0].mxu0
        %v5578 = vpop.f32.mrb[0].mxu0
        %v5579 = vadd.f32 %v5418, %v5578
        %v5580 = vpop.f32.mrb[0].mxu0
        %5581 = vmatprep.mubr.bf16.mxu0 0
        %5582 = vmatmul.mubr.bf16.gmra.mrb[0].mxu0 %v4190
        %v5583 = vpop.f32.mrb[0].mxu0
        %v5584 = vadd.f32 %v5423, %v5583
        %v5585 = vpop.f32.mrb[0].mxu0
        %v5586 = vpop.f32.mrb[0].mxu0
        %v5587 = vadd.f32 %v5426, %v5586
        %v5588 = vpop.f32.mrb[0].mxu0
        %5589 = vmatprep.mubr.bf16.mxu0 0
        %5590 = vmatmul.mubr.bf16.gmra.mrb[0].mxu0 %v4199
        %v5591 = vpop.f32.mrb[0].mxu0
        %v5592 = vadd.f32 %v5431, %v5591
        %v5593 = vpop.f32.mrb[0].mxu0
        %v5594 = vpop.f32.mrb[0].mxu0
        %v5595 = vadd.f32 %v5434, %v5594
        %v5596 = vpop.f32.mrb[0].mxu0
        %5597 = vmatprep.mubr.bf16.mxu0 0
        %5598 = vmatmul.mubr.bf16.gmra.mrb[0].mxu0 %v4208
        %v5599 = vpop.f32.mrb[0].mxu0
        %v5600 = vadd.f32 %v5439, %v5599
        %v5601 = vpop.f32.mrb[0].mxu0
        %v5602 = vpop.f32.mrb[0].mxu0
        %v5603 = vadd.f32 %v5442, %v5602
        %v5604 = vpop.f32.mrb[0].mxu0
        %5605 = vmatprep.mubr.bf16.mxu0 0
        %5606 = vmatmul.mubr.bf16.gmra.mrb[0].mxu0 %v4217
        %v5607 = vpop.f32.mrb[0].mxu0
        %v5608 = vadd.f32 %v5447, %v5607
        %v5609 = vpop.f32.mrb[0].mxu0
        %v5610 = vpop.f32.mrb[0].mxu0
        %v5611 = vadd.f32 %v5450, %v5610
        %v5612 = vpop.f32.mrb[0].mxu0
        %5613 = vmatprep.mubr.bf16.mxu0 0
        %5614 = vmatmul.mubr.bf16.gmra.mrb[0].mxu0 %v4226
        %v5615 = vpop.f32.mrb[0].mxu0
        %v5616 = vadd.f32 %v5455, %v5615
        %v5617 = vpop.f32.mrb[0].mxu0
        %v5618 = vpop.f32.mrb[0].mxu0
        %v5619 = vadd.f32 %v5458, %v5618
        %v5620 = vpop.f32.mrb[0].mxu0
        %5621 = vmatprep.mubr.bf16.mxu0 0
        %5622 = vmatmul.mubr.bf16.gmra.mrb[0].mxu0 %v4235
        %v5623 = vpop.f32.mrb[0].mxu0
        %v5624 = vadd.f32 %v5463, %v5623
        %v5625 = vpop.f32.mrb[0].mxu0
        %v5626 = vpop.f32.mrb[0].mxu0
        %v5627 = vadd.f32 %v5466, %v5626
        %v5628 = vpop.f32.mrb[0].mxu0
        %5629 = vmatprep.mubr.bf16.mxu0 0
        %5630 = vmatmul.mubr.bf16.gmra.mrb[0].mxu0 %v4244
        %v5631 = vpop.f32.mrb[0].mxu0
        %v5632 = vadd.f32 %v5471, %v5631
        %v5633 = vpop.f32.mrb[0].mxu0
        %v5634 = vpop.f32.mrb[0].mxu0
        %v5635 = vadd.f32 %v5474, %v5634
        %v5636 = vpop.f32.mrb[0].mxu0
        %5637 = vmatprep.mubr.bf16.mxu0 0
        %5638 = vmatmul.mubr.bf16.gmra.mrb[0].mxu0 %v4253
        %v5639 = vpop.f32.mrb[0].mxu0
        %v5640 = vadd.f32 %v5479, %v5639
        %v5641 = vpop.f32.mrb[0].mxu0
        %v5642 = vpop.f32.mrb[0].mxu0
        %v5643 = vadd.f32 %v5482, %v5642
        %v5644 = vpop.f32.mrb[0].mxu0
        %5645 = vmatprep.mubr.bf16.mxu0 0
        %5646 = vmatmul.mubr.bf16.gmra.mrb[0].mxu0 %v4262
        %v5647 = vpop.f32.mrb[0].mxu0
        %v5648 = vadd.f32 %v5487, %v5647
        %v5649 = vpop.f32.mrb[0].mxu0
        %v5650 = vpop.f32.mrb[0].mxu0
        %v5651 = vadd.f32 %v5490, %v5650
        %v5652 = vpop.f32.mrb[0].mxu0
        %5653 = vmatprep.mubr.bf16.mxu0 0
        %5654 = vmatmul.mubr.bf16.gmra.mrb[0].mxu0 %v4271
        %v5655 = vpop.f32.mrb[0].mxu0
        %v5656 = vadd.f32 %v5495, %v5655
        %v5657 = vpop.f32.mrb[0].mxu0
        %v5658 = vpop.f32.mrb[0].mxu0
        %v5659 = vadd.f32 %v5498, %v5658
        %v5660 = vpop.f32.mrb[0].mxu0
        %5661 = vmatprep.mubr.bf16.mxu0 0
        %5662 = vmatmul.mubr.bf16.gmra.mrb[0].mxu0 %v4280
        %v5663 = vpop.f32.mrb[0].mxu0
        %v5664 = vadd.f32 %v5503, %v5663
        %v5665 = vpop.f32.mrb[0].mxu0
        %v5666 = vpop.f32.mrb[0].mxu0
        %v5667 = vadd.f32 %v5506, %v5666
        %v5668 = vpop.f32.mrb[0].mxu0
        %5669 = vmatprep.mubr.bf16.mxu0 0
        %5670 = vmatmul.mubr.bf16.gmra.mrb[0].mxu0 %v4289
        %v5671 = vpop.f32.mrb[0].mxu0
        %v5672 = vadd.f32 %v5511, %v5671
        %v5673 = vpop.f32.mrb[0].mxu0
        %v5674 = vpop.f32.mrb[0].mxu0
        %v5675 = vadd.f32 %v5514, %v5674
        %v5676 = vpop.f32.mrb[0].mxu0
        %5677 = vdwg.mxu0
        %v5678 = vmax.f32 %v5552, 0.0
        %v5679 = vmax.f32 %v5555, 0.0
        %v5680 = vmax.f32 %v5560, 0.0
        %v5681 = vmax.f32 %v5563, 0.0
        %v5682 = vmax.f32 %v5568, 0.0
        %v5683 = vmax.f32 %v5571, 0.0
        %v5684 = vmax.f32 %v5576, 0.0
        %v5685 = vmax.f32 %v5579, 0.0
        %v5686 = vmax.f32 %v5584, 0.0
        %v5687 = vmax.f32 %v5587, 0.0
        %v5688 = vmax.f32 %v5592, 0.0
        %v5689 = vmax.f32 %v5595, 0.0
        %v5690 = vmax.f32 %v5600, 0.0
        %v5691 = vmax.f32 %v5603, 0.0
        %v5692 = vmax.f32 %v5608, 0.0
        %v5693 = vmax.f32 %v5611, 0.0
        %v5694 = vmax.f32 %v5616, 0.0
        %v5695 = vmax.f32 %v5619, 0.0
        %v5696 = vmax.f32 %v5624, 0.0
        %v5697 = vmax.f32 %v5627, 0.0
        %v5698 = vmax.f32 %v5632, 0.0
        %v5699 = vmax.f32 %v5635, 0.0
        %v5700 = vmax.f32 %v5640, 0.0
        %v5701 = vmax.f32 %v5643, 0.0
        %v5702 = vmax.f32 %v5648, 0.0
        %v5703 = vmax.f32 %v5651, 0.0
        %v5704 = vmax.f32 %v5656, 0.0
        %v5705 = vmax.f32 %v5659, 0.0
        %v5706 = vmax.f32 %v5664, 0.0
        %v5707 = vmax.f32 %v5667, 0.0
        %v5708 = vmax.f32 %v5672, 0.0
        %v5709 = vmax.f32 %v5675, 0.0
        %v5710 = vpack.c.bf16 %v5679, %v5678
        %v5711 = vpack.c.bf16 %v5681, %v5680
        %v5712 = vpack.c.bf16 %v5683, %v5682
        %v5713 = vpack.c.bf16 %v5685, %v5684
        %v5714 = vpack.c.bf16 %v5687, %v5686
        %v5715 = vpack.c.bf16 %v5689, %v5688
        %v5716 = vpack.c.bf16 %v5691, %v5690
        %v5717 = vpack.c.bf16 %v5693, %v5692
        %v5718 = vpack.c.bf16 %v5695, %v5694
        %v5719 = vpack.c.bf16 %v5697, %v5696
        %v5720 = vpack.c.bf16 %v5699, %v5698
        %v5721 = vpack.c.bf16 %v5701, %v5700
        %v5722 = vpack.c.bf16 %v5703, %v5702
        %v5723 = vpack.c.bf16 %v5705, %v5704
        %v5724 = vpack.c.bf16 %v5707, %v5706
        %v5725 = vpack.c.bf16 %v5709, %v5708
        %v5726 = vld [vmem:[#allocation10] sm:$0xf]
        %v5727 = vld [vmem:[#allocation10 + $0x4] sm:$0xf]
        %v5728 = vld [vmem:[#allocation10 + $0x8] sm:$0xf]
        %v5729 = vld [vmem:[#allocation10 + $0xc] sm:$0xf]
        %v5730 = vld [vmem:[#allocation10 + $0x10] sm:$0xf]
        %v5731 = vld [vmem:[#allocation10 + $0x14] sm:$0xf]
        %v5732 = vld [vmem:[#allocation10 + $0x18] sm:$0xf]
        %v5733 = vld [vmem:[#allocation10 + $0x1c] sm:$0xf]
        %v5734 = vld [vmem:[#allocation10 + $0x20] sm:$0xf]
        %v5735 = vld [vmem:[#allocation10 + $0x24] sm:$0xf]
        %v5736 = vld [vmem:[#allocation10 + $0x28] sm:$0xf]
        %v5737 = vld [vmem:[#allocation10 + $0x2c] sm:$0xf]
        %v5738 = vld [vmem:[#allocation10 + $0x30] sm:$0xf]
        %v5739 = vld [vmem:[#allocation10 + $0x34] sm:$0xf]
        %v5740 = vld [vmem:[#allocation10 + $0x38] sm:$0xf]
        %v5741 = vld [vmem:[#allocation10 + $0x3c] sm:$0xf]
        %v5742 = vld [vmem:[%s6] sm:$0x1]
        %v5744 = vlaneseq
        %v5745 = vshrl.u32 %v5744, 7
        %v5746 = vsub.s32 0, %v5745
        %v5747 = vrot.slane %v5742, %v5746
        %v5765 = vunpack.c.l.b16 %v5726
        %v5766 = vunpack.c.l.b16 %v5727
        %v5767 = vunpack.c.l.b16 %v5728
        %v5768 = vunpack.c.l.b16 %v5729
        %v5769 = vunpack.c.l.b16 %v5730
        %v5770 = vunpack.c.l.b16 %v5731
        %v5771 = vunpack.c.l.b16 %v5732
        %v5772 = vunpack.c.l.b16 %v5733
        %v5773 = vunpack.c.l.b16 %v5734
        %v5774 = vunpack.c.l.b16 %v5735
        %v5775 = vunpack.c.l.b16 %v5736
        %v5776 = vunpack.c.l.b16 %v5737
        %v5777 = vunpack.c.l.b16 %v5738
        %v5778 = vunpack.c.l.b16 %v5739
        %v5779 = vunpack.c.l.b16 %v5740
        %v5780 = vunpack.c.l.b16 %v5741
        %v5781 = vpack.c.b16 %v5766, %v5765
        %v5782 = vpack.c.b16 %v5768, %v5767
        %v5783 = vpack.c.b16 %v5770, %v5769
        %v5784 = vpack.c.b16 %v5772, %v5771
        %v5785 = vpack.c.b16 %v5774, %v5773
        %v5786 = vpack.c.b16 %v5776, %v5775
        %v5787 = vpack.c.b16 %v5778, %v5777
        %v5788 = vpack.c.b16 %v5780, %v5779
        %5797 = vmatprep.subr.bf16.mxu0 0
        %5798 = vmatpush1.bf16.msra.mxu0 %v5781
        %5799 = vmatprep.subr.bf16.mxu0 0
        %5800 = vmatpush1.bf16.msra.mxu0 %v5782
        %5801 = vmatprep.subr.bf16.mxu0 0
        %5802 = vmatpush1.bf16.msra.mxu0 %v5783
        %5803 = vmatprep.subr.bf16.mxu0 0
        %5804 = vmatpush1.bf16.msra.mxu0 %v5784
        %5805 = vmatprep.subr.bf16.mxu0 0
        %5806 = vmatpush1.bf16.msra.mxu0 %v5785
        %5807 = vmatprep.subr.bf16.mxu0 0
        %5808 = vmatpush1.bf16.msra.mxu0 %v5786
        %5809 = vmatprep.subr.bf16.mxu0 0
        %5810 = vmatpush1.bf16.msra.mxu0 %v5787
        %5811 = vmatprep.subr.bf16.mxu0 0
        %5812 = vmatpush1.bf16.msra.mxu0 %v5788
        %5813 = vmatprep.subr.bf16.mxu0 0
        %5814 = vmatpush1.bf16.msra.mxu0 0
        %5815 = vmatprep.subr.bf16.mxu0 0
        %5816 = vmatpush1.bf16.msra.mxu0 0
        %5817 = vmatprep.subr.bf16.mxu0 0
        %5818 = vmatpush1.bf16.msra.mxu0 0
        %5819 = vmatprep.subr.bf16.mxu0 0
        %5820 = vmatpush1.bf16.msra.mxu0 0
        %5821 = vmatprep.subr.bf16.mxu0 0
        %5822 = vmatpush1.bf16.msra.mxu0 0
        %5823 = vmatprep.subr.bf16.mxu0 0
        %5824 = vmatpush1.bf16.msra.mxu0 0
        %5825 = vmatprep.subr.bf16.mxu0 0
        %5826 = vmatpush1.bf16.msra.mxu0 0
        %5827 = vmatprep.subr.bf16.mxu0 0
        %5828 = vmatpush1.bf16.msra.mxu0 0
        %5829 = vmatprep.mubr.bf16.mxu0 0
        %5830 = vmatmul.mubr.bf16.gmra.mrb[0].mxu0 %v5710
        %v5831 = vpop.f32.mrb[0].mxu0
        %v5832 = vadd.f32 %v5747, %v5831
        %v5833 = vpop.f32.mrb[0].mxu0
        %v5834 = vpop.f32.mrb[0].mxu0
        %v5835 = vadd.f32 %v5747, %v5834
        %v5836 = vpop.f32.mrb[0].mxu0
        %5837 = vmatprep.mubr.bf16.mxu0 0
        %5838 = vmatmul.mubr.bf16.gmra.mrb[0].mxu0 %v5711
        %v5839 = vpop.f32.mrb[0].mxu0
        %v5840 = vadd.f32 %v5747, %v5839
        %v5841 = vpop.f32.mrb[0].mxu0
        %v5842 = vpop.f32.mrb[0].mxu0
        %v5843 = vadd.f32 %v5747, %v5842
        %v5844 = vpop.f32.mrb[0].mxu0
        %5845 = vmatprep.mubr.bf16.mxu0 0
        %5846 = vmatmul.mubr.bf16.gmra.mrb[0].mxu0 %v5712
        %v5847 = vpop.f32.mrb[0].mxu0
        %v5848 = vadd.f32 %v5747, %v5847
        %v5849 = vpop.f32.mrb[0].mxu0
        %v5850 = vpop.f32.mrb[0].mxu0
        %v5851 = vadd.f32 %v5747, %v5850
        %v5852 = vpop.f32.mrb[0].mxu0
        %5853 = vmatprep.mubr.bf16.mxu0 0
        %5854 = vmatmul.mubr.bf16.gmra.mrb[0].mxu0 %v5713
        %v5855 = vpop.f32.mrb[0].mxu0
        %v5856 = vadd.f32 %v5747, %v5855
        %v5857 = vpop.f32.mrb[0].mxu0
        %v5858 = vpop.f32.mrb[0].mxu0
        %v5859 = vadd.f32 %v5747, %v5858
        %v5860 = vpop.f32.mrb[0].mxu0
        %5861 = vmatprep.mubr.bf16.mxu0 0
        %5862 = vmatmul.mubr.bf16.gmra.mrb[0].mxu0 %v5714
        %v5863 = vpop.f32.mrb[0].mxu0
        %v5864 = vadd.f32 %v5747, %v5863
        %v5865 = vpop.f32.mrb[0].mxu0
        %v5866 = vpop.f32.mrb[0].mxu0
        %v5867 = vadd.f32 %v5747, %v5866
        %v5868 = vpop.f32.mrb[0].mxu0
        %5869 = vmatprep.mubr.bf16.mxu0 0
        %5870 = vmatmul.mubr.bf16.gmra.mrb[0].mxu0 %v5715
        %v5871 = vpop.f32.mrb[0].mxu0
        %v5872 = vadd.f32 %v5747, %v5871
        %v5873 = vpop.f32.mrb[0].mxu0
        %v5874 = vpop.f32.mrb[0].mxu0
        %v5875 = vadd.f32 %v5747, %v5874
        %v5876 = vpop.f32.mrb[0].mxu0
        %5877 = vmatprep.mubr.bf16.mxu0 0
        %5878 = vmatmul.mubr.bf16.gmra.mrb[0].mxu0 %v5716
        %v5879 = vpop.f32.mrb[0].mxu0
        %v5880 = vadd.f32 %v5747, %v5879
        %v5881 = vpop.f32.mrb[0].mxu0
        %v5882 = vpop.f32.mrb[0].mxu0
        %v5883 = vadd.f32 %v5747, %v5882
        %v5884 = vpop.f32.mrb[0].mxu0
        %5885 = vmatprep.mubr.bf16.mxu0 0
        %5886 = vmatmul.mubr.bf16.gmra.mrb[0].mxu0 %v5717
        %v5887 = vpop.f32.mrb[0].mxu0
        %v5888 = vadd.f32 %v5747, %v5887
        %v5889 = vpop.f32.mrb[0].mxu0
        %v5890 = vpop.f32.mrb[0].mxu0
        %v5891 = vadd.f32 %v5747, %v5890
        %v5892 = vpop.f32.mrb[0].mxu0
        %5893 = vmatprep.mubr.bf16.mxu0 0
        %5894 = vmatmul.mubr.bf16.gmra.mrb[0].mxu0 %v5718
        %v5895 = vpop.f32.mrb[0].mxu0
        %v5896 = vadd.f32 %v5747, %v5895
        %v5897 = vpop.f32.mrb[0].mxu0
        %v5898 = vpop.f32.mrb[0].mxu0
        %v5899 = vadd.f32 %v5747, %v5898
        %v5900 = vpop.f32.mrb[0].mxu0
        %5901 = vmatprep.mubr.bf16.mxu0 0
        %5902 = vmatmul.mubr.bf16.gmra.mrb[0].mxu0 %v5719
        %v5903 = vpop.f32.mrb[0].mxu0
        %v5904 = vadd.f32 %v5747, %v5903
        %v5905 = vpop.f32.mrb[0].mxu0
        %v5906 = vpop.f32.mrb[0].mxu0
        %v5907 = vadd.f32 %v5747, %v5906
        %v5908 = vpop.f32.mrb[0].mxu0
        %5909 = vmatprep.mubr.bf16.mxu0 0
        %5910 = vmatmul.mubr.bf16.gmra.mrb[0].mxu0 %v5720
        %v5911 = vpop.f32.mrb[0].mxu0
        %v5912 = vadd.f32 %v5747, %v5911
        %v5913 = vpop.f32.mrb[0].mxu0
        %v5914 = vpop.f32.mrb[0].mxu0
        %v5915 = vadd.f32 %v5747, %v5914
        %v5916 = vpop.f32.mrb[0].mxu0
        %5917 = vmatprep.mubr.bf16.mxu0 0
        %5918 = vmatmul.mubr.bf16.gmra.mrb[0].mxu0 %v5721
        %v5919 = vpop.f32.mrb[0].mxu0
        %v5920 = vadd.f32 %v5747, %v5919
        %v5921 = vpop.f32.mrb[0].mxu0
        %v5922 = vpop.f32.mrb[0].mxu0
        %v5923 = vadd.f32 %v5747, %v5922
        %v5924 = vpop.f32.mrb[0].mxu0
        %5925 = vmatprep.mubr.bf16.mxu0 0
        %5926 = vmatmul.mubr.bf16.gmra.mrb[0].mxu0 %v5722
        %v5927 = vpop.f32.mrb[0].mxu0
        %v5928 = vadd.f32 %v5747, %v5927
        %v5929 = vpop.f32.mrb[0].mxu0
        %v5930 = vpop.f32.mrb[0].mxu0
        %v5931 = vadd.f32 %v5747, %v5930
        %v5932 = vpop.f32.mrb[0].mxu0
        %5933 = vmatprep.mubr.bf16.mxu0 0
        %5934 = vmatmul.mubr.bf16.gmra.mrb[0].mxu0 %v5723
        %v5935 = vpop.f32.mrb[0].mxu0
        %v5936 = vadd.f32 %v5747, %v5935
        %v5937 = vpop.f32.mrb[0].mxu0
        %v5938 = vpop.f32.mrb[0].mxu0
        %v5939 = vadd.f32 %v5747, %v5938
        %v5940 = vpop.f32.mrb[0].mxu0
        %5941 = vmatprep.mubr.bf16.mxu0 0
        %5942 = vmatmul.mubr.bf16.gmra.mrb[0].mxu0 %v5724
        %v5943 = vpop.f32.mrb[0].mxu0
        %v5944 = vadd.f32 %v5747, %v5943
        %v5945 = vpop.f32.mrb[0].mxu0
        %v5946 = vpop.f32.mrb[0].mxu0
        %v5947 = vadd.f32 %v5747, %v5946
        %v5948 = vpop.f32.mrb[0].mxu0
        %5949 = vmatprep.mubr.bf16.mxu0 0
        %5950 = vmatmul.mubr.bf16.gmra.mrb[0].mxu0 %v5725
        %v5951 = vpop.f32.mrb[0].mxu0
        %v5952 = vadd.f32 %v5747, %v5951
        %v5953 = vpop.f32.mrb[0].mxu0
        %v5954 = vpop.f32.mrb[0].mxu0
        %v5955 = vadd.f32 %v5747, %v5954
        %v5956 = vpop.f32.mrb[0].mxu0
        %5957 = vdwg.mxu0
        %v5958 = vadd.f32 %v5832, %v462
        %v5959 = vadd.f32 %v5835, %v463
        %v5960 = vadd.f32 %v5840, %v464
        %v5961 = vadd.f32 %v5843, %v465
        %v5962 = vadd.f32 %v5848, %v466
        %v5963 = vadd.f32 %v5851, %v467
        %v5964 = vadd.f32 %v5856, %v468
        %v5965 = vadd.f32 %v5859, %v469
        %v5966 = vadd.f32 %v5864, %v470
        %v5967 = vadd.f32 %v5867, %v471
        %v5968 = vadd.f32 %v5872, %v472
        %v5969 = vadd.f32 %v5875, %v473
        %v5970 = vadd.f32 %v5880, %v474
        %v5971 = vadd.f32 %v5883, %v475
        %v5972 = vadd.f32 %v5888, %v476
        %v5973 = vadd.f32 %v5891, %v477
        %v5974 = vadd.f32 %v5896, %v478
        %v5975 = vadd.f32 %v5899, %v479
        %v5976 = vadd.f32 %v5904, %v480
        %v5977 = vadd.f32 %v5907, %v481
        %v5978 = vadd.f32 %v5912, %v482
        %v5979 = vadd.f32 %v5915, %v483
        %v5980 = vadd.f32 %v5920, %v484
        %v5981 = vadd.f32 %v5923, %v485
        %v5982 = vadd.f32 %v5928, %v486
        %v5983 = vadd.f32 %v5931, %v487
        %v5984 = vadd.f32 %v5936, %v488
        %v5985 = vadd.f32 %v5939, %v489
        %v5986 = vadd.f32 %v5944, %v490
        %v5987 = vadd.f32 %v5947, %v491
        %v5988 = vadd.f32 %v5952, %v492
        %v5989 = vadd.f32 %v5955, %v493
        %v5990 = vmax.f32 %v5958, 0.0
        %v5991 = vmax.f32 %v5959, 0.0
        %v5992 = vmax.f32 %v5960, 0.0
        %v5993 = vmax.f32 %v5961, 0.0
        %v5994 = vmax.f32 %v5962, 0.0
        %v5995 = vmax.f32 %v5963, 0.0
        %v5996 = vmax.f32 %v5964, 0.0
        %v5997 = vmax.f32 %v5965, 0.0
        %v5998 = vmax.f32 %v5966, 0.0
        %v5999 = vmax.f32 %v5967, 0.0
        %v6000 = vmax.f32 %v5968, 0.0
        %v6001 = vmax.f32 %v5969, 0.0
        %v6002 = vmax.f32 %v5970, 0.0
        %v6003 = vmax.f32 %v5971, 0.0
        %v6004 = vmax.f32 %v5972, 0.0
        %v6005 = vmax.f32 %v5973, 0.0
        %v6006 = vmax.f32 %v5974, 0.0
        %v6007 = vmax.f32 %v5975, 0.0
        %v6008 = vmax.f32 %v5976, 0.0
        %v6009 = vmax.f32 %v5977, 0.0
        %v6010 = vmax.f32 %v5978, 0.0
        %v6011 = vmax.f32 %v5979, 0.0
        %v6012 = vmax.f32 %v5980, 0.0
        %v6013 = vmax.f32 %v5981, 0.0
        %v6014 = vmax.f32 %v5982, 0.0
        %v6015 = vmax.f32 %v5983, 0.0
        %v6016 = vmax.f32 %v5984, 0.0
        %v6017 = vmax.f32 %v5985, 0.0
        %v6018 = vmax.f32 %v5986, 0.0
        %v6019 = vmax.f32 %v5987, 0.0
        %v6020 = vmax.f32 %v5988, 0.0
        %v6021 = vmax.f32 %v5989, 0.0
        %6022 = vst [vmem:[%s340] sm:$0xff] %v5990
        %6023 = vst [vmem:[%s340 + $0x8] sm:$0xff] %v5991
        %6024 = vst [vmem:[%s340 + $0x10] sm:$0xff] %v5992
        %6025 = vst [vmem:[%s340 + $0x18] sm:$0xff] %v5993
        %6026 = vst [vmem:[%s340 + $0x20] sm:$0xff] %v5994
        %6027 = vst [vmem:[%s340 + $0x28] sm:$0xff] %v5995
        %6028 = vst [vmem:[%s340 + $0x30] sm:$0xff] %v5996
        %6029 = vst [vmem:[%s340 + $0x38] sm:$0xff] %v5997
        %6030 = vst [vmem:[%s340 + $0x40] sm:$0xff] %v5998
        %6031 = vst [vmem:[%s340 + $0x48] sm:$0xff] %v5999
        %6032 = vst [vmem:[%s340 + $0x50] sm:$0xff] %v6000
        %6033 = vst [vmem:[%s340 + $0x58] sm:$0xff] %v6001
        %6034 = vst [vmem:[%s340 + $0x60] sm:$0xff] %v6002
        %6035 = vst [vmem:[%s340 + $0x68] sm:$0xff] %v6003
        %6036 = vst [vmem:[%s340 + $0x70] sm:$0xff] %v6004
        %6037 = vst [vmem:[%s340 + $0x78] sm:$0xff] %v6005
        %6038 = vst [vmem:[%s340 + $0x80] sm:$0xff] %v6006
        %6039 = vst [vmem:[%s340 + $0x88] sm:$0xff] %v6007
        %6040 = vst [vmem:[%s340 + $0x90] sm:$0xff] %v6008
        %6041 = vst [vmem:[%s340 + $0x98] sm:$0xff] %v6009
        %6042 = vst [vmem:[%s340 + $0xa0] sm:$0xff] %v6010
        %6043 = vst [vmem:[%s340 + $0xa8] sm:$0xff] %v6011
        %6044 = vst [vmem:[%s340 + $0xb0] sm:$0xff] %v6012
        %6045 = vst [vmem:[%s340 + $0xb8] sm:$0xff] %v6013
        %6046 = vst [vmem:[%s340 + $0xc0] sm:$0xff] %v6014
        %6047 = vst [vmem:[%s340 + $0xc8] sm:$0xff] %v6015
        %6048 = vst [vmem:[%s340 + $0xd0] sm:$0xff] %v6016
        %6049 = vst [vmem:[%s340 + $0xd8] sm:$0xff] %v6017
        %6050 = vst [vmem:[%s340 + $0xe0] sm:$0xff] %v6018
        %6051 = vst [vmem:[%s340 + $0xe8] sm:$0xff] %v6019
        %6052 = vst [vmem:[%s340 + $0xf0] sm:$0xff] %v6020
        %6053 = vst [vmem:[%s340 + $0xf8] sm:$0xff] %v6021
        %s6054 = sand.u32 %s186, 1
        %s6055 = scalar_lea.sflag [#allocation6], %s6054
        %s6056 = sand.u32 %s186, 1
        %s6057 = smul.addr %s6056, 256
        %s6058 = scalar_lea.vmem [#allocation12], %s6057
        // Predicated region
        $region65: #{tpu_custom_call.1} parent=47 // pred_check
          %p6059 = pneg %p196
        $region66: #{tpu_custom_call.1} parent=47 // pred_check_branch
          %6061 = sbr.rel (%p6059) target = $region68
        $region67: #{tpu_custom_call.1} parent=47 // pred_region
          %s6063 = ssub.s32 4096, 4096
          %6064 = vsyncadd %s6055, %s6063
          %s6065 = smul.addr %s26, 32
          %s6066 = smul.addr %s6065, 128
          %s6067 = scalar_lea.hbm %s7, %s6066
          %s6068 = sshll.u32 %s6058, 4
          %s6069 = int_to_ptr.vmem [resolvable:$true] %s6068
          %6074 = dma.vmem_to_hbm [thread:$0]  %s6069, 4096, %s6067, %s6055, 128, 128, 8
        $region68: #{tpu_custom_call.1} parent=47 // pred_fallthru
          _
      $region48: #{tpu_custom_call.1} parent=5 // pred_fallthru
        _
      %p6075 = scmp.le.s32.totalorder 2, %s21
      // Predicated region
      $region69: #{tpu_custom_call.1} parent=5 // pred_check
        %p6076 = pneg %p6075
      $region70: #{tpu_custom_call.1} parent=5 // pred_check_branch
        %6078 = sbr.rel (%p6076) target = $region72
      $region71: #{tpu_custom_call.1} parent=5 // pred_region
        %s6079 = ssub.s32 %s21, 2
        // Predicated region
        $region73: #{tpu_custom_call.1} parent=71 // pred_check
          %p6080 = pneg %p202
        $region74: #{tpu_custom_call.1} parent=71 // pred_check_branch
          %6082 = sbr.rel (%p6080) target = $region76
        $region75: #{tpu_custom_call.1} parent=71 // pred_region
          %s6083 = sand.u32 %s187, 1
          %s6084 = scalar_lea.sflag [#allocation6], %s6083
          %s6085 = sand.u32 %s187, 1
          %s6086 = smul.addr %s6085, 256
          %s6087 = scalar_lea.vmem [#allocation12], %s6086
          %6088 = dma.done %s6084, 4096
        $region76: #{tpu_custom_call.1} parent=71 // pred_fallthru
          _
      $region72: #{tpu_custom_call.1} parent=5 // pred_fallthru
        _
    $region6: #{tpu_custom_call.1} parent=1 // loop_footer
      %s25 = sadd.s32 1, %s21
    $region7: #{tpu_custom_call.1} parent=1 // loop_footer_branch
      %20 = sbr.rel target = $region3
    $region8: #{tpu_custom_call.1} parent=1 // loop_exit
      _
    %6089 = vsyncpa [#allocation5], 1
    %s6090 = scalar_lea.sflag [#allocation5], 1
    %6091 = vsyncpa %s6090, 1
    %6092 = vsyncpa [#allocation8], 1
    %6093 = vsyncpa [#allocation11], 1
    %6094 = vsyncpa [#allocation6], 1
    %s6095 = scalar_lea.sflag [#allocation6], 1
    %6096 = vsyncpa %s6095, 1

</llo_original>
